<compile_context>
chip_gen: v6e
topology: v6e:2x2x1
jax: 0.10.0
libtpu: 0.0.40
codegen_flags: <defaults>
</compile_context>

<pallas_src>
import functools

import jax
import jax.numpy as jnp
from jax import lax
from jax.experimental import pallas as pl
from jax.experimental.pallas import tpu as pltpu

NUM_CLASSES = 31
LOGIT_PAD = 128          # lane-dense classifier output width (>= NUM_CLASSES)
FEAT_DIM = 2048
BOTTLE_DIM = 256
KERNEL_MUL = 2.0
KERNEL_NUM = 5
BN_EPS = 1e-5


def _round_up(x, m):
    return ((x + m - 1) // m) * m


def _choose_hw_tile(hw):
    # Spatial tile on the lane axis (multiple of 128); 512-1024 for real image sizes.
    if hw >= 2048:
        return 1024
    if hw >= 512:
        return 512
    return 128


# ----------------------------------------------------------------------------
# Fused kernel: streaming global-avg-pool -> Linear C->2048 -> bottleneck Linear
# + per-branch BatchNorm + ReLU -> cls_fc (lane padded) -> class-weighted
# multi-kernel Gaussian MMD ("EMMD") loss.
# ----------------------------------------------------------------------------
def _edan_kernel(x_ref, lbl_ref, wf_ref, bf_ref, w1_ref, b1_ref, g_ref, be_ref,
                 w2_ref, b2_ref, logits_ref, loss_ref, pool_acc,
                 *, batch, batch_pad, hw):
    step = pl.program_id(0)

    @pl.when(step == 0)
    def _init():
        pool_acc[...] = jnp.zeros_like(pool_acc)

    # Streaming spatial sum — the only code that touches the big bf16 image tiles.
    pool_acc[...] += jnp.sum(x_ref[...].astype(jnp.float32), axis=-1)

    @pl.when(step == pl.num_programs(0) - 1)
    def _epilogue():
        rows = 2 * batch_pad

        # ---- backbone stand-in: global average pool + Linear C -> 2048 ------
        pooled = pool_acc[...] * (1.0 / hw)                                # (2Bp, C) f32
        feat = jnp.dot(pooled, wf_ref[...],
                       preferred_element_type=jnp.float32) + bf_ref[...]  # (2Bp, 2048)

        # ---- bottleneck Linear 2048 -> 256 (bf16 MXU, f32 accumulate) -------
        h = jnp.dot(feat.astype(jnp.bfloat16), w1_ref[...],
                    preferred_element_type=jnp.float32) + b1_ref[...]     # (2Bp, 256)

        # ---- per-branch BatchNorm1d (training-mode stats, padded rows masked)
        row = lax.broadcasted_iota(jnp.int32, (rows, 1), 0)
        m_src = (row < batch).astype(jnp.float32)
        m_tgt = jnp.logical_and(row >= batch_pad,
                                row < batch_pad + batch).astype(jnp.float32)
        valid = m_src + m_tgt
        inv_b = 1.0 / batch

        mean_s = jnp.sum(h * m_src, axis=0, keepdims=True) * inv_b
        mean_t = jnp.sum(h * m_tgt, axis=0, keepdims=True) * inv_b
        cent = h - (m_src * mean_s + m_tgt * mean_t)
        var_s = jnp.sum(cent * cent * m_src, axis=0, keepdims=True) * inv_b
        var_t = jnp.sum(cent * cent * m_tgt, axis=0, keepdims=True) * inv_b
        inv_std = (m_src * lax.rsqrt(var_s + BN_EPS)
                   + m_tgt * lax.rsqrt(var_t + BN_EPS))
        hn = cent * inv_std * g_ref[...] + be_ref[...]
        hn = jnp.maximum(hn, 0.0) * valid           # ReLU; zero the padded rows

        # ---- cls_fc Linear 256 -> num_classes (lane padded to 128 outputs) --
        logits = jnp.dot(hn.astype(jnp.bfloat16), w2_ref[...],
                         preferred_element_type=jnp.float32) + b2_ref[...]
        logits_ref[...] = logits

        # ============ fused EMMD (class-weighted multi-kernel MMD) ===========
        dn = (((1,), (1,)), ((), ()))               # A @ B^T, no materialized transpose
        gram = lax.dot_general(hn, hn, dn, preferred_element_type=jnp.float32)
        sq = jnp.sum(hn * hn, axis=-1, keepdims=True)              # (2Bp, 1)
        dist = jnp.maximum(sq + sq.T - 2.0 * gram, 0.0)            # (2Bp, 2Bp)

        col = lax.broadcasted_iota(jnp.int32, (rows, rows), 1)
        col_valid = jnp.logical_or(
            col < batch,
            jnp.logical_and(col >= batch_pad, col < batch_pad + batch),
        ).astype(jnp.float32)
        mask2d = valid * col_valid                   # exclude padded rows/cols

        n = 2.0 * batch
        bandwidth = jnp.sum(dist * mask2d) / (n * n - n)
        bandwidth = jnp.maximum(bandwidth / (KERNEL_MUL ** (KERNEL_NUM // 2)),
                                1e-12)

        kmat = jnp.zeros_like(dist)
        for i in range(KERNEL_NUM):
            # hoisted reciprocal: one scalar divide per bandwidth, tensor multiply only
            neg_inv = -1.0 / (bandwidth * (KERNEL_MUL ** i))
            kmat = kmat + jnp.exp(dist * neg_inv)

        # class weights: hard one-hot on source rows, masked softmax on target rows
        lane = lax.broadcasted_iota(jnp.int32, (rows, LOGIT_PAD), 1)
        cls_mask = lane < NUM_CLASSES

        onehot = (lane == lbl_ref[...]).astype(jnp.float32)  # label = -1 on non-source rows
        cs_s = jnp.sum(onehot, axis=0, keepdims=True)
        ws = onehot / jnp.where(cs_s == 0.0, 100.0, cs_s)

        ml = jnp.where(cls_mask, logits, -1e30)
        p = jnp.exp(ml - jnp.max(ml, axis=-1, keepdims=True))
        p = p * cls_mask.astype(jnp.float32)
        p = p / jnp.sum(p, axis=-1, keepdims=True)
        wt = p * m_tgt
        cs_t = jnp.sum(wt, axis=0, keepdims=True)
        wt = wt / jnp.where(cs_t == 0.0, 100.0, cs_t)

        # signed stacked weights: (ws - wt)(ws - wt)^T gives +ss, +tt, -2*st blocks
        wsg = ws - wt
        wgram = lax.dot_general(wsg, wsg, dn, preferred_element_type=jnp.float32)
        loss_ref[0, 0] = jnp.sum(wgram * kmat)


def edan_pallas_call(x_stacked, labels_col, params, *, batch, batch_pad, hw, hw_tile):
    rows = 2 * batch_pad
    channels = x_stacked.shape[1]
    hwp = x_stacked.shape[-1]
    grid = (hwp // hw_tile,)
    kernel = functools.partial(_edan_kernel, batch=batch, batch_pad=batch_pad, hw=hw)
    full2d = lambda s: (0, 0)
    return pl.pallas_call(
        kernel,
        out_shape=(
            jax.ShapeDtypeStruct((rows, LOGIT_PAD), jnp.float32),
            jax.ShapeDtypeStruct((1, 1), jnp.float32),
        ),
        grid_spec=pltpu.PrefetchScalarGridSpec(
            num_scalar_prefetch=0,
            grid=grid,
            in_specs=[
                pl.BlockSpec((rows, channels, hw_tile), lambda s: (0, 0, s)),  # images (bf16)
                pl.BlockSpec((rows, 1), full2d),                               # labels (int32)
                pl.BlockSpec((channels, FEAT_DIM), full2d),                    # w_feat
                pl.BlockSpec((1, FEAT_DIM), full2d),                           # b_feat
                pl.BlockSpec((FEAT_DIM, BOTTLE_DIM), full2d),                  # w1 (bf16)
                pl.BlockSpec((1, BOTTLE_DIM), full2d),                         # b1
                pl.BlockSpec((1, BOTTLE_DIM), full2d),                         # gamma
                pl.BlockSpec((1, BOTTLE_DIM), full2d),                         # beta
                pl.BlockSpec((BOTTLE_DIM, LOGIT_PAD), full2d),                 # w2p (bf16)
                pl.BlockSpec((1, LOGIT_PAD), full2d),                          # b2p
            ],
            out_specs=(
                pl.BlockSpec((rows, LOGIT_PAD), full2d),
                pl.BlockSpec((1, 1), full2d, memory_space=pltpu.MemorySpace.SMEM),
            ),
            scratch_shapes=[pltpu.VMEM((rows, channels), jnp.float32)],
        ),
        compiler_params=pltpu.CompilerParams(
            dimension_semantics=("arbitrary",),          # spatial axis is a reduction
            vmem_limit_bytes=48 * 1024 * 1024,
        ),
    )(x_stacked, labels_col, params["w_feat"], params["b_feat"], params["w1"],
      params["b1"], params["gamma"], params["beta"], params["w2p"], params["b2p"])


# ----------------------------------------------------------------------------
# Parameter init (deterministic) + full EDAN forward
# ----------------------------------------------------------------------------
def init_params(key, in_channels):
    ks = jax.random.split(key, 5)
    scale = 0.02
    w2 = scale * jax.random.normal(ks[3], (BOTTLE_DIM, NUM_CLASSES), jnp.float32)
    b2 = scale * jax.random.normal(ks[4], (1, NUM_CLASSES), jnp.float32)
    # Lane-dense padding of the classifier weights (extra columns zero).
    w2p = jnp.zeros((BOTTLE_DIM, LOGIT_PAD), jnp.float32).at[:, :NUM_CLASSES].set(w2)
    b2p = jnp.zeros((1, LOGIT_PAD), jnp.float32).at[:, :NUM_CLASSES].set(b2)
    return {
        # backbone stand-in projection C -> 2048 (tiny; kept f32)
        "w_feat": scale * jax.random.normal(ks[0], (in_channels, FEAT_DIM), jnp.float32),
        "b_feat": jnp.zeros((1, FEAT_DIM), jnp.float32),
        # bottleneck Linear(2048, 256): bf16 weights, f32 accumulate
        "w1": (scale * jax.random.normal(ks[1], (FEAT_DIM, BOTTLE_DIM),
                                         jnp.float32)).astype(jnp.bfloat16),
        "b1": scale * jax.random.normal(ks[2], (1, BOTTLE_DIM), jnp.float32),
        # BatchNorm1d(256)
        "gamma": jnp.ones((1, BOTTLE_DIM), jnp.float32),
        "beta": jnp.zeros((1, BOTTLE_DIM), jnp.float32),
        # cls_fc Linear(256, num_classes), lane padded to 128 columns, bf16
        "w2p": w2p.astype(jnp.bfloat16),
        "b2p": b2p,
    }


@jax.jit
def edan_forward(params, source, target, s_label):
    B, C, H, W = source.shape
    hw = H * W
    bp = _round_up(B, 8)                 # pad per-branch batch to sublane multiple
    tile = _choose_hw_tile(hw)
    hwp = _round_up(hw, tile)
    rows = 2 * bp

    # Stack source+target into one padded (2Bp, C, HWp) bf16 tensor (zeros elsewhere).
    x = jnp.zeros((rows, C, hwp), jnp.bfloat16)
    x = x.at[:B, :, :hw].set(source.reshape(B, C, hw).astype(jnp.bfloat16))
    x = x.at[bp:bp + B, :, :hw].set(target.reshape(B, C, hw).astype(jnp.bfloat16))

    # Labels as a column vector; -1 marks non-source / padded rows (zero one-hot).
    labels = jnp.full((rows, 1), -1, jnp.int32)
    labels = labels.at[:B, 0].set(s_label.astype(jnp.int32))

    logits, loss = edan_pallas_call(x, labels, params, batch=B, batch_pad=bp,
                                    hw=hw, hw_tile=tile)
    s_pred = logits[:B, :NUM_CLASSES]
    return s_pred, loss[0, 0]


if __name__ == "__main__":
    key = jax.random.PRNGKey(0)
    k_param, k_src, k_tgt, k_lbl = jax.random.split(key, 4)

    B, C, H, W = 2, 4, 16, 16
    source = jax.random.normal(k_src, (B, C, H, W), jnp.float32)
    target = jax.random.normal(k_tgt, (B, C, H, W), jnp.float32)
    s_label = jax.random.randint(k_lbl, (B,), 0, NUM_CLASSES)

    params = init_params(k_param, C)

    s_pred, loss_emmd = edan_forward(params, source, target, s_label)
    jax.block_until_ready((s_pred, loss_emmd))

    assert s_pred.shape == (B, NUM_CLASSES)
    assert loss_emmd.shape == ()
    assert bool(jnp.all(jnp.isfinite(s_pred))) and bool(jnp.isfinite(loss_emmd))
    print("KERNEL_OK")
</pallas_src>

<mosaic_0001>
module attributes {stable_mosaic.version = 11 : i64} {
  func.func @_edan_kernel(%arg0: i32, %arg1: memref<16x4x128xbf16, #tpu.memory_space<vmem>>, %arg2: memref<16x1xi32, #tpu.memory_space<vmem>>, %arg3: memref<4x2048xf32, #tpu.memory_space<vmem>>, %arg4: memref<1x2048xf32, #tpu.memory_space<vmem>>, %arg5: memref<2048x256xbf16, #tpu.memory_space<vmem>>, %arg6: memref<1x256xf32, #tpu.memory_space<vmem>>, %arg7: memref<1x256xf32, #tpu.memory_space<vmem>>, %arg8: memref<1x256xf32, #tpu.memory_space<vmem>>, %arg9: memref<256x128xbf16, #tpu.memory_space<vmem>>, %arg10: memref<1x128xf32, #tpu.memory_space<vmem>>, %arg11: memref<16x128xf32, #tpu.memory_space<vmem>>, %arg12: memref<1x1xf32, #tpu.memory_space<smem>>, %arg13: memref<16x4xf32, #tpu.memory_space<vmem>>) attributes {dimension_semantics = [#tpu.dimension_semantics<arbitrary>], iteration_bounds = array<i64: 2>, scalar_prefetch = 0 : i64, scratch_operands = 1 : i64, tpu.core_type = #tpu.core_type<tc>, window_params = [{transform_indices = @transform_0, window_bounds = array<i64: 16, 4, 128>}, {pipeline_mode = #tpu.pipeline_mode<synchronous>, transform_indices = @transform_1, window_bounds = array<i64: 16, 1>}, {pipeline_mode = #tpu.pipeline_mode<synchronous>, transform_indices = @transform_2, window_bounds = array<i64: 4, 2048>}, {pipeline_mode = #tpu.pipeline_mode<synchronous>, transform_indices = @transform_3, window_bounds = array<i64: 1, 2048>}, {pipeline_mode = #tpu.pipeline_mode<synchronous>, transform_indices = @transform_4, window_bounds = array<i64: 2048, 256>}, {pipeline_mode = #tpu.pipeline_mode<synchronous>, transform_indices = @transform_5, window_bounds = array<i64: 1, 256>}, {pipeline_mode = #tpu.pipeline_mode<synchronous>, transform_indices = @transform_6, window_bounds = array<i64: 1, 256>}, {pipeline_mode = #tpu.pipeline_mode<synchronous>, transform_indices = @transform_7, window_bounds = array<i64: 1, 256>}, {pipeline_mode = #tpu.pipeline_mode<synchronous>, transform_indices = @transform_8, window_bounds = array<i64: 256, 128>}, {pipeline_mode = #tpu.pipeline_mode<synchronous>, transform_indices = @transform_9, window_bounds = array<i64: 1, 128>}, {pipeline_mode = #tpu.pipeline_mode<synchronous>, transform_indices = @transform_10, window_bounds = array<i64: 16, 128>}, {transform_indices = @transform_11, window_bounds = array<i64: 1, 1>}]} {
    %c0_i32 = arith.constant 0 : i32
    %0 = arith.cmpi eq, %arg0, %c0_i32 : i32
    %1 = arith.extui %0 : i1 to i32
    %c0_i32_0 = arith.constant 0 : i32
    %2 = arith.cmpi ne, %1, %c0_i32_0 : i32
    scf.if %2 {
      %cst_8 = arith.constant 0.000000e+00 : f32
      %12 = vector.broadcast %cst_8 : f32 to vector<16x4xf32>
      %c0_9 = arith.constant 0 : index
      %c0_10 = arith.constant 0 : index
      %13 = vector.load %arg13[%c0_9, %c0_10] : memref<16x4xf32, #tpu.memory_space<vmem>>, vector<16x4xf32>
      tpu.vector_store %arg13[%c0_9, %c0_10], %12 {strides = array<i32>} : memref<16x4xf32, #tpu.memory_space<vmem>>, vector<16x4xf32>,
    } else {
    }
    %c0 = arith.constant 0 : index
    %c0_1 = arith.constant 0 : index
    %3 = vector.load %arg13[%c0, %c0_1] : memref<16x4xf32, #tpu.memory_space<vmem>>, vector<16x4xf32>
    %c0_2 = arith.constant 0 : index
    %c0_3 = arith.constant 0 : index
    %c0_4 = arith.constant 0 : index
    %4 = vector.load %arg1[%c0_2, %c0_3, %c0_4] : memref<16x4x128xbf16, #tpu.memory_space<vmem>>, vector<16x4x128xbf16>
    %5 = arith.extf %4 : vector<16x4x128xbf16> to vector<16x4x128xf32>
    %cst = arith.constant dense<0.000000e+00> : vector<16x4xf32>
    %6 = vector.multi_reduction <add>, %5, %cst [2] : vector<16x4x128xf32> to vector<16x4xf32>
    %7 = arith.addf %3, %6 : vector<16x4xf32>
    %c0_5 = arith.constant 0 : index
    %c0_6 = arith.constant 0 : index
    %8 = vector.load %arg13[%c0_5, %c0_6] : memref<16x4xf32, #tpu.memory_space<vmem>>, vector<16x4xf32>
    tpu.vector_store %arg13[%c0_5, %c0_6], %7 {strides = array<i32>} : memref<16x4xf32, #tpu.memory_space<vmem>>, vector<16x4xf32>,
    %c1_i32 = arith.constant 1 : i32
    %9 = arith.cmpi eq, %arg0, %c1_i32 : i32
    %10 = arith.extui %9 : i1 to i32
    %c0_i32_7 = arith.constant 0 : i32
    %11 = arith.cmpi ne, %10, %c0_i32_7 : i32
    scf.if %11 {
      %c0_8 = arith.constant 0 : index
      %c0_9 = arith.constant 0 : index
      %12 = vector.load %arg13[%c0_8, %c0_9] : memref<16x4xf32, #tpu.memory_space<vmem>>, vector<16x4xf32>
      %cst_10 = arith.constant 3.906250e-03 : f32
      %13 = vector.broadcast %cst_10 : f32 to vector<16x4xf32>
      %14 = arith.mulf %12, %13 : vector<16x4xf32>
      %c0_11 = arith.constant 0 : index
      %c0_12 = arith.constant 0 : index
      %15 = vector.load %arg3[%c0_11, %c0_12] : memref<4x2048xf32, #tpu.memory_space<vmem>>, vector<4x2048xf32>
      %cst_13 = arith.constant dense<0.000000e+00> : vector<16x2048xf32>
      %16 = tpu.matmul %14, %15, %cst_13 {dimension_numbers = #tpu.dot_dimension_numbers<[1], [0], [0], [1], [0, 0, 1, 1], [], []>} : vector<16x4xf32>, vector<4x2048xf32>, vector<16x2048xf32> -> vector<16x2048xf32>
      %c0_14 = arith.constant 0 : index
      %c0_15 = arith.constant 0 : index
      %17 = vector.load %arg4[%c0_14, %c0_15] : memref<1x2048xf32, #tpu.memory_space<vmem>>, vector<1x2048xf32>
      %18 = vector.broadcast %17 : vector<1x2048xf32> to vector<16x2048xf32>
      %19 = arith.addf %16, %18 : vector<16x2048xf32>
      %20 = arith.truncf %19 : vector<16x2048xf32> to vector<16x2048xbf16>
      %c0_16 = arith.constant 0 : index
      %c0_17 = arith.constant 0 : index
      %21 = vector.load %arg5[%c0_16, %c0_17] : memref<2048x256xbf16, #tpu.memory_space<vmem>>, vector<2048x256xbf16>
      %cst_18 = arith.constant dense<0.000000e+00> : vector<16x256xf32>
      %22 = tpu.matmul %20, %21, %cst_18 {dimension_numbers = #tpu.dot_dimension_numbers<[1], [0], [0], [1], [0, 0, 1, 1], [], []>} : vector<16x2048xbf16>, vector<2048x256xbf16>, vector<16x256xf32> -> vector<16x256xf32>
      %c0_19 = arith.constant 0 : index
      %c0_20 = arith.constant 0 : index
      %23 = vector.load %arg6[%c0_19, %c0_20] : memref<1x256xf32, #tpu.memory_space<vmem>>, vector<1x256xf32>
      %24 = vector.broadcast %23 : vector<1x256xf32> to vector<16x256xf32>
      %25 = arith.addf %22, %24 : vector<16x256xf32>
      %26 = tpu.iota {dimensions = array<i32: 0>} : vector<16x1xi32>
      %c2_i32 = arith.constant 2 : i32
      %27 = vector.broadcast %c2_i32 : i32 to vector<16x1xi32>
      %28 = arith.cmpi slt, %26, %27 : vector<16x1xi32>
      %29 = arith.extui %28 : vector<16x1xi1> to vector<16x1xi32>
      %30 = arith.sitofp %29 : vector<16x1xi32> to vector<16x1xf32>
      %c8_i32 = arith.constant 8 : i32
      %31 = vector.broadcast %c8_i32 : i32 to vector<16x1xi32>
      %32 = arith.cmpi sge, %26, %31 : vector<16x1xi32>
      %c10_i32 = arith.constant 10 : i32
      %33 = vector.broadcast %c10_i32 : i32 to vector<16x1xi32>
      %34 = arith.cmpi slt, %26, %33 : vector<16x1xi32>
      %35 = arith.andi %32, %34 : vector<16x1xi1>
      %36 = arith.extui %35 : vector<16x1xi1> to vector<16x1xi32>
      %37 = arith.sitofp %36 : vector<16x1xi32> to vector<16x1xf32>
      %38 = arith.addf %30, %37 : vector<16x1xf32>
      %39 = vector.broadcast %30 : vector<16x1xf32> to vector<16x256xf32>
      %40 = arith.mulf %25, %39 : vector<16x256xf32>
      %cst_21 = arith.constant dense<0.000000e+00> : vector<256xf32>
      %41 = vector.multi_reduction <add>, %40, %cst_21 [0] : vector<16x256xf32> to vector<256xf32>
      %42 = vector.shape_cast %41 : vector<256xf32> to vector<1x256xf32>
      %cst_22 = arith.constant 5.000000e-01 : f32
      %43 = vector.broadcast %cst_22 : f32 to vector<1x256xf32>
      %44 = arith.mulf %42, %43 : vector<1x256xf32>
      %45 = vector.broadcast %37 : vector<16x1xf32> to vector<16x256xf32>
      %46 = arith.mulf %25, %45 : vector<16x256xf32>
      %cst_23 = arith.constant dense<0.000000e+00> : vector<256xf32>
      %47 = vector.multi_reduction <add>, %46, %cst_23 [0] : vector<16x256xf32> to vector<256xf32>
      %48 = vector.shape_cast %47 : vector<256xf32> to vector<1x256xf32>
      %cst_24 = arith.constant 5.000000e-01 : f32
      %49 = vector.broadcast %cst_24 : f32 to vector<1x256xf32>
      %50 = arith.mulf %48, %49 : vector<1x256xf32>
      %51 = vector.broadcast %30 : vector<16x1xf32> to vector<16x256xf32>
      %52 = vector.broadcast %44 : vector<1x256xf32> to vector<16x256xf32>
      %53 = arith.mulf %51, %52 : vector<16x256xf32>
      %54 = vector.broadcast %37 : vector<16x1xf32> to vector<16x256xf32>
      %55 = vector.broadcast %50 : vector<1x256xf32> to vector<16x256xf32>
      %56 = arith.mulf %54, %55 : vector<16x256xf32>
      %57 = arith.addf %53, %56 : vector<16x256xf32>
      %58 = arith.subf %25, %57 : vector<16x256xf32>
      %59 = arith.mulf %58, %58 : vector<16x256xf32>
      %60 = vector.broadcast %30 : vector<16x1xf32> to vector<16x256xf32>
      %61 = arith.mulf %59, %60 : vector<16x256xf32>
      %cst_25 = arith.constant dense<0.000000e+00> : vector<256xf32>
      %62 = vector.multi_reduction <add>, %61, %cst_25 [0] : vector<16x256xf32> to vector<256xf32>
      %63 = vector.shape_cast %62 : vector<256xf32> to vector<1x256xf32>
      %cst_26 = arith.constant 5.000000e-01 : f32
      %64 = vector.broadcast %cst_26 : f32 to vector<1x256xf32>
      %65 = arith.mulf %63, %64 : vector<1x256xf32>
      %66 = arith.mulf %58, %58 : vector<16x256xf32>
      %67 = vector.broadcast %37 : vector<16x1xf32> to vector<16x256xf32>
      %68 = arith.mulf %66, %67 : vector<16x256xf32>
      %cst_27 = arith.constant dense<0.000000e+00> : vector<256xf32>
      %69 = vector.multi_reduction <add>, %68, %cst_27 [0] : vector<16x256xf32> to vector<256xf32>
      %70 = vector.shape_cast %69 : vector<256xf32> to vector<1x256xf32>
      %cst_28 = arith.constant 5.000000e-01 : f32
      %71 = vector.broadcast %cst_28 : f32 to vector<1x256xf32>
      %72 = arith.mulf %70, %71 : vector<1x256xf32>
      %cst_29 = arith.constant 9.99999974E-6 : f32
      %73 = vector.broadcast %cst_29 : f32 to vector<1x256xf32>
      %74 = arith.addf %65, %73 : vector<1x256xf32>
      %75 = math.rsqrt %74 : vector<1x256xf32>
      %76 = vector.broadcast %30 : vector<16x1xf32> to vector<16x256xf32>
      %77 = vector.broadcast %75 : vector<1x256xf32> to vector<16x256xf32>
      %78 = arith.mulf %76, %77 : vector<16x256xf32>
      %cst_30 = arith.constant 9.99999974E-6 : f32
      %79 = vector.broadcast %cst_30 : f32 to vector<1x256xf32>
      %80 = arith.addf %72, %79 : vector<1x256xf32>
      %81 = math.rsqrt %80 : vector<1x256xf32>
      %82 = vector.broadcast %37 : vector<16x1xf32> to vector<16x256xf32>
      %83 = vector.broadcast %81 : vector<1x256xf32> to vector<16x256xf32>
      %84 = arith.mulf %82, %83 : vector<16x256xf32>
      %85 = arith.addf %78, %84 : vector<16x256xf32>
      %86 = arith.mulf %58, %85 : vector<16x256xf32>
      %c0_31 = arith.constant 0 : index
      %c0_32 = arith.constant 0 : index
      %87 = vector.load %arg7[%c0_31, %c0_32] : memref<1x256xf32, #tpu.memory_space<vmem>>, vector<1x256xf32>
      %88 = vector.broadcast %87 : vector<1x256xf32> to vector<16x256xf32>
      %89 = arith.mulf %86, %88 : vector<16x256xf32>
      %c0_33 = arith.constant 0 : index
      %c0_34 = arith.constant 0 : index
      %90 = vector.load %arg8[%c0_33, %c0_34] : memref<1x256xf32, #tpu.memory_space<vmem>>, vector<1x256xf32>
      %91 = vector.broadcast %90 : vector<1x256xf32> to vector<16x256xf32>
      %92 = arith.addf %89, %91 : vector<16x256xf32>
      %cst_35 = arith.constant 0.000000e+00 : f32
      %93 = vector.broadcast %cst_35 : f32 to vector<16x256xf32>
      %94 = arith.maximumf %92, %93 : vector<16x256xf32>
      %95 = vector.broadcast %38 : vector<16x1xf32> to vector<16x256xf32>
      %96 = arith.mulf %94, %95 : vector<16x256xf32>
      %97 = arith.truncf %96 : vector<16x256xf32> to vector<16x256xbf16>
      %c0_36 = arith.constant 0 : index
      %c0_37 = arith.constant 0 : index
      %98 = vector.load %arg9[%c0_36, %c0_37] : memref<256x128xbf16, #tpu.memory_space<vmem>>, vector<256x128xbf16>
      %cst_38 = arith.constant dense<0.000000e+00> : vector<16x128xf32>
      %99 = tpu.matmul %97, %98, %cst_38 {dimension_numbers = #tpu.dot_dimension_numbers<[1], [0], [0], [1], [0, 0, 1, 1], [], []>} : vector<16x256xbf16>, vector<256x128xbf16>, vector<16x128xf32> -> vector<16x128xf32>
      %c0_39 = arith.constant 0 : index
      %c0_40 = arith.constant 0 : index
      %100 = vector.load %arg10[%c0_39, %c0_40] : memref<1x128xf32, #tpu.memory_space<vmem>>, vector<1x128xf32>
      %101 = vector.broadcast %100 : vector<1x128xf32> to vector<16x128xf32>
      %102 = arith.addf %99, %101 : vector<16x128xf32>
      %c0_41 = arith.constant 0 : index
      %c0_42 = arith.constant 0 : index
      %103 = vector.load %arg11[%c0_41, %c0_42] : memref<16x128xf32, #tpu.memory_space<vmem>>, vector<16x128xf32>
      tpu.vector_store %arg11[%c0_41, %c0_42], %102 {strides = array<i32>} : memref<16x128xf32, #tpu.memory_space<vmem>>, vector<16x128xf32>,
      %cst_43 = arith.constant dense<0.000000e+00> : vector<16x16xf32>
      %104 = tpu.matmul %96, %96, %cst_43 {dimension_numbers = #tpu.dot_dimension_numbers<[1], [1], [0], [0], [0, 0, 1, 0], [], []>} : vector<16x256xf32>, vector<16x256xf32>, vector<16x16xf32> -> vector<16x16xf32>
      %105 = arith.mulf %96, %96 : vector<16x256xf32>
      %cst_44 = arith.constant dense<0.000000e+00> : vector<16xf32>
      %106 = vector.multi_reduction <add>, %105, %cst_44 [1] : vector<16x256xf32> to vector<16xf32>
      %107 = vector.shape_cast %106 : vector<16xf32> to vector<16x1xf32>
      %108 = tpu.transpose %107, [1, 0] : vector<16x1xf32> -> vector<1x16xf32>
      %109 = vector.broadcast %107 : vector<16x1xf32> to vector<16x16xf32>
      %110 = vector.broadcast %108 : vector<1x16xf32> to vector<16x16xf32>
      %111 = arith.addf %109, %110 : vector<16x16xf32>
      %cst_45 = arith.constant 2.000000e+00 : f32
      %112 = vector.broadcast %cst_45 : f32 to vector<16x16xf32>
      %113 = arith.mulf %112, %104 : vector<16x16xf32>
      %114 = arith.subf %111, %113 : vector<16x16xf32>
      %cst_46 = arith.constant 0.000000e+00 : f32
      %115 = vector.broadcast %cst_46 : f32 to vector<16x16xf32>
      %116 = arith.maximumf %114, %115 : vector<16x16xf32>
      %117 = tpu.iota {dimensions = array<i32: 1>} : vector<16x16xi32>
      %c2_i32_47 = arith.constant 2 : i32
      %118 = vector.broadcast %c2_i32_47 : i32 to vector<16x16xi32>
      %119 = arith.cmpi slt, %117, %118 : vector<16x16xi32>
      %c8_i32_48 = arith.constant 8 : i32
      %120 = vector.broadcast %c8_i32_48 : i32 to vector<16x16xi32>
      %121 = arith.cmpi sge, %117, %120 : vector<16x16xi32>
      %c10_i32_49 = arith.constant 10 : i32
      %122 = vector.broadcast %c10_i32_49 : i32 to vector<16x16xi32>
      %123 = arith.cmpi slt, %117, %122 : vector<16x16xi32>
      %124 = arith.andi %121, %123 : vector<16x16xi1>
      %125 = arith.ori %119, %124 : vector<16x16xi1>
      %126 = arith.extui %125 : vector<16x16xi1> to vector<16x16xi32>
      %127 = arith.sitofp %126 : vector<16x16xi32> to vector<16x16xf32>
      %128 = vector.broadcast %38 : vector<16x1xf32> to vector<16x16xf32>
      %129 = arith.mulf %128, %127 : vector<16x16xf32>
      %130 = arith.mulf %116, %129 : vector<16x16xf32>
      %131 = vector.shape_cast %130 : vector<16x16xf32> to vector<1x16x16xf32>
      %cst_50 = arith.constant dense<0.000000e+00> : vector<1xf32>
      %132 = vector.multi_reduction <add>, %131, %cst_50 [1, 2] : vector<1x16x16xf32> to vector<1xf32>
      %133 = vector.shape_cast %132 : vector<1xf32> to vector<1x1x1xf32>
      %134 = vector.extract %133[0, 0, 0] : f32 from vector<1x1x1xf32>
      %cst_51 = arith.constant 1.200000e+01 : f32
      %135 = arith.divf %134, %cst_51 : f32
      %cst_52 = arith.constant 4.000000e+00 : f32
      %136 = arith.divf %135, %cst_52 : f32
      %cst_53 = arith.constant 9.99999996E-13 : f32
      %137 = arith.maximumf %136, %cst_53 : f32
      %cst_54 = arith.constant 0.000000e+00 : f32
      %138 = vector.broadcast %cst_54 : f32 to vector<16x16xf32>
      %cst_55 = arith.constant 1.000000e+00 : f32
      %139 = arith.mulf %137, %cst_55 : f32
      %cst_56 = arith.constant -1.000000e+00 : f32
      %140 = arith.divf %cst_56, %139 : f32
      %141 = vector.broadcast %140 : f32 to vector<16x16xf32>
      %142 = arith.mulf %116, %141 : vector<16x16xf32>
      %143 = math.exp %142 : vector<16x16xf32>
      %144 = arith.addf %138, %143 : vector<16x16xf32>
      %cst_57 = arith.constant 2.000000e+00 : f32
      %145 = arith.mulf %137, %cst_57 : f32
      %cst_58 = arith.constant -1.000000e+00 : f32
      %146 = arith.divf %cst_58, %145 : f32
      %147 = vector.broadcast %146 : f32 to vector<16x16xf32>
      %148 = arith.mulf %116, %147 : vector<16x16xf32>
      %149 = math.exp %148 : vector<16x16xf32>
      %150 = arith.addf %144, %149 : vector<16x16xf32>
      %cst_59 = arith.constant 4.000000e+00 : f32
      %151 = arith.mulf %137, %cst_59 : f32
      %cst_60 = arith.constant -1.000000e+00 : f32
      %152 = arith.divf %cst_60, %151 : f32
      %153 = vector.broadcast %152 : f32 to vector<16x16xf32>
      %154 = arith.mulf %116, %153 : vector<16x16xf32>
      %155 = math.exp %154 : vector<16x16xf32>
      %156 = arith.addf %150, %155 : vector<16x16xf32>
      %cst_61 = arith.constant 8.000000e+00 : f32
      %157 = arith.mulf %137, %cst_61 : f32
      %cst_62 = arith.constant -1.000000e+00 : f32
      %158 = arith.divf %cst_62, %157 : f32
      %159 = vector.broadcast %158 : f32 to vector<16x16xf32>
      %160 = arith.mulf %116, %159 : vector<16x16xf32>
      %161 = math.exp %160 : vector<16x16xf32>
      %162 = arith.addf %156, %161 : vector<16x16xf32>
      %cst_63 = arith.constant 1.600000e+01 : f32
      %163 = arith.mulf %137, %cst_63 : f32
      %cst_64 = arith.constant -1.000000e+00 : f32
      %164 = arith.divf %cst_64, %163 : f32
      %165 = vector.broadcast %164 : f32 to vector<16x16xf32>
      %166 = arith.mulf %116, %165 : vector<16x16xf32>
      %167 = math.exp %166 : vector<16x16xf32>
      %168 = arith.addf %162, %167 : vector<16x16xf32>
      %169 = tpu.iota {dimensions = array<i32: 1>} : vector<16x128xi32>
      %c31_i32 = arith.constant 31 : i32
      %170 = vector.broadcast %c31_i32 : i32 to vector<16x128xi32>
      %171 = arith.cmpi slt, %169, %170 : vector<16x128xi32>
      %c0_65 = arith.constant 0 : index
      %c0_66 = arith.constant 0 : index
      %172 = vector.load %arg2[%c0_65, %c0_66] : memref<16x1xi32, #tpu.memory_space<vmem>>, vector<16x1xi32>
      %173 = vector.broadcast %172 : vector<16x1xi32> to vector<16x128xi32>
      %174 = arith.cmpi eq, %169, %173 : vector<16x128xi32>
      %175 = arith.extui %174 : vector<16x128xi1> to vector<16x128xi32>
      %176 = arith.sitofp %175 : vector<16x128xi32> to vector<16x128xf32>
      %cst_67 = arith.constant dense<0.000000e+00> : vector<128xf32>
      %177 = vector.multi_reduction <add>, %176, %cst_67 [0] : vector<16x128xf32> to vector<128xf32>
      %178 = vector.shape_cast %177 : vector<128xf32> to vector<1x128xf32>
      %cst_68 = arith.constant 0.000000e+00 : f32
      %179 = vector.broadcast %cst_68 : f32 to vector<1x128xf32>
      %180 = arith.cmpf oeq, %178, %179 : vector<1x128xf32>
      %cst_69 = arith.constant 1.000000e+02 : f32
      %181 = vector.broadcast %cst_69 : f32 to vector<1x128xf32>
      %182 = arith.select %180, %181, %178 : vector<1x128xi1>, vector<1x128xf32>
      %183 = vector.broadcast %182 : vector<1x128xf32> to vector<16x128xf32>
      %184 = arith.divf %176, %183 : vector<16x128xf32>
      %cst_70 = arith.constant -1.000000e+30 : f32
      %185 = vector.broadcast %cst_70 : f32 to vector<16x128xf32>
      %186 = arith.select %171, %102, %185 : vector<16x128xi1>, vector<16x128xf32>
      %cst_71 = arith.constant dense<0xFF800000> : vector<16xf32>
      %187 = vector.multi_reduction <maximumf>, %186, %cst_71 [1] : vector<16x128xf32> to vector<16xf32>
      %188 = vector.shape_cast %187 : vector<16xf32> to vector<16x1xf32>
      %189 = vector.broadcast %188 : vector<16x1xf32> to vector<16x128xf32>
      %190 = arith.subf %186, %189 : vector<16x128xf32>
      %191 = math.exp %190 : vector<16x128xf32>
      %192 = arith.extui %171 : vector<16x128xi1> to vector<16x128xi32>
      %193 = arith.sitofp %192 : vector<16x128xi32> to vector<16x128xf32>
      %194 = arith.mulf %191, %193 : vector<16x128xf32>
      %cst_72 = arith.constant dense<0.000000e+00> : vector<16xf32>
      %195 = vector.multi_reduction <add>, %194, %cst_72 [1] : vector<16x128xf32> to vector<16xf32>
      %196 = vector.shape_cast %195 : vector<16xf32> to vector<16x1xf32>
      %197 = vector.broadcast %196 : vector<16x1xf32> to vector<16x128xf32>
      %198 = arith.divf %194, %197 : vector<16x128xf32>
      %199 = vector.broadcast %37 : vector<16x1xf32> to vector<16x128xf32>
      %200 = arith.mulf %198, %199 : vector<16x128xf32>
      %cst_73 = arith.constant dense<0.000000e+00> : vector<128xf32>
      %201 = vector.multi_reduction <add>, %200, %cst_73 [0] : vector<16x128xf32> to vector<128xf32>
      %202 = vector.shape_cast %201 : vector<128xf32> to vector<1x128xf32>
      %cst_74 = arith.constant 0.000000e+00 : f32
      %203 = vector.broadcast %cst_74 : f32 to vector<1x128xf32>
      %204 = arith.cmpf oeq, %202, %203 : vector<1x128xf32>
      %cst_75 = arith.constant 1.000000e+02 : f32
      %205 = vector.broadcast %cst_75 : f32 to vector<1x128xf32>
      %206 = arith.select %204, %205, %202 : vector<1x128xi1>, vector<1x128xf32>
      %207 = vector.broadcast %206 : vector<1x128xf32> to vector<16x128xf32>
      %208 = arith.divf %200, %207 : vector<16x128xf32>
      %209 = arith.subf %184, %208 : vector<16x128xf32>
      %cst_76 = arith.constant dense<0.000000e+00> : vector<16x16xf32>
      %210 = tpu.matmul %209, %209, %cst_76 {dimension_numbers = #tpu.dot_dimension_numbers<[1], [1], [0], [0], [0, 0, 1, 0], [], []>} : vector<16x128xf32>, vector<16x128xf32>, vector<16x16xf32> -> vector<16x16xf32>
      %211 = arith.mulf %210, %168 : vector<16x16xf32>
      %212 = vector.shape_cast %211 : vector<16x16xf32> to vector<1x16x16xf32>
      %cst_77 = arith.constant dense<0.000000e+00> : vector<1xf32>
      %213 = vector.multi_reduction <add>, %212, %cst_77 [1, 2] : vector<1x16x16xf32> to vector<1xf32>
      %214 = vector.shape_cast %213 : vector<1xf32> to vector<1x1x1xf32>
      %215 = vector.extract %214[0, 0, 0] : f32 from vector<1x1x1xf32>
      %c0_78 = arith.constant 0 : index
      %c0_79 = arith.constant 0 : index
      %216 = memref.load %arg12[%c0_78, %c0_79] : memref<1x1xf32, #tpu.memory_space<smem>>
      memref.store %215, %arg12[%c0_78, %c0_79] : memref<1x1xf32, #tpu.memory_space<smem>>
    } else {
    }
    return
  }
  func.func @transform_0(%arg0: i32) -> (i32, i32, i32) {
    %c0_i32 = arith.constant 0 : i32
    %c0_i32_0 = arith.constant 0 : i32
    %c0_i32_1 = arith.constant 0 : i32
    return %c0_i32, %c0_i32_0, %arg0 : i32, i32, i32
  }
  func.func @transform_1(%arg0: i32) -> (i32, i32) {
    %c0_i32 = arith.constant 0 : i32
    %c0_i32_0 = arith.constant 0 : i32
    %c0_i32_1 = arith.constant 0 : i32
    return %c0_i32, %c0_i32_0 : i32, i32
  }
  func.func @transform_2(%arg0: i32) -> (i32, i32) {
    %c0_i32 = arith.constant 0 : i32
    %c0_i32_0 = arith.constant 0 : i32
    %c0_i32_1 = arith.constant 0 : i32
    return %c0_i32, %c0_i32_0 : i32, i32
  }
  func.func @transform_3(%arg0: i32) -> (i32, i32) {
    %c0_i32 = arith.constant 0 : i32
    %c0_i32_0 = arith.constant 0 : i32
    %c0_i32_1 = arith.constant 0 : i32
    return %c0_i32, %c0_i32_0 : i32, i32
  }
  func.func @transform_4(%arg0: i32) -> (i32, i32) {
    %c0_i32 = arith.constant 0 : i32
    %c0_i32_0 = arith.constant 0 : i32
    %c0_i32_1 = arith.constant 0 : i32
    return %c0_i32, %c0_i32_0 : i32, i32
  }
  func.func @transform_5(%arg0: i32) -> (i32, i32) {
    %c0_i32 = arith.constant 0 : i32
    %c0_i32_0 = arith.constant 0 : i32
    %c0_i32_1 = arith.constant 0 : i32
    return %c0_i32, %c0_i32_0 : i32, i32
  }
  func.func @transform_6(%arg0: i32) -> (i32, i32) {
    %c0_i32 = arith.constant 0 : i32
    %c0_i32_0 = arith.constant 0 : i32
    %c0_i32_1 = arith.constant 0 : i32
    return %c0_i32, %c0_i32_0 : i32, i32
  }
  func.func @transform_7(%arg0: i32) -> (i32, i32) {
    %c0_i32 = arith.constant 0 : i32
    %c0_i32_0 = arith.constant 0 : i32
    %c0_i32_1 = arith.constant 0 : i32
    return %c0_i32, %c0_i32_0 : i32, i32
  }
  func.func @transform_8(%arg0: i32) -> (i32, i32) {
    %c0_i32 = arith.constant 0 : i32
    %c0_i32_0 = arith.constant 0 : i32
    %c0_i32_1 = arith.constant 0 : i32
    return %c0_i32, %c0_i32_0 : i32, i32
  }
  func.func @transform_9(%arg0: i32) -> (i32, i32) {
    %c0_i32 = arith.constant 0 : i32
    %c0_i32_0 = arith.constant 0 : i32
    %c0_i32_1 = arith.constant 0 : i32
    return %c0_i32, %c0_i32_0 : i32, i32
  }
  func.func @transform_10(%arg0: i32) -> (i32, i32) {
    %c0_i32 = arith.constant 0 : i32
    %c0_i32_0 = arith.constant 0 : i32
    %c0_i32_1 = arith.constant 0 : i32
    return %c0_i32, %c0_i32_0 : i32, i32
  }
  func.func @transform_11(%arg0: i32) -> (i32, i32) {
    %c0_i32 = arith.constant 0 : i32
    %c0_i32_0 = arith.constant 0 : i32
    %c0_i32_1 = arith.constant 0 : i32
    return %c0_i32, %c0_i32_0 : i32, i32
  }
}

</mosaic_0001>

<llo_original>
// kernel: edan_forward.1
$region0: #{edan_forward.1}
  #allocation0 [shape = 'u32[]', space=smem, size = 0x4, offset = 0x4, fixed_abs, tag = 'smem constant byte address 0x4 - core index']
  #allocation1 [shape = 'u32[144,128]{1,0:T(1,128)}', space=vmem, size = 0x12000, scoped, tag = 'internal scratch']
  #allocation2 [shape = 'f32[16,4]{1,0:T(8,128)}', space=vmem, size = 0x2000, scoped, tag = 'scratch operand']
  %s0 = inlined_call_operand.vmem [shape: bf16[16,4,256], index: 0, kind: input, shape index: {}]
  %s1 = inlined_call_operand.vmem [shape: s32[16,1], index: 1, kind: input, shape index: {}]
  %s2 = inlined_call_operand.vmem [shape: f32[4,2048], index: 2, kind: input, shape index: {}]
  %s3 = inlined_call_operand.vmem [shape: f32[1,2048], index: 3, kind: input, shape index: {}]
  %s4 = inlined_call_operand.hbm [shape: bf16[2048,256], index: 4, kind: input, shape index: {}]
  %s5 = inlined_call_operand.vmem [shape: f32[1,256], index: 5, kind: input, shape index: {}]
  %s6 = inlined_call_operand.vmem [shape: f32[1,256], index: 6, kind: input, shape index: {}]
  %s7 = inlined_call_operand.vmem [shape: f32[1,256], index: 7, kind: input, shape index: {}]
  %s8 = inlined_call_operand.vmem [shape: bf16[256,128], index: 8, kind: input, shape index: {}]
  %s9 = inlined_call_operand.vmem [shape: f32[1,128], index: 9, kind: input, shape index: {}]
  %s10 = inlined_call_operand.vmem [shape: f32[16,128], index: 10, kind: output, shape index: {0}]
  %s11 = inlined_call_operand.hbm [shape: f32[1,1], index: 11, kind: output, shape index: {1}]
  %12 = xla_tuple %s10, %s11
  %s13 = sld [smem:[#allocation0]]
  $region134: #{edan_forward.1} parent=0
    _
  %s15 = ssub.s32 1, %s13
  %s16 = scalar_select 0, %s15, %s13
  $region1: #{edan_forward.1} parent=0
    #allocation3 [shape = 'u8[32768]{0}', space=vmem, size = 0x8000, scoped, tag = 'input window, operand 0']
    #allocation4 [shape = 'u8[1048576]{0}', space=vmem, size = 0x100000, scoped, tag = 'input window, operand 4, single buffered']
    #allocation5 [shape = 's32[2]{0}', space=sflag, size = 0x8, scoped, tag = 'scoped memory for edan_forward.1']
    #allocation6 [shape = 's32[2]{0}', space=sflag, size = 0x8, scoped, tag = 'scoped memory for edan_forward.1']
    #allocation7 [shape = 'u8[512]{0}', space=smem, size = 0x200, scoped, tag = 'output window, operand 1, single buffered']
    %17 = vsyncpa [#allocation5], 0
    %18 = vsyncpa [#allocation6], 0
    loop: start=0, step=1, limit=4
    $region2: #{edan_forward.1} parent=1 // loop_pre_header
      _
    $region3: #{edan_forward.1} parent=1 // loop_header
      %s20 = sphi 0, %s24
      %p21 = scmp.ge.s32.totalorder %s20, 4
      %s30 = sphi 0, %s32
      %s33 = sphi 0, %s30
      %s34 = sphi 0, %s33
      %s50 = sphi 0, %s34
      %s54 = sphi 0, %s54
      %s56 = sphi 0, %s54
      %s57 = sphi 0, %s56
      %s71 = sphi 0, %s57
      %s75 = sphi 0, %s75
      %s77 = sphi 0, %s75
      %s78 = sphi 0, %s77
      %s92 = sphi 0, %s78
      %s96 = sphi 0, %s96
      %s98 = sphi 0, %s96
      %s99 = sphi 0, %s98
      %s113 = sphi 0, %s99
      %s117 = sphi 0, %s117
      %s119 = sphi 0, %s117
      %s120 = sphi 0, %s119
      %s134 = sphi 0, %s120
      %s138 = sphi 0, %s138
      %s140 = sphi 0, %s138
      %s141 = sphi 0, %s140
      %s155 = sphi 0, %s141
      %s159 = sphi 0, %s159
      %s161 = sphi 0, %s159
      %s162 = sphi 0, %s161
      %s176 = sphi 0, %s162
      %s180 = sphi 0, %s180
      %s182 = sphi 0, %s180
      %s183 = sphi 0, %s182
      %s197 = sphi 0, %s183
      %s201 = sphi 0, %s201
      %s203 = sphi 0, %s201
      %s204 = sphi 0, %s203
      %s218 = sphi 0, %s204
      %s222 = sphi 0, %s222
      %s224 = sphi 0, %s222
      %s225 = sphi 0, %s224
      %s239 = sphi 0, %s225
      %s243 = sphi 0, %s243
      %s245 = sphi 0, %s243
      %s246 = sphi 0, %s245
      %s260 = sphi 0, %s246
      %s264 = sphi 0, %s264
      %s266 = sphi 0, %s264
      %s267 = sphi 0, %s266
      %s281 = sphi 0, %s267
    $region4: #{edan_forward.1} parent=1 // loop_header_branch
      %23 = sbr.rel (%p21) target = $region8
    $region5: #{edan_forward.1} parent=1 // loop_body
      %s25 = ssub.s32 %s20, 1
      %s26 = ssub.s32 %s20, 2
      %s27 = sadd.s32 %s20, 1
      %s28 = ssub.s32 %s20, %s27
      %p29 = scmp.eq.s32.totalorder %s28, 0
      %s31 = sadd.s32 %s30, 1
      %s32 = scalar_select %p29, %s30, %s31
      %p35 = pneg %p29
      %p36 = scmp.eq.s32.totalorder %s20, 1
      %p37 = por %p35, %p36
      %p38 = scmp.ne.s32.totalorder %s30, %s33
      %p39 = scmp.eq.s32.totalorder %s20, 0
      %p40 = por %p38, %p39
      %p41 = scmp.ne.s32.totalorder %s30, %s33
      %p42 = scmp.eq.s32.totalorder %s25, 1
      %p43 = por %p41, %p42
      %p44 = scmp.ne.s32.totalorder %s33, %s34
      %p45 = scmp.eq.s32.totalorder %s25, 0
      %p46 = por %p44, %p45
      %p47 = scmp.ne.s32.totalorder %s33, %s34
      %p48 = scmp.eq.s32.totalorder %s26, 1
      %p49 = por %p47, %p48
      %p51 = scmp.ne.s32.totalorder %s34, %s50
      %p52 = scmp.eq.s32.totalorder %s26, 0
      %p53 = por %p51, %p52
      %s55 = sadd.s32 %s54, 1
      %p58 = scmp.eq.s32.totalorder %s20, 1
      %p59 = scmp.ne.s32.totalorder %s54, %s56
      %p60 = scmp.eq.s32.totalorder %s20, 0
      %p61 = por %p59, %p60
      %p62 = scmp.ne.s32.totalorder %s54, %s56
      %p63 = scmp.eq.s32.totalorder %s25, 1
      %p64 = por %p62, %p63
      %p65 = scmp.ne.s32.totalorder %s56, %s57
      %p66 = scmp.eq.s32.totalorder %s25, 0
      %p67 = por %p65, %p66
      %p68 = scmp.ne.s32.totalorder %s56, %s57
      %p69 = scmp.eq.s32.totalorder %s26, 1
      %p70 = por %p68, %p69
      %p72 = scmp.ne.s32.totalorder %s57, %s71
      %p73 = scmp.eq.s32.totalorder %s26, 0
      %p74 = por %p72, %p73
      %s76 = sadd.s32 %s75, 1
      %p79 = scmp.eq.s32.totalorder %s20, 1
      %p80 = scmp.ne.s32.totalorder %s75, %s77
      %p81 = scmp.eq.s32.totalorder %s20, 0
      %p82 = por %p80, %p81
      %p83 = scmp.ne.s32.totalorder %s75, %s77
      %p84 = scmp.eq.s32.totalorder %s25, 1
      %p85 = por %p83, %p84
      %p86 = scmp.ne.s32.totalorder %s77, %s78
      %p87 = scmp.eq.s32.totalorder %s25, 0
      %p88 = por %p86, %p87
      %p89 = scmp.ne.s32.totalorder %s77, %s78
      %p90 = scmp.eq.s32.totalorder %s26, 1
      %p91 = por %p89, %p90
      %p93 = scmp.ne.s32.totalorder %s78, %s92
      %p94 = scmp.eq.s32.totalorder %s26, 0
      %p95 = por %p93, %p94
      %s97 = sadd.s32 %s96, 1
      %p100 = scmp.eq.s32.totalorder %s20, 1
      %p101 = scmp.ne.s32.totalorder %s96, %s98
      %p102 = scmp.eq.s32.totalorder %s20, 0
      %p103 = por %p101, %p102
      %p104 = scmp.ne.s32.totalorder %s96, %s98
      %p105 = scmp.eq.s32.totalorder %s25, 1
      %p106 = por %p104, %p105
      %p107 = scmp.ne.s32.totalorder %s98, %s99
      %p108 = scmp.eq.s32.totalorder %s25, 0
      %p109 = por %p107, %p108
      %p110 = scmp.ne.s32.totalorder %s98, %s99
      %p111 = scmp.eq.s32.totalorder %s26, 1
      %p112 = por %p110, %p111
      %p114 = scmp.ne.s32.totalorder %s99, %s113
      %p115 = scmp.eq.s32.totalorder %s26, 0
      %p116 = por %p114, %p115
      %s118 = sadd.s32 %s117, 1
      %p121 = scmp.eq.s32.totalorder %s20, 1
      %p122 = scmp.ne.s32.totalorder %s117, %s119
      %p123 = scmp.eq.s32.totalorder %s20, 0
      %p124 = por %p122, %p123
      %p125 = scmp.ne.s32.totalorder %s117, %s119
      %p126 = scmp.eq.s32.totalorder %s25, 1
      %p127 = por %p125, %p126
      %p128 = scmp.ne.s32.totalorder %s119, %s120
      %p129 = scmp.eq.s32.totalorder %s25, 0
      %p130 = por %p128, %p129
      %p131 = scmp.ne.s32.totalorder %s119, %s120
      %p132 = scmp.eq.s32.totalorder %s26, 1
      %p133 = por %p131, %p132
      %p135 = scmp.ne.s32.totalorder %s120, %s134
      %p136 = scmp.eq.s32.totalorder %s26, 0
      %p137 = por %p135, %p136
      %s139 = sadd.s32 %s138, 1
      %p142 = scmp.eq.s32.totalorder %s20, 1
      %p143 = scmp.ne.s32.totalorder %s138, %s140
      %p144 = scmp.eq.s32.totalorder %s20, 0
      %p145 = por %p143, %p144
      %p146 = scmp.ne.s32.totalorder %s138, %s140
      %p147 = scmp.eq.s32.totalorder %s25, 1
      %p148 = por %p146, %p147
      %p149 = scmp.ne.s32.totalorder %s140, %s141
      %p150 = scmp.eq.s32.totalorder %s25, 0
      %p151 = por %p149, %p150
      %p152 = scmp.ne.s32.totalorder %s140, %s141
      %p153 = scmp.eq.s32.totalorder %s26, 1
      %p154 = por %p152, %p153
      %p156 = scmp.ne.s32.totalorder %s141, %s155
      %p157 = scmp.eq.s32.totalorder %s26, 0
      %p158 = por %p156, %p157
      %s160 = sadd.s32 %s159, 1
      %p163 = scmp.eq.s32.totalorder %s20, 1
      %p164 = scmp.ne.s32.totalorder %s159, %s161
      %p165 = scmp.eq.s32.totalorder %s20, 0
      %p166 = por %p164, %p165
      %p167 = scmp.ne.s32.totalorder %s159, %s161
      %p168 = scmp.eq.s32.totalorder %s25, 1
      %p169 = por %p167, %p168
      %p170 = scmp.ne.s32.totalorder %s161, %s162
      %p171 = scmp.eq.s32.totalorder %s25, 0
      %p172 = por %p170, %p171
      %p173 = scmp.ne.s32.totalorder %s161, %s162
      %p174 = scmp.eq.s32.totalorder %s26, 1
      %p175 = por %p173, %p174
      %p177 = scmp.ne.s32.totalorder %s162, %s176
      %p178 = scmp.eq.s32.totalorder %s26, 0
      %p179 = por %p177, %p178
      %s181 = sadd.s32 %s180, 1
      %p184 = scmp.eq.s32.totalorder %s20, 1
      %p185 = scmp.ne.s32.totalorder %s180, %s182
      %p186 = scmp.eq.s32.totalorder %s20, 0
      %p187 = por %p185, %p186
      %p188 = scmp.ne.s32.totalorder %s180, %s182
      %p189 = scmp.eq.s32.totalorder %s25, 1
      %p190 = por %p188, %p189
      %p191 = scmp.ne.s32.totalorder %s182, %s183
      %p192 = scmp.eq.s32.totalorder %s25, 0
      %p193 = por %p191, %p192
      %p194 = scmp.ne.s32.totalorder %s182, %s183
      %p195 = scmp.eq.s32.totalorder %s26, 1
      %p196 = por %p194, %p195
      %p198 = scmp.ne.s32.totalorder %s183, %s197
      %p199 = scmp.eq.s32.totalorder %s26, 0
      %p200 = por %p198, %p199
      %s202 = sadd.s32 %s201, 1
      %p205 = scmp.eq.s32.totalorder %s20, 1
      %p206 = scmp.ne.s32.totalorder %s201, %s203
      %p207 = scmp.eq.s32.totalorder %s20, 0
      %p208 = por %p206, %p207
      %p209 = scmp.ne.s32.totalorder %s201, %s203
      %p210 = scmp.eq.s32.totalorder %s25, 1
      %p211 = por %p209, %p210
      %p212 = scmp.ne.s32.totalorder %s203, %s204
      %p213 = scmp.eq.s32.totalorder %s25, 0
      %p214 = por %p212, %p213
      %p215 = scmp.ne.s32.totalorder %s203, %s204
      %p216 = scmp.eq.s32.totalorder %s26, 1
      %p217 = por %p215, %p216
      %p219 = scmp.ne.s32.totalorder %s204, %s218
      %p220 = scmp.eq.s32.totalorder %s26, 0
      %p221 = por %p219, %p220
      %s223 = sadd.s32 %s222, 1
      %p226 = scmp.eq.s32.totalorder %s20, 1
      %p227 = scmp.ne.s32.totalorder %s222, %s224
      %p228 = scmp.eq.s32.totalorder %s20, 0
      %p229 = por %p227, %p228
      %p230 = scmp.ne.s32.totalorder %s222, %s224
      %p231 = scmp.eq.s32.totalorder %s25, 1
      %p232 = por %p230, %p231
      %p233 = scmp.ne.s32.totalorder %s224, %s225
      %p234 = scmp.eq.s32.totalorder %s25, 0
      %p235 = por %p233, %p234
      %p236 = scmp.ne.s32.totalorder %s224, %s225
      %p237 = scmp.eq.s32.totalorder %s26, 1
      %p238 = por %p236, %p237
      %p240 = scmp.ne.s32.totalorder %s225, %s239
      %p241 = scmp.eq.s32.totalorder %s26, 0
      %p242 = por %p240, %p241
      %s244 = sadd.s32 %s243, 1
      %p247 = scmp.eq.s32.totalorder %s20, 1
      %p248 = scmp.ne.s32.totalorder %s243, %s245
      %p249 = scmp.eq.s32.totalorder %s20, 0
      %p250 = por %p248, %p249
      %p251 = scmp.ne.s32.totalorder %s243, %s245
      %p252 = scmp.eq.s32.totalorder %s25, 1
      %p253 = por %p251, %p252
      %p254 = scmp.ne.s32.totalorder %s245, %s246
      %p255 = scmp.eq.s32.totalorder %s25, 0
      %p256 = por %p254, %p255
      %p257 = scmp.ne.s32.totalorder %s245, %s246
      %p258 = scmp.eq.s32.totalorder %s26, 1
      %p259 = por %p257, %p258
      %p261 = scmp.ne.s32.totalorder %s246, %s260
      %p262 = scmp.eq.s32.totalorder %s26, 0
      %p263 = por %p261, %p262
      %s265 = sadd.s32 %s264, 1
      %p268 = scmp.eq.s32.totalorder %s20, 1
      %p269 = scmp.ne.s32.totalorder %s264, %s266
      %p270 = scmp.eq.s32.totalorder %s20, 0
      %p271 = por %p269, %p270
      %p272 = scmp.ne.s32.totalorder %s264, %s266
      %p273 = scmp.eq.s32.totalorder %s25, 1
      %p274 = por %p272, %p273
      %p275 = scmp.ne.s32.totalorder %s266, %s267
      %p276 = scmp.eq.s32.totalorder %s25, 0
      %p277 = por %p275, %p276
      %p278 = scmp.ne.s32.totalorder %s266, %s267
      %p279 = scmp.eq.s32.totalorder %s26, 1
      %p280 = por %p278, %p279
      %p282 = scmp.ne.s32.totalorder %s267, %s281
      %p283 = scmp.eq.s32.totalorder %s26, 0
      %p284 = por %p282, %p283
      %p285 = scmp.le.s32.totalorder 1, %s20
      %p286 = scmp.lt.s32.totalorder %s20, 3
      %p287 = pnand %p285, %p286
      %p288 = pneg %p287
      // Predicated region
      $region9: #{edan_forward.1} parent=5 // pred_check
        _
      $region10: #{edan_forward.1} parent=5 // pred_check_branch
        %290 = sbr.rel (%p287) target = $region12
      $region11: #{edan_forward.1} parent=5 // pred_region
        %s291 = ssub.s32 %s20, 1
        // Predicated region
        $region13: #{edan_forward.1} parent=11 // pred_check
          %p292 = pneg %p67
        $region14: #{edan_forward.1} parent=11 // pred_check_branch
          %294 = sbr.rel (%p292) target = $region16
        $region15: #{edan_forward.1} parent=11 // pred_region
          _
        $region16: #{edan_forward.1} parent=11 // pred_fallthru
          _
        // Predicated region
        $region17: #{edan_forward.1} parent=11 // pred_check
          %p295 = pneg %p88
        $region18: #{edan_forward.1} parent=11 // pred_check_branch
          %297 = sbr.rel (%p295) target = $region20
        $region19: #{edan_forward.1} parent=11 // pred_region
          _
        $region20: #{edan_forward.1} parent=11 // pred_fallthru
          _
        // Predicated region
        $region21: #{edan_forward.1} parent=11 // pred_check
          %p298 = pneg %p109
        $region22: #{edan_forward.1} parent=11 // pred_check_branch
          %300 = sbr.rel (%p298) target = $region24
        $region23: #{edan_forward.1} parent=11 // pred_region
          _
        $region24: #{edan_forward.1} parent=11 // pred_fallthru
          _
        // Predicated region
        $region25: #{edan_forward.1} parent=11 // pred_check
          %p301 = pneg %p130
        $region26: #{edan_forward.1} parent=11 // pred_check_branch
          %303 = sbr.rel (%p301) target = $region28
        $region27: #{edan_forward.1} parent=11 // pred_region
          %s305 = ssub.s32 32768, 32768
          %306 = vsyncadd [#allocation5], %s305
          %s307 = sshll.u32 [#allocation4], 4
          %s308 = int_to_ptr.vmem [resolvable:$true] %s307
          %313 = dma.hbm_to_vmem [thread:$0]  %s4, 32768, %s308, [#allocation5], 128, 128, 8
        $region28: #{edan_forward.1} parent=11 // pred_fallthru
          _
        // Predicated region
        $region29: #{edan_forward.1} parent=11 // pred_check
          %p314 = pneg %p151
        $region30: #{edan_forward.1} parent=11 // pred_check_branch
          %316 = sbr.rel (%p314) target = $region32
        $region31: #{edan_forward.1} parent=11 // pred_region
          _
        $region32: #{edan_forward.1} parent=11 // pred_fallthru
          _
        // Predicated region
        $region33: #{edan_forward.1} parent=11 // pred_check
          %p317 = pneg %p172
        $region34: #{edan_forward.1} parent=11 // pred_check_branch
          %319 = sbr.rel (%p317) target = $region36
        $region35: #{edan_forward.1} parent=11 // pred_region
          _
        $region36: #{edan_forward.1} parent=11 // pred_fallthru
          _
        // Predicated region
        $region37: #{edan_forward.1} parent=11 // pred_check
          %p320 = pneg %p193
        $region38: #{edan_forward.1} parent=11 // pred_check_branch
          %322 = sbr.rel (%p320) target = $region40
        $region39: #{edan_forward.1} parent=11 // pred_region
          _
        $region40: #{edan_forward.1} parent=11 // pred_fallthru
          _
        // Predicated region
        $region41: #{edan_forward.1} parent=11 // pred_check
          %p323 = pneg %p214
        $region42: #{edan_forward.1} parent=11 // pred_check_branch
          %325 = sbr.rel (%p323) target = $region44
        $region43: #{edan_forward.1} parent=11 // pred_region
          _
        $region44: #{edan_forward.1} parent=11 // pred_fallthru
          _
        // Predicated region
        $region45: #{edan_forward.1} parent=11 // pred_check
          %p326 = pneg %p235
        $region46: #{edan_forward.1} parent=11 // pred_check_branch
          %328 = sbr.rel (%p326) target = $region48
        $region47: #{edan_forward.1} parent=11 // pred_region
          _
        $region48: #{edan_forward.1} parent=11 // pred_fallthru
          _
      $region12: #{edan_forward.1} parent=5 // pred_fallthru
        _
      %p329 = scmp.lt.s32.totalorder %s20, 2
      // Predicated region
      $region49: #{edan_forward.1} parent=5 // pred_check
        %p330 = pneg %p329
      $region50: #{edan_forward.1} parent=5 // pred_check_branch
        %332 = sbr.rel (%p330) target = $region52
      $region51: #{edan_forward.1} parent=5 // pred_region
        // Predicated region
        $region53: #{edan_forward.1} parent=51 // pred_check
          %p333 = pneg %p40
        $region54: #{edan_forward.1} parent=51 // pred_check_branch
          %335 = sbr.rel (%p333) target = $region56
        $region55: #{edan_forward.1} parent=51 // pred_region
          %s336 = sand.u32 %s30, 1
          %s337 = sand.u32 %s30, 1
          %s338 = smul.addr %s337, 32
          %s339 = scalar_lea.vmem [#allocation3], %s338
          %s340 = smul.addr %s20, 2
          %s341 = scalar_lea.vmem %s0, %s340
          // Predicated region
          $region57: #{edan_forward.1} parent=55 // pred_check
            _
          $region58: #{edan_forward.1} parent=55 // pred_check_branch
            %343 = sbr.rel (0) target = $region60
          $region59: #{edan_forward.1} parent=55 // pred_region
            // Predicated region
            $region61: #{edan_forward.1} parent=59 // pred_check
              _
            $region62: #{edan_forward.1} parent=59 // pred_check_branch
              %345 = sbr.rel target = $region64
            $region63: #{edan_forward.1} parent=59 // pred_region
              // Predicated region
              $region76: #{edan_forward.1} parent=63 // pred_check
                _
              $region77: #{edan_forward.1} parent=63 // pred_check_branch
                %391 = sbr.rel (0) target = $region79
              $region78: #{edan_forward.1} parent=63 // pred_region
                loop: start=0, step=1, limit=1
                $region80: #{edan_forward.1} parent=78 // loop_pre_header
                  _
                $region81: #{edan_forward.1} parent=78 // loop_header
                  %s393 = sphi 0, %s397
                  %p394 = scmp.ge.s32.totalorder %s393, 1
                  %s398 = sphi %s341, %s341
                  %s399 = sphi %s339, %s339
                $region82: #{edan_forward.1} parent=78 // loop_header_branch
                  %396 = sbr.rel (%p394) target = $region86
                $region83: #{edan_forward.1} parent=78 // loop_body
                  _
                $region84: #{edan_forward.1} parent=78 // loop_footer
                  %s397 = sadd.s32 1, %s393
                $region85: #{edan_forward.1} parent=78 // loop_footer_branch
                  %392 = sbr.rel target = $region81
                $region86: #{edan_forward.1} parent=78 // loop_exit
                  _
                %s401 = ssub.s32 4, 1
                loop: start=0, step=1, limit=1
                $region87: #{edan_forward.1} parent=78 // loop_pre_header
                  _
                $region88: #{edan_forward.1} parent=78 // loop_header
                  %s403 = sphi 0, %s407
                  %p404 = scmp.ge.s32.totalorder %s403, 1
                  %s408 = sphi %s341, %s341
                  %s409 = sphi %s339, %s339
                $region89: #{edan_forward.1} parent=78 // loop_header_branch
                  %406 = sbr.rel (%p404) target = $region93
                $region90: #{edan_forward.1} parent=78 // loop_body
                  %v410 = vld [vmem:[%s408] sm:%s401]
                  %411 = vst [vmem:[%s409] sm:%s401] %v410
                  %v412 = vld [vmem:[%s408 + $0x4] sm:%s401]
                  %413 = vst [vmem:[%s409 + $0x2] sm:%s401] %v412
                  %v414 = vld [vmem:[%s408 + $0x8] sm:%s401]
                  %415 = vst [vmem:[%s409 + $0x4] sm:%s401] %v414
                  %v416 = vld [vmem:[%s408 + $0xc] sm:%s401]
                  %417 = vst [vmem:[%s409 + $0x6] sm:%s401] %v416
                  %v418 = vld [vmem:[%s408 + $0x10] sm:%s401]
                  %419 = vst [vmem:[%s409 + $0x8] sm:%s401] %v418
                  %v420 = vld [vmem:[%s408 + $0x14] sm:%s401]
                  %421 = vst [vmem:[%s409 + $0xa] sm:%s401] %v420
                  %v422 = vld [vmem:[%s408 + $0x18] sm:%s401]
                  %423 = vst [vmem:[%s409 + $0xc] sm:%s401] %v422
                  %v424 = vld [vmem:[%s408 + $0x1c] sm:%s401]
                  %425 = vst [vmem:[%s409 + $0xe] sm:%s401] %v424
                  %v426 = vld [vmem:[%s408 + $0x20] sm:%s401]
                  %427 = vst [vmem:[%s409 + $0x10] sm:%s401] %v426
                  %v428 = vld [vmem:[%s408 + $0x24] sm:%s401]
                  %429 = vst [vmem:[%s409 + $0x12] sm:%s401] %v428
                  %v430 = vld [vmem:[%s408 + $0x28] sm:%s401]
                  %431 = vst [vmem:[%s409 + $0x14] sm:%s401] %v430
                  %v432 = vld [vmem:[%s408 + $0x2c] sm:%s401]
                  %433 = vst [vmem:[%s409 + $0x16] sm:%s401] %v432
                  %v434 = vld [vmem:[%s408 + $0x30] sm:%s401]
                  %435 = vst [vmem:[%s409 + $0x18] sm:%s401] %v434
                  %v436 = vld [vmem:[%s408 + $0x34] sm:%s401]
                  %437 = vst [vmem:[%s409 + $0x1a] sm:%s401] %v436
                  %v438 = vld [vmem:[%s408 + $0x38] sm:%s401]
                  %439 = vst [vmem:[%s409 + $0x1c] sm:%s401] %v438
                  %v440 = vld [vmem:[%s408 + $0x3c] sm:%s401]
                  %441 = vst [vmem:[%s409 + $0x1e] sm:%s401] %v440
                $region91: #{edan_forward.1} parent=78 // loop_footer
                  %s407 = sadd.s32 1, %s403
                $region92: #{edan_forward.1} parent=78 // loop_footer_branch
                  %402 = sbr.rel target = $region88
                $region93: #{edan_forward.1} parent=78 // loop_exit
                  _
              $region79: #{edan_forward.1} parent=63 // pred_fallthru
                _
            $region64: #{edan_forward.1} parent=59 // pred_fallthru
              _
            // Predicated region
            $region65: #{edan_forward.1} parent=59 // pred_check
              _
            $region66: #{edan_forward.1} parent=59 // pred_check_branch
              %347 = sbr.rel (0) target = $region68
            $region67: #{edan_forward.1} parent=59 // pred_region
              %s349 = ssub.s32 4, 1
              loop: start=0, step=1, limit=1
              $region69: #{edan_forward.1} parent=67 // loop_pre_header
                _
              $region70: #{edan_forward.1} parent=67 // loop_header
                %s351 = sphi 0, %s355
                %p352 = scmp.ge.s32.totalorder %s351, 1
                %s356 = sphi %s341, %s341
                %s357 = sphi %s339, %s339
              $region71: #{edan_forward.1} parent=67 // loop_header_branch
                %354 = sbr.rel (%p352) target = $region75
              $region72: #{edan_forward.1} parent=67 // loop_body
                %v358 = vld [vmem:[%s356] sm:%s349]
                %359 = vst [vmem:[%s357] sm:%s349] %v358
                %v360 = vld [vmem:[%s356 + $0x4] sm:%s349]
                %361 = vst [vmem:[%s357 + $0x2] sm:%s349] %v360
                %v362 = vld [vmem:[%s356 + $0x8] sm:%s349]
                %363 = vst [vmem:[%s357 + $0x4] sm:%s349] %v362
                %v364 = vld [vmem:[%s356 + $0xc] sm:%s349]
                %365 = vst [vmem:[%s357 + $0x6] sm:%s349] %v364
                %v366 = vld [vmem:[%s356 + $0x10] sm:%s349]
                %367 = vst [vmem:[%s357 + $0x8] sm:%s349] %v366
                %v368 = vld [vmem:[%s356 + $0x14] sm:%s349]
                %369 = vst [vmem:[%s357 + $0xa] sm:%s349] %v368
                %v370 = vld [vmem:[%s356 + $0x18] sm:%s349]
                %371 = vst [vmem:[%s357 + $0xc] sm:%s349] %v370
                %v372 = vld [vmem:[%s356 + $0x1c] sm:%s349]
                %373 = vst [vmem:[%s357 + $0xe] sm:%s349] %v372
                %v374 = vld [vmem:[%s356 + $0x20] sm:%s349]
                %375 = vst [vmem:[%s357 + $0x10] sm:%s349] %v374
                %v376 = vld [vmem:[%s356 + $0x24] sm:%s349]
                %377 = vst [vmem:[%s357 + $0x12] sm:%s349] %v376
                %v378 = vld [vmem:[%s356 + $0x28] sm:%s349]
                %379 = vst [vmem:[%s357 + $0x14] sm:%s349] %v378
                %v380 = vld [vmem:[%s356 + $0x2c] sm:%s349]
                %381 = vst [vmem:[%s357 + $0x16] sm:%s349] %v380
                %v382 = vld [vmem:[%s356 + $0x30] sm:%s349]
                %383 = vst [vmem:[%s357 + $0x18] sm:%s349] %v382
                %v384 = vld [vmem:[%s356 + $0x34] sm:%s349]
                %385 = vst [vmem:[%s357 + $0x1a] sm:%s349] %v384
                %v386 = vld [vmem:[%s356 + $0x38] sm:%s349]
                %387 = vst [vmem:[%s357 + $0x1c] sm:%s349] %v386
                %v388 = vld [vmem:[%s356 + $0x3c] sm:%s349]
                %389 = vst [vmem:[%s357 + $0x1e] sm:%s349] %v388
              $region73: #{edan_forward.1} parent=67 // loop_footer
                %s355 = sadd.s32 1, %s351
              $region74: #{edan_forward.1} parent=67 // loop_footer_branch
                %350 = sbr.rel target = $region70
              $region75: #{edan_forward.1} parent=67 // loop_exit
                _
            $region68: #{edan_forward.1} parent=59 // pred_fallthru
              _
          $region60: #{edan_forward.1} parent=55 // pred_fallthru
            _
          %442 = vnop
        $region56: #{edan_forward.1} parent=51 // pred_fallthru
          _
      $region52: #{edan_forward.1} parent=5 // pred_fallthru
        _
      %p443 = scmp.le.s32.totalorder 1, %s20
      %p444 = scmp.lt.s32.totalorder %s20, 3
      %p445 = pnand %p443, %p444
      %p446 = pneg %p445
      // Predicated region
      $region94: #{edan_forward.1} parent=5 // pred_check
        _
      $region95: #{edan_forward.1} parent=5 // pred_check_branch
        %448 = sbr.rel (%p445) target = $region97
      $region96: #{edan_forward.1} parent=5 // pred_region
        %s449 = ssub.s32 %s20, 1
        %s450 = sand.u32 %s33, 1
        %s451 = sand.u32 %s33, 1
        %s452 = smul.addr %s451, 32
        %s453 = scalar_lea.vmem [#allocation3], %s452
        // Predicated region
        $region98: #{edan_forward.1} parent=96 // pred_check
          %p454 = pneg %p46
        $region99: #{edan_forward.1} parent=96 // pred_check_branch
          %456 = sbr.rel (%p454) target = $region101
        $region100: #{edan_forward.1} parent=96 // pred_region
          _
        $region101: #{edan_forward.1} parent=96 // pred_fallthru
          _
        // Predicated region
        $region102: #{edan_forward.1} parent=96 // pred_check
          %p457 = pneg %p130
        $region103: #{edan_forward.1} parent=96 // pred_check_branch
          %459 = sbr.rel (%p457) target = $region105
        $region104: #{edan_forward.1} parent=96 // pred_region
          %460 = dma.done [#allocation5], 32768
        $region105: #{edan_forward.1} parent=96 // pred_fallthru
          _
        %s461 = sand.u32 %s33, 1
        %s462 = sand.u32 %s33, 1
        %s463 = smul.addr %s462, 32
        %s464 = scalar_lea.vmem [#allocation3], %s463
        %p465 = pneg %p46
        %p466 = pneg %p43
        %p467 = pneg %p67
        %p468 = pneg %p64
        %p469 = pneg %p88
        %p470 = pneg %p85
        %p471 = pneg %p109
        %p472 = pneg %p106
        %p473 = pneg %p130
        %p474 = pneg %p127
        %p475 = pneg %p151
        %p476 = pneg %p148
        %p477 = pneg %p172
        %p478 = pneg %p169
        %p479 = pneg %p193
        %p480 = pneg %p190
        %p481 = pneg %p214
        %p482 = pneg %p211
        %p483 = pneg %p235
        %p484 = pneg %p232
        %p485 = pneg %p256
        %p486 = pneg %p253
        %p487 = pneg %p277
        %p488 = pneg %p274
        %p490 = scmp.eq.s32.totalorder %s25, 0
        // Predicated region
        $region106: #{edan_forward.1} parent=96 // pred_check
          %p491 = pneg %p490
        $region107: #{edan_forward.1} parent=96 // pred_check_branch
          %493 = sbr.rel (%p491) target = $region109
        $region108: #{edan_forward.1} parent=96 // pred_region
          %vm494 = vcmask 31744
          %495 = vst.msk [vmem:[#allocation2] sm:$0xff] %vm494, 0.0
          %496 = vst.msk [vmem:[#allocation2 + $0x8] sm:$0xff] %vm494, 0.0
        $region109: #{edan_forward.1} parent=96 // pred_fallthru
          _
        %v497 = vld [vmem:[#allocation2] sm:$0xff]
        %v498 = vld [vmem:[#allocation2 + $0x8] sm:$0xff]
        %v499 = vld [vmem:[%s453] sm:$0x3]
        %v500 = vld [vmem:[%s453 + $0x2] sm:$0x3]
        %v501 = vld [vmem:[%s453 + $0x4] sm:$0x3]
        %v502 = vld [vmem:[%s453 + $0x6] sm:$0x3]
        %v503 = vld [vmem:[%s453 + $0x8] sm:$0x3]
        %v504 = vld [vmem:[%s453 + $0xa] sm:$0x3]
        %v505 = vld [vmem:[%s453 + $0xc] sm:$0x3]
        %v506 = vld [vmem:[%s453 + $0xe] sm:$0x3]
        %v507 = vld [vmem:[%s453 + $0x10] sm:$0x3]
        %v508 = vld [vmem:[%s453 + $0x12] sm:$0x3]
        %v509 = vld [vmem:[%s453 + $0x14] sm:$0x3]
        %v510 = vld [vmem:[%s453 + $0x16] sm:$0x3]
        %v511 = vld [vmem:[%s453 + $0x18] sm:$0x3]
        %v512 = vld [vmem:[%s453 + $0x1a] sm:$0x3]
        %v513 = vld [vmem:[%s453 + $0x1c] sm:$0x3]
        %v514 = vld [vmem:[%s453 + $0x1e] sm:$0x3]
        %v515 = vunpack.c.l.bf16 %v499
        %v516 = vunpack.c.l.bf16 %v500
        %v517 = vunpack.c.l.bf16 %v501
        %v518 = vunpack.c.l.bf16 %v502
        %v519 = vunpack.c.l.bf16 %v503
        %v520 = vunpack.c.l.bf16 %v504
        %v521 = vunpack.c.l.bf16 %v505
        %v522 = vunpack.c.l.bf16 %v506
        %v523 = vunpack.c.l.bf16 %v507
        %v524 = vunpack.c.l.bf16 %v508
        %v525 = vunpack.c.l.bf16 %v509
        %v526 = vunpack.c.l.bf16 %v510
        %v527 = vunpack.c.l.bf16 %v511
        %v528 = vunpack.c.l.bf16 %v512
        %v529 = vunpack.c.l.bf16 %v513
        %v530 = vunpack.c.l.bf16 %v514
        %vm531 = vcmask 1043456
        %v532 = vsel %vm531, %v515, 0.0
        %533 = vadd.xlane.f32.xlu0 %v532
        %v534 = vpop.xlane.xlu0 %533
        %v535 = vsel %vm531, %v516, 0.0
        %536 = vadd.xlane.f32.xlu0 %v535
        %v537 = vpop.xlane.xlu0 %536
        %v538 = vsel %vm531, %v517, 0.0
        %539 = vadd.xlane.f32.xlu0 %v538
        %v540 = vpop.xlane.xlu0 %539
        %v541 = vsel %vm531, %v518, 0.0
        %542 = vadd.xlane.f32.xlu0 %v541
        %v543 = vpop.xlane.xlu0 %542
        %v544 = vsel %vm531, %v519, 0.0
        %545 = vadd.xlane.f32.xlu0 %v544
        %v546 = vpop.xlane.xlu0 %545
        %v547 = vsel %vm531, %v520, 0.0
        %548 = vadd.xlane.f32.xlu0 %v547
        %v549 = vpop.xlane.xlu0 %548
        %v550 = vsel %vm531, %v521, 0.0
        %551 = vadd.xlane.f32.xlu0 %v550
        %v552 = vpop.xlane.xlu0 %551
        %v553 = vsel %vm531, %v522, 0.0
        %554 = vadd.xlane.f32.xlu0 %v553
        %v555 = vpop.xlane.xlu0 %554
        %v556 = vsel %vm531, %v523, 0.0
        %557 = vadd.xlane.f32.xlu0 %v556
        %v558 = vpop.xlane.xlu0 %557
        %v559 = vsel %vm531, %v524, 0.0
        %560 = vadd.xlane.f32.xlu0 %v559
        %v561 = vpop.xlane.xlu0 %560
        %v562 = vsel %vm531, %v525, 0.0
        %563 = vadd.xlane.f32.xlu0 %v562
        %v564 = vpop.xlane.xlu0 %563
        %v565 = vsel %vm531, %v526, 0.0
        %566 = vadd.xlane.f32.xlu0 %v565
        %v567 = vpop.xlane.xlu0 %566
        %v568 = vsel %vm531, %v527, 0.0
        %569 = vadd.xlane.f32.xlu0 %v568
        %v570 = vpop.xlane.xlu0 %569
        %v571 = vsel %vm531, %v528, 0.0
        %572 = vadd.xlane.f32.xlu0 %v571
        %v573 = vpop.xlane.xlu0 %572
        %v574 = vsel %vm531, %v529, 0.0
        %575 = vadd.xlane.f32.xlu0 %v574
        %v576 = vpop.xlane.xlu0 %575
        %v577 = vsel %vm531, %v530, 0.0
        %578 = vadd.xlane.f32.xlu0 %v577
        %v579 = vpop.xlane.xlu0 %578
        %v596 = vlaneseq
        %v597 = vand.u32 %v596, 127
        %v598 = vlaneseq
        %v599 = vshrl.u32 %v598, 7
        %v600 = vsub.s32 %v597, %v599
        %v601 = vrot.slane %v534, %v600
        %v602 = vlaneseq
        %v603 = vshrl.u32 %v602, 7
        %v604 = vsub.s32 %v597, %v603
        %v605 = vrot.slane %v537, %v604
        %v606 = vlaneseq
        %v607 = vshrl.u32 %v606, 7
        %v608 = vsub.s32 %v597, %v607
        %v609 = vrot.slane %v540, %v608
        %v610 = vlaneseq
        %v611 = vshrl.u32 %v610, 7
        %v612 = vsub.s32 %v597, %v611
        %v613 = vrot.slane %v543, %v612
        %v614 = vlaneseq
        %v615 = vshrl.u32 %v614, 7
        %v616 = vsub.s32 %v597, %v615
        %v617 = vrot.slane %v546, %v616
        %v618 = vlaneseq
        %v619 = vshrl.u32 %v618, 7
        %v620 = vsub.s32 %v597, %v619
        %v621 = vrot.slane %v549, %v620
        %v622 = vlaneseq
        %v623 = vshrl.u32 %v622, 7
        %v624 = vsub.s32 %v597, %v623
        %v625 = vrot.slane %v552, %v624
        %v626 = vlaneseq
        %v627 = vshrl.u32 %v626, 7
        %v628 = vsub.s32 %v597, %v627
        %v629 = vrot.slane %v555, %v628
        %v630 = vlaneseq
        %v631 = vshrl.u32 %v630, 7
        %v632 = vsub.s32 %v597, %v631
        %v633 = vrot.slane %v558, %v632
        %v634 = vlaneseq
        %v635 = vshrl.u32 %v634, 7
        %v636 = vsub.s32 %v597, %v635
        %v637 = vrot.slane %v561, %v636
        %v638 = vlaneseq
        %v639 = vshrl.u32 %v638, 7
        %v640 = vsub.s32 %v597, %v639
        %v641 = vrot.slane %v564, %v640
        %v642 = vlaneseq
        %v643 = vshrl.u32 %v642, 7
        %v644 = vsub.s32 %v597, %v643
        %v645 = vrot.slane %v567, %v644
        %v646 = vlaneseq
        %v647 = vshrl.u32 %v646, 7
        %v648 = vsub.s32 %v597, %v647
        %v649 = vrot.slane %v570, %v648
        %v650 = vlaneseq
        %v651 = vshrl.u32 %v650, 7
        %v652 = vsub.s32 %v597, %v651
        %v653 = vrot.slane %v573, %v652
        %v654 = vlaneseq
        %v655 = vshrl.u32 %v654, 7
        %v656 = vsub.s32 %v597, %v655
        %v657 = vrot.slane %v576, %v656
        %v658 = vlaneseq
        %v659 = vshrl.u32 %v658, 7
        %v660 = vsub.s32 %v597, %v659
        %v661 = vrot.slane %v579, %v660
        %vm662 = vcmask 1041409
        %v663 = vsel %vm662, %v605, %v601
        %vm664 = vcmask 1042434
        %v665 = vsel %vm664, %v609, %v663
        %vm666 = vcmask 1043459
        %v667 = vsel %vm666, %v613, %v665
        %vm668 = vcmask 1044484
        %v669 = vsel %vm668, %v617, %v667
        %vm670 = vcmask 1045509
        %v671 = vsel %vm670, %v621, %v669
        %vm672 = vcmask 1046534
        %v673 = vsel %vm672, %v625, %v671
        %vm674 = vcmask 1047559
        %v675 = vsel %vm674, %v629, %v673
        %v676 = vsel %vm662, %v637, %v633
        %v677 = vsel %vm664, %v641, %v676
        %v678 = vsel %vm666, %v645, %v677
        %v679 = vsel %vm668, %v649, %v678
        %v680 = vsel %vm670, %v653, %v679
        %v681 = vsel %vm672, %v657, %v680
        %v682 = vsel %vm674, %v661, %v681
        %v685 = vadd.f32 %v497, %v675
        %v686 = vadd.f32 %v498, %v682
        %vm687 = vcmask 31744
        %688 = vst.msk [vmem:[#allocation2] sm:$0xff] %vm687, %v685
        %689 = vst.msk [vmem:[#allocation2 + $0x8] sm:$0xff] %vm687, %v686
        %p690 = scmp.eq.s32.totalorder %s25, 1
        // Predicated region
        $region110: #{edan_forward.1} parent=96 // pred_check
          %p691 = pneg %p690
        $region111: #{edan_forward.1} parent=96 // pred_check_branch
          %693 = sbr.rel (%p691) target = $region113
        $region112: #{edan_forward.1} parent=96 // pred_region
          %v694 = vld [vmem:[#allocation2] sm:$0xff]
          %v695 = vld [vmem:[#allocation2 + $0x8] sm:$0xff]
          %v696 = vmul.f32 %v694, 0.00390625
          %v697 = vmul.f32 %v695, 0.00390625
          %v698 = vld [vmem:[%s2] sm:$0xff]
          %v699 = vld [vmem:[%s2 + $0x8] sm:$0xff]
          %v700 = vld [vmem:[%s2 + $0x10] sm:$0xff]
          %v701 = vld [vmem:[%s2 + $0x18] sm:$0xff]
          %v702 = vld [vmem:[%s2 + $0x20] sm:$0xff]
          %v703 = vld [vmem:[%s2 + $0x28] sm:$0xff]
          %v704 = vld [vmem:[%s2 + $0x30] sm:$0xff]
          %v705 = vld [vmem:[%s2 + $0x38] sm:$0xff]
          %v706 = vld [vmem:[%s3] sm:$0xff]
          %v707 = vld [vmem:[%s3 + $0x8] sm:$0xff]
          %v710 = vlaneseq
          %v711 = vshrl.u32 %v710, 7
          %v712 = vsub.s32 0, %v711
          %v713 = vrot.slane %v706, %v712
          %v714 = vlaneseq
          %v715 = vshrl.u32 %v714, 7
          %v716 = vsub.s32 1, %v715
          %v717 = vrot.slane %v706, %v716
          %v718 = vlaneseq
          %v719 = vshrl.u32 %v718, 7
          %v720 = vsub.s32 2, %v719
          %v721 = vrot.slane %v706, %v720
          %v722 = vlaneseq
          %v723 = vshrl.u32 %v722, 7
          %v724 = vsub.s32 3, %v723
          %v725 = vrot.slane %v706, %v724
          %v726 = vlaneseq
          %v727 = vshrl.u32 %v726, 7
          %v728 = vsub.s32 4, %v727
          %v729 = vrot.slane %v706, %v728
          %v730 = vlaneseq
          %v731 = vshrl.u32 %v730, 7
          %v732 = vsub.s32 5, %v731
          %v733 = vrot.slane %v706, %v732
          %v734 = vlaneseq
          %v735 = vshrl.u32 %v734, 7
          %v736 = vsub.s32 6, %v735
          %v737 = vrot.slane %v706, %v736
          %v738 = vlaneseq
          %v739 = vshrl.u32 %v738, 7
          %v740 = vsub.s32 7, %v739
          %v741 = vrot.slane %v706, %v740
          %v742 = vlaneseq
          %v743 = vshrl.u32 %v742, 7
          %v744 = vsub.s32 0, %v743
          %v745 = vrot.slane %v707, %v744
          %v746 = vlaneseq
          %v747 = vshrl.u32 %v746, 7
          %v748 = vsub.s32 1, %v747
          %v749 = vrot.slane %v707, %v748
          %v750 = vlaneseq
          %v751 = vshrl.u32 %v750, 7
          %v752 = vsub.s32 2, %v751
          %v753 = vrot.slane %v707, %v752
          %v754 = vlaneseq
          %v755 = vshrl.u32 %v754, 7
          %v756 = vsub.s32 3, %v755
          %v757 = vrot.slane %v707, %v756
          %v758 = vlaneseq
          %v759 = vshrl.u32 %v758, 7
          %v760 = vsub.s32 4, %v759
          %v761 = vrot.slane %v707, %v760
          %v762 = vlaneseq
          %v763 = vshrl.u32 %v762, 7
          %v764 = vsub.s32 5, %v763
          %v765 = vrot.slane %v707, %v764
          %v766 = vlaneseq
          %v767 = vshrl.u32 %v766, 7
          %v768 = vsub.s32 6, %v767
          %v769 = vrot.slane %v707, %v768
          %v770 = vlaneseq
          %v771 = vshrl.u32 %v770, 7
          %v772 = vsub.s32 7, %v771
          %v773 = vrot.slane %v707, %v772
          %v798 = vcombine.high %v698, %v698
          %v799 = vcombine.high %v699, %v699
          %v800 = vcombine.high %v700, %v700
          %v801 = vcombine.high %v701, %v701
          %v802 = vcombine.high %v702, %v702
          %v803 = vcombine.high %v703, %v703
          %v804 = vcombine.high %v704, %v704
          %v805 = vcombine.high %v705, %v705
          %v807 = vsel %vm687, %v696, 0
          %v810 = vsel %vm687, %v697, 0
          %v812 = vsel %vm531, %v698, 0
          %v814 = vsel %vm531, %v798, 0
          %v816 = vsel %vm531, %v699, 0
          %v818 = vsel %vm531, %v799, 0
          %v820 = vsel %vm531, %v700, 0
          %v822 = vsel %vm531, %v800, 0
          %v824 = vsel %vm531, %v701, 0
          %v826 = vsel %vm531, %v801, 0
          %v828 = vsel %vm531, %v702, 0
          %v830 = vsel %vm531, %v802, 0
          %v832 = vsel %vm531, %v703, 0
          %v834 = vsel %vm531, %v803, 0
          %v836 = vsel %vm531, %v704, 0
          %v838 = vsel %vm531, %v804, 0
          %v840 = vsel %vm531, %v705, 0
          %v842 = vsel %vm531, %v805, 0
          %844 = vmatprep.subr.mxu0 0.0
          %845 = vmatpush1.msra.mxu0 0.0
          %846 = vmatprep.subr.mxu0 0.0
          %847 = vmatpush1.msra.mxu0 0.0
          %848 = vmatprep.subr.mxu0 0.0
          %849 = vmatpush1.msra.mxu0 0.0
          %850 = vmatprep.subr.mxu0 0.0
          %851 = vmatpush1.msra.mxu0 0.0
          %852 = vmatprep.subr.mxu0 0.0
          %853 = vmatpush1.msra.mxu0 0.0
          %854 = vmatprep.subr.mxu0 0.0
          %855 = vmatpush1.msra.mxu0 0.0
          %856 = vmatprep.subr.mxu0 0.0
          %857 = vmatpush1.msra.mxu0 0.0
          %858 = vmatprep.subr.mxu0 0.0
          %859 = vmatpush1.msra.mxu0 0.0
          %860 = vmatprep.subr.mxu0 0.0
          %861 = vmatpush1.msra.mxu0 0.0
          %862 = vmatprep.subr.mxu0 0.0
          %863 = vmatpush1.msra.mxu0 0.0
          %864 = vmatprep.subr.mxu0 0.0
          %865 = vmatpush1.msra.mxu0 0.0
          %866 = vmatprep.subr.mxu0 0.0
          %867 = vmatpush1.msra.mxu0 0.0
          %868 = vmatprep.subr.mxu0 0.0
          %869 = vmatpush1.msra.mxu0 0.0
          %870 = vmatprep.subr.mxu0 0.0
          %871 = vmatpush1.msra.mxu0 0.0
          %872 = vmatprep.subr.mxu0 0.0
          %873 = vmatpush1.msra.mxu0 0.0
          %874 = vmatprep.subr.mxu0 %v814
          %875 = vmatpush1.msra.mxu0 %v812
          %876 = vmatprep.subr.mxu0 0.0
          %877 = vmatpush2.msra.mxu0 0.0
          %878 = vmatprep.subr.mxu0 0.0
          %879 = vmatpush2.msra.mxu0 0.0
          %880 = vmatprep.subr.mxu0 0.0
          %881 = vmatpush2.msra.mxu0 0.0
          %882 = vmatprep.subr.mxu0 0.0
          %883 = vmatpush2.msra.mxu0 0.0
          %884 = vmatprep.subr.mxu0 0.0
          %885 = vmatpush2.msra.mxu0 0.0
          %886 = vmatprep.subr.mxu0 0.0
          %887 = vmatpush2.msra.mxu0 0.0
          %888 = vmatprep.subr.mxu0 0.0
          %889 = vmatpush2.msra.mxu0 0.0
          %890 = vmatprep.subr.mxu0 0.0
          %891 = vmatpush2.msra.mxu0 0.0
          %892 = vmatprep.subr.mxu0 0.0
          %893 = vmatpush2.msra.mxu0 0.0
          %894 = vmatprep.subr.mxu0 0.0
          %895 = vmatpush2.msra.mxu0 0.0
          %896 = vmatprep.subr.mxu0 0.0
          %897 = vmatpush2.msra.mxu0 0.0
          %898 = vmatprep.subr.mxu0 0.0
          %899 = vmatpush2.msra.mxu0 0.0
          %900 = vmatprep.subr.mxu0 0.0
          %901 = vmatpush2.msra.mxu0 0.0
          %902 = vmatprep.subr.mxu0 0.0
          %903 = vmatpush2.msra.mxu0 0.0
          %904 = vmatprep.subr.mxu0 0.0
          %905 = vmatpush2.msra.mxu0 0.0
          %906 = vmatprep.subr.mxu0 0.0
          %907 = vmatpush2.msra.mxu0 0.0
          %908 = vmatprep.mubr.f32.mxu0 0.0
          %909 = vmatmul.mubr.f32.gmra.mxu0 %v807
          %v910 = vpop.f32.mrf.mxu0
          %v911 = vadd.f32 %v713, %v910
          %v912 = vpop.f32.mrf.mxu0
          %v913 = vadd.f32 %v717, %v912
          %914 = vmatprep.mubr.f32.mxu0 0.0
          %915 = vmatmul.mubr.f32.gmra.mxu0 %v810
          %v916 = vpop.f32.mrf.mxu0
          %v917 = vadd.f32 %v713, %v916
          %v918 = vpop.f32.mrf.mxu0
          %v919 = vadd.f32 %v717, %v918
          %920 = vdwg.mxu0
          %921 = vmatprep.subr.mxu0 0.0
          %922 = vmatpush1.msra.mxu0 0.0
          %923 = vmatprep.subr.mxu0 0.0
          %924 = vmatpush1.msra.mxu0 0.0
          %925 = vmatprep.subr.mxu0 0.0
          %926 = vmatpush1.msra.mxu0 0.0
          %927 = vmatprep.subr.mxu0 0.0
          %928 = vmatpush1.msra.mxu0 0.0
          %929 = vmatprep.subr.mxu0 0.0
          %930 = vmatpush1.msra.mxu0 0.0
          %931 = vmatprep.subr.mxu0 0.0
          %932 = vmatpush1.msra.mxu0 0.0
          %933 = vmatprep.subr.mxu0 0.0
          %934 = vmatpush1.msra.mxu0 0.0
          %935 = vmatprep.subr.mxu0 0.0
          %936 = vmatpush1.msra.mxu0 0.0
          %937 = vmatprep.subr.mxu0 0.0
          %938 = vmatpush1.msra.mxu0 0.0
          %939 = vmatprep.subr.mxu0 0.0
          %940 = vmatpush1.msra.mxu0 0.0
          %941 = vmatprep.subr.mxu0 0.0
          %942 = vmatpush1.msra.mxu0 0.0
          %943 = vmatprep.subr.mxu0 0.0
          %944 = vmatpush1.msra.mxu0 0.0
          %945 = vmatprep.subr.mxu0 0.0
          %946 = vmatpush1.msra.mxu0 0.0
          %947 = vmatprep.subr.mxu0 0.0
          %948 = vmatpush1.msra.mxu0 0.0
          %949 = vmatprep.subr.mxu0 0.0
          %950 = vmatpush1.msra.mxu0 0.0
          %951 = vmatprep.subr.mxu0 %v818
          %952 = vmatpush1.msra.mxu0 %v816
          %953 = vmatprep.subr.mxu0 0.0
          %954 = vmatpush2.msra.mxu0 0.0
          %955 = vmatprep.subr.mxu0 0.0
          %956 = vmatpush2.msra.mxu0 0.0
          %957 = vmatprep.subr.mxu0 0.0
          %958 = vmatpush2.msra.mxu0 0.0
          %959 = vmatprep.subr.mxu0 0.0
          %960 = vmatpush2.msra.mxu0 0.0
          %961 = vmatprep.subr.mxu0 0.0
          %962 = vmatpush2.msra.mxu0 0.0
          %963 = vmatprep.subr.mxu0 0.0
          %964 = vmatpush2.msra.mxu0 0.0
          %965 = vmatprep.subr.mxu0 0.0
          %966 = vmatpush2.msra.mxu0 0.0
          %967 = vmatprep.subr.mxu0 0.0
          %968 = vmatpush2.msra.mxu0 0.0
          %969 = vmatprep.subr.mxu0 0.0
          %970 = vmatpush2.msra.mxu0 0.0
          %971 = vmatprep.subr.mxu0 0.0
          %972 = vmatpush2.msra.mxu0 0.0
          %973 = vmatprep.subr.mxu0 0.0
          %974 = vmatpush2.msra.mxu0 0.0
          %975 = vmatprep.subr.mxu0 0.0
          %976 = vmatpush2.msra.mxu0 0.0
          %977 = vmatprep.subr.mxu0 0.0
          %978 = vmatpush2.msra.mxu0 0.0
          %979 = vmatprep.subr.mxu0 0.0
          %980 = vmatpush2.msra.mxu0 0.0
          %981 = vmatprep.subr.mxu0 0.0
          %982 = vmatpush2.msra.mxu0 0.0
          %983 = vmatprep.subr.mxu0 0.0
          %984 = vmatpush2.msra.mxu0 0.0
          %985 = vmatprep.mubr.f32.mxu0 0.0
          %986 = vmatmul.mubr.f32.gmra.mxu0 %v807
          %v987 = vpop.f32.mrf.mxu0
          %v988 = vadd.f32 %v721, %v987
          %v989 = vpop.f32.mrf.mxu0
          %v990 = vadd.f32 %v725, %v989
          %991 = vmatprep.mubr.f32.mxu0 0.0
          %992 = vmatmul.mubr.f32.gmra.mxu0 %v810
          %v993 = vpop.f32.mrf.mxu0
          %v994 = vadd.f32 %v721, %v993
          %v995 = vpop.f32.mrf.mxu0
          %v996 = vadd.f32 %v725, %v995
          %997 = vdwg.mxu0
          %998 = vmatprep.subr.mxu0 0.0
          %999 = vmatpush1.msra.mxu0 0.0
          %1000 = vmatprep.subr.mxu0 0.0
          %1001 = vmatpush1.msra.mxu0 0.0
          %1002 = vmatprep.subr.mxu0 0.0
          %1003 = vmatpush1.msra.mxu0 0.0
          %1004 = vmatprep.subr.mxu0 0.0
          %1005 = vmatpush1.msra.mxu0 0.0
          %1006 = vmatprep.subr.mxu0 0.0
          %1007 = vmatpush1.msra.mxu0 0.0
          %1008 = vmatprep.subr.mxu0 0.0
          %1009 = vmatpush1.msra.mxu0 0.0
          %1010 = vmatprep.subr.mxu0 0.0
          %1011 = vmatpush1.msra.mxu0 0.0
          %1012 = vmatprep.subr.mxu0 0.0
          %1013 = vmatpush1.msra.mxu0 0.0
          %1014 = vmatprep.subr.mxu0 0.0
          %1015 = vmatpush1.msra.mxu0 0.0
          %1016 = vmatprep.subr.mxu0 0.0
          %1017 = vmatpush1.msra.mxu0 0.0
          %1018 = vmatprep.subr.mxu0 0.0
          %1019 = vmatpush1.msra.mxu0 0.0
          %1020 = vmatprep.subr.mxu0 0.0
          %1021 = vmatpush1.msra.mxu0 0.0
          %1022 = vmatprep.subr.mxu0 0.0
          %1023 = vmatpush1.msra.mxu0 0.0
          %1024 = vmatprep.subr.mxu0 0.0
          %1025 = vmatpush1.msra.mxu0 0.0
          %1026 = vmatprep.subr.mxu0 0.0
          %1027 = vmatpush1.msra.mxu0 0.0
          %1028 = vmatprep.subr.mxu0 %v822
          %1029 = vmatpush1.msra.mxu0 %v820
          %1030 = vmatprep.subr.mxu0 0.0
          %1031 = vmatpush2.msra.mxu0 0.0
          %1032 = vmatprep.subr.mxu0 0.0
          %1033 = vmatpush2.msra.mxu0 0.0
          %1034 = vmatprep.subr.mxu0 0.0
          %1035 = vmatpush2.msra.mxu0 0.0
          %1036 = vmatprep.subr.mxu0 0.0
          %1037 = vmatpush2.msra.mxu0 0.0
          %1038 = vmatprep.subr.mxu0 0.0
          %1039 = vmatpush2.msra.mxu0 0.0
          %1040 = vmatprep.subr.mxu0 0.0
          %1041 = vmatpush2.msra.mxu0 0.0
          %1042 = vmatprep.subr.mxu0 0.0
          %1043 = vmatpush2.msra.mxu0 0.0
          %1044 = vmatprep.subr.mxu0 0.0
          %1045 = vmatpush2.msra.mxu0 0.0
          %1046 = vmatprep.subr.mxu0 0.0
          %1047 = vmatpush2.msra.mxu0 0.0
          %1048 = vmatprep.subr.mxu0 0.0
          %1049 = vmatpush2.msra.mxu0 0.0
          %1050 = vmatprep.subr.mxu0 0.0
          %1051 = vmatpush2.msra.mxu0 0.0
          %1052 = vmatprep.subr.mxu0 0.0
          %1053 = vmatpush2.msra.mxu0 0.0
          %1054 = vmatprep.subr.mxu0 0.0
          %1055 = vmatpush2.msra.mxu0 0.0
          %1056 = vmatprep.subr.mxu0 0.0
          %1057 = vmatpush2.msra.mxu0 0.0
          %1058 = vmatprep.subr.mxu0 0.0
          %1059 = vmatpush2.msra.mxu0 0.0
          %1060 = vmatprep.subr.mxu0 0.0
          %1061 = vmatpush2.msra.mxu0 0.0
          %1062 = vmatprep.mubr.f32.mxu0 0.0
          %1063 = vmatmul.mubr.f32.gmra.mxu0 %v807
          %v1064 = vpop.f32.mrf.mxu0
          %v1065 = vadd.f32 %v729, %v1064
          %v1066 = vpop.f32.mrf.mxu0
          %v1067 = vadd.f32 %v733, %v1066
          %1068 = vmatprep.mubr.f32.mxu0 0.0
          %1069 = vmatmul.mubr.f32.gmra.mxu0 %v810
          %v1070 = vpop.f32.mrf.mxu0
          %v1071 = vadd.f32 %v729, %v1070
          %v1072 = vpop.f32.mrf.mxu0
          %v1073 = vadd.f32 %v733, %v1072
          %1074 = vdwg.mxu0
          %1075 = vmatprep.subr.mxu0 0.0
          %1076 = vmatpush1.msra.mxu0 0.0
          %1077 = vmatprep.subr.mxu0 0.0
          %1078 = vmatpush1.msra.mxu0 0.0
          %1079 = vmatprep.subr.mxu0 0.0
          %1080 = vmatpush1.msra.mxu0 0.0
          %1081 = vmatprep.subr.mxu0 0.0
          %1082 = vmatpush1.msra.mxu0 0.0
          %1083 = vmatprep.subr.mxu0 0.0
          %1084 = vmatpush1.msra.mxu0 0.0
          %1085 = vmatprep.subr.mxu0 0.0
          %1086 = vmatpush1.msra.mxu0 0.0
          %1087 = vmatprep.subr.mxu0 0.0
          %1088 = vmatpush1.msra.mxu0 0.0
          %1089 = vmatprep.subr.mxu0 0.0
          %1090 = vmatpush1.msra.mxu0 0.0
          %1091 = vmatprep.subr.mxu0 0.0
          %1092 = vmatpush1.msra.mxu0 0.0
          %1093 = vmatprep.subr.mxu0 0.0
          %1094 = vmatpush1.msra.mxu0 0.0
          %1095 = vmatprep.subr.mxu0 0.0
          %1096 = vmatpush1.msra.mxu0 0.0
          %1097 = vmatprep.subr.mxu0 0.0
          %1098 = vmatpush1.msra.mxu0 0.0
          %1099 = vmatprep.subr.mxu0 0.0
          %1100 = vmatpush1.msra.mxu0 0.0
          %1101 = vmatprep.subr.mxu0 0.0
          %1102 = vmatpush1.msra.mxu0 0.0
          %1103 = vmatprep.subr.mxu0 0.0
          %1104 = vmatpush1.msra.mxu0 0.0
          %1105 = vmatprep.subr.mxu0 %v826
          %1106 = vmatpush1.msra.mxu0 %v824
          %1107 = vmatprep.subr.mxu0 0.0
          %1108 = vmatpush2.msra.mxu0 0.0
          %1109 = vmatprep.subr.mxu0 0.0
          %1110 = vmatpush2.msra.mxu0 0.0
          %1111 = vmatprep.subr.mxu0 0.0
          %1112 = vmatpush2.msra.mxu0 0.0
          %1113 = vmatprep.subr.mxu0 0.0
          %1114 = vmatpush2.msra.mxu0 0.0
          %1115 = vmatprep.subr.mxu0 0.0
          %1116 = vmatpush2.msra.mxu0 0.0
          %1117 = vmatprep.subr.mxu0 0.0
          %1118 = vmatpush2.msra.mxu0 0.0
          %1119 = vmatprep.subr.mxu0 0.0
          %1120 = vmatpush2.msra.mxu0 0.0
          %1121 = vmatprep.subr.mxu0 0.0
          %1122 = vmatpush2.msra.mxu0 0.0
          %1123 = vmatprep.subr.mxu0 0.0
          %1124 = vmatpush2.msra.mxu0 0.0
          %1125 = vmatprep.subr.mxu0 0.0
          %1126 = vmatpush2.msra.mxu0 0.0
          %1127 = vmatprep.subr.mxu0 0.0
          %1128 = vmatpush2.msra.mxu0 0.0
          %1129 = vmatprep.subr.mxu0 0.0
          %1130 = vmatpush2.msra.mxu0 0.0
          %1131 = vmatprep.subr.mxu0 0.0
          %1132 = vmatpush2.msra.mxu0 0.0
          %1133 = vmatprep.subr.mxu0 0.0
          %1134 = vmatpush2.msra.mxu0 0.0
          %1135 = vmatprep.subr.mxu0 0.0
          %1136 = vmatpush2.msra.mxu0 0.0
          %1137 = vmatprep.subr.mxu0 0.0
          %1138 = vmatpush2.msra.mxu0 0.0
          %1139 = vmatprep.mubr.f32.mxu0 0.0
          %1140 = vmatmul.mubr.f32.gmra.mxu0 %v807
          %v1141 = vpop.f32.mrf.mxu0
          %v1142 = vadd.f32 %v737, %v1141
          %v1143 = vpop.f32.mrf.mxu0
          %v1144 = vadd.f32 %v741, %v1143
          %1145 = vmatprep.mubr.f32.mxu0 0.0
          %1146 = vmatmul.mubr.f32.gmra.mxu0 %v810
          %v1147 = vpop.f32.mrf.mxu0
          %v1148 = vadd.f32 %v737, %v1147
          %v1149 = vpop.f32.mrf.mxu0
          %v1150 = vadd.f32 %v741, %v1149
          %1151 = vdwg.mxu0
          %1152 = vmatprep.subr.mxu0 0.0
          %1153 = vmatpush1.msra.mxu0 0.0
          %1154 = vmatprep.subr.mxu0 0.0
          %1155 = vmatpush1.msra.mxu0 0.0
          %1156 = vmatprep.subr.mxu0 0.0
          %1157 = vmatpush1.msra.mxu0 0.0
          %1158 = vmatprep.subr.mxu0 0.0
          %1159 = vmatpush1.msra.mxu0 0.0
          %1160 = vmatprep.subr.mxu0 0.0
          %1161 = vmatpush1.msra.mxu0 0.0
          %1162 = vmatprep.subr.mxu0 0.0
          %1163 = vmatpush1.msra.mxu0 0.0
          %1164 = vmatprep.subr.mxu0 0.0
          %1165 = vmatpush1.msra.mxu0 0.0
          %1166 = vmatprep.subr.mxu0 0.0
          %1167 = vmatpush1.msra.mxu0 0.0
          %1168 = vmatprep.subr.mxu0 0.0
          %1169 = vmatpush1.msra.mxu0 0.0
          %1170 = vmatprep.subr.mxu0 0.0
          %1171 = vmatpush1.msra.mxu0 0.0
          %1172 = vmatprep.subr.mxu0 0.0
          %1173 = vmatpush1.msra.mxu0 0.0
          %1174 = vmatprep.subr.mxu0 0.0
          %1175 = vmatpush1.msra.mxu0 0.0
          %1176 = vmatprep.subr.mxu0 0.0
          %1177 = vmatpush1.msra.mxu0 0.0
          %1178 = vmatprep.subr.mxu0 0.0
          %1179 = vmatpush1.msra.mxu0 0.0
          %1180 = vmatprep.subr.mxu0 0.0
          %1181 = vmatpush1.msra.mxu0 0.0
          %1182 = vmatprep.subr.mxu0 %v830
          %1183 = vmatpush1.msra.mxu0 %v828
          %1184 = vmatprep.subr.mxu0 0.0
          %1185 = vmatpush2.msra.mxu0 0.0
          %1186 = vmatprep.subr.mxu0 0.0
          %1187 = vmatpush2.msra.mxu0 0.0
          %1188 = vmatprep.subr.mxu0 0.0
          %1189 = vmatpush2.msra.mxu0 0.0
          %1190 = vmatprep.subr.mxu0 0.0
          %1191 = vmatpush2.msra.mxu0 0.0
          %1192 = vmatprep.subr.mxu0 0.0
          %1193 = vmatpush2.msra.mxu0 0.0
          %1194 = vmatprep.subr.mxu0 0.0
          %1195 = vmatpush2.msra.mxu0 0.0
          %1196 = vmatprep.subr.mxu0 0.0
          %1197 = vmatpush2.msra.mxu0 0.0
          %1198 = vmatprep.subr.mxu0 0.0
          %1199 = vmatpush2.msra.mxu0 0.0
          %1200 = vmatprep.subr.mxu0 0.0
          %1201 = vmatpush2.msra.mxu0 0.0
          %1202 = vmatprep.subr.mxu0 0.0
          %1203 = vmatpush2.msra.mxu0 0.0
          %1204 = vmatprep.subr.mxu0 0.0
          %1205 = vmatpush2.msra.mxu0 0.0
          %1206 = vmatprep.subr.mxu0 0.0
          %1207 = vmatpush2.msra.mxu0 0.0
          %1208 = vmatprep.subr.mxu0 0.0
          %1209 = vmatpush2.msra.mxu0 0.0
          %1210 = vmatprep.subr.mxu0 0.0
          %1211 = vmatpush2.msra.mxu0 0.0
          %1212 = vmatprep.subr.mxu0 0.0
          %1213 = vmatpush2.msra.mxu0 0.0
          %1214 = vmatprep.subr.mxu0 0.0
          %1215 = vmatpush2.msra.mxu0 0.0
          %1216 = vmatprep.mubr.f32.mxu0 0.0
          %1217 = vmatmul.mubr.f32.gmra.mxu0 %v807
          %v1218 = vpop.f32.mrf.mxu0
          %v1219 = vadd.f32 %v745, %v1218
          %v1220 = vpop.f32.mrf.mxu0
          %v1221 = vadd.f32 %v749, %v1220
          %1222 = vmatprep.mubr.f32.mxu0 0.0
          %1223 = vmatmul.mubr.f32.gmra.mxu0 %v810
          %v1224 = vpop.f32.mrf.mxu0
          %v1225 = vadd.f32 %v745, %v1224
          %v1226 = vpop.f32.mrf.mxu0
          %v1227 = vadd.f32 %v749, %v1226
          %1228 = vdwg.mxu0
          %1229 = vmatprep.subr.mxu0 0.0
          %1230 = vmatpush1.msra.mxu0 0.0
          %1231 = vmatprep.subr.mxu0 0.0
          %1232 = vmatpush1.msra.mxu0 0.0
          %1233 = vmatprep.subr.mxu0 0.0
          %1234 = vmatpush1.msra.mxu0 0.0
          %1235 = vmatprep.subr.mxu0 0.0
          %1236 = vmatpush1.msra.mxu0 0.0
          %1237 = vmatprep.subr.mxu0 0.0
          %1238 = vmatpush1.msra.mxu0 0.0
          %1239 = vmatprep.subr.mxu0 0.0
          %1240 = vmatpush1.msra.mxu0 0.0
          %1241 = vmatprep.subr.mxu0 0.0
          %1242 = vmatpush1.msra.mxu0 0.0
          %1243 = vmatprep.subr.mxu0 0.0
          %1244 = vmatpush1.msra.mxu0 0.0
          %1245 = vmatprep.subr.mxu0 0.0
          %1246 = vmatpush1.msra.mxu0 0.0
          %1247 = vmatprep.subr.mxu0 0.0
          %1248 = vmatpush1.msra.mxu0 0.0
          %1249 = vmatprep.subr.mxu0 0.0
          %1250 = vmatpush1.msra.mxu0 0.0
          %1251 = vmatprep.subr.mxu0 0.0
          %1252 = vmatpush1.msra.mxu0 0.0
          %1253 = vmatprep.subr.mxu0 0.0
          %1254 = vmatpush1.msra.mxu0 0.0
          %1255 = vmatprep.subr.mxu0 0.0
          %1256 = vmatpush1.msra.mxu0 0.0
          %1257 = vmatprep.subr.mxu0 0.0
          %1258 = vmatpush1.msra.mxu0 0.0
          %1259 = vmatprep.subr.mxu0 %v834
          %1260 = vmatpush1.msra.mxu0 %v832
          %1261 = vmatprep.subr.mxu0 0.0
          %1262 = vmatpush2.msra.mxu0 0.0
          %1263 = vmatprep.subr.mxu0 0.0
          %1264 = vmatpush2.msra.mxu0 0.0
          %1265 = vmatprep.subr.mxu0 0.0
          %1266 = vmatpush2.msra.mxu0 0.0
          %1267 = vmatprep.subr.mxu0 0.0
          %1268 = vmatpush2.msra.mxu0 0.0
          %1269 = vmatprep.subr.mxu0 0.0
          %1270 = vmatpush2.msra.mxu0 0.0
          %1271 = vmatprep.subr.mxu0 0.0
          %1272 = vmatpush2.msra.mxu0 0.0
          %1273 = vmatprep.subr.mxu0 0.0
          %1274 = vmatpush2.msra.mxu0 0.0
          %1275 = vmatprep.subr.mxu0 0.0
          %1276 = vmatpush2.msra.mxu0 0.0
          %1277 = vmatprep.subr.mxu0 0.0
          %1278 = vmatpush2.msra.mxu0 0.0
          %1279 = vmatprep.subr.mxu0 0.0
          %1280 = vmatpush2.msra.mxu0 0.0
          %1281 = vmatprep.subr.mxu0 0.0
          %1282 = vmatpush2.msra.mxu0 0.0
          %1283 = vmatprep.subr.mxu0 0.0
          %1284 = vmatpush2.msra.mxu0 0.0
          %1285 = vmatprep.subr.mxu0 0.0
          %1286 = vmatpush2.msra.mxu0 0.0
          %1287 = vmatprep.subr.mxu0 0.0
          %1288 = vmatpush2.msra.mxu0 0.0
          %1289 = vmatprep.subr.mxu0 0.0
          %1290 = vmatpush2.msra.mxu0 0.0
          %1291 = vmatprep.subr.mxu0 0.0
          %1292 = vmatpush2.msra.mxu0 0.0
          %1293 = vmatprep.mubr.f32.mxu0 0.0
          %1294 = vmatmul.mubr.f32.gmra.mxu0 %v807
          %v1295 = vpop.f32.mrf.mxu0
          %v1296 = vadd.f32 %v753, %v1295
          %v1297 = vpop.f32.mrf.mxu0
          %v1298 = vadd.f32 %v757, %v1297
          %1299 = vmatprep.mubr.f32.mxu0 0.0
          %1300 = vmatmul.mubr.f32.gmra.mxu0 %v810
          %v1301 = vpop.f32.mrf.mxu0
          %v1302 = vadd.f32 %v753, %v1301
          %v1303 = vpop.f32.mrf.mxu0
          %v1304 = vadd.f32 %v757, %v1303
          %1305 = vdwg.mxu0
          %1306 = vmatprep.subr.mxu0 0.0
          %1307 = vmatpush1.msra.mxu0 0.0
          %1308 = vmatprep.subr.mxu0 0.0
          %1309 = vmatpush1.msra.mxu0 0.0
          %1310 = vmatprep.subr.mxu0 0.0
          %1311 = vmatpush1.msra.mxu0 0.0
          %1312 = vmatprep.subr.mxu0 0.0
          %1313 = vmatpush1.msra.mxu0 0.0
          %1314 = vmatprep.subr.mxu0 0.0
          %1315 = vmatpush1.msra.mxu0 0.0
          %1316 = vmatprep.subr.mxu0 0.0
          %1317 = vmatpush1.msra.mxu0 0.0
          %1318 = vmatprep.subr.mxu0 0.0
          %1319 = vmatpush1.msra.mxu0 0.0
          %1320 = vmatprep.subr.mxu0 0.0
          %1321 = vmatpush1.msra.mxu0 0.0
          %1322 = vmatprep.subr.mxu0 0.0
          %1323 = vmatpush1.msra.mxu0 0.0
          %1324 = vmatprep.subr.mxu0 0.0
          %1325 = vmatpush1.msra.mxu0 0.0
          %1326 = vmatprep.subr.mxu0 0.0
          %1327 = vmatpush1.msra.mxu0 0.0
          %1328 = vmatprep.subr.mxu0 0.0
          %1329 = vmatpush1.msra.mxu0 0.0
          %1330 = vmatprep.subr.mxu0 0.0
          %1331 = vmatpush1.msra.mxu0 0.0
          %1332 = vmatprep.subr.mxu0 0.0
          %1333 = vmatpush1.msra.mxu0 0.0
          %1334 = vmatprep.subr.mxu0 0.0
          %1335 = vmatpush1.msra.mxu0 0.0
          %1336 = vmatprep.subr.mxu0 %v838
          %1337 = vmatpush1.msra.mxu0 %v836
          %1338 = vmatprep.subr.mxu0 0.0
          %1339 = vmatpush2.msra.mxu0 0.0
          %1340 = vmatprep.subr.mxu0 0.0
          %1341 = vmatpush2.msra.mxu0 0.0
          %1342 = vmatprep.subr.mxu0 0.0
          %1343 = vmatpush2.msra.mxu0 0.0
          %1344 = vmatprep.subr.mxu0 0.0
          %1345 = vmatpush2.msra.mxu0 0.0
          %1346 = vmatprep.subr.mxu0 0.0
          %1347 = vmatpush2.msra.mxu0 0.0
          %1348 = vmatprep.subr.mxu0 0.0
          %1349 = vmatpush2.msra.mxu0 0.0
          %1350 = vmatprep.subr.mxu0 0.0
          %1351 = vmatpush2.msra.mxu0 0.0
          %1352 = vmatprep.subr.mxu0 0.0
          %1353 = vmatpush2.msra.mxu0 0.0
          %1354 = vmatprep.subr.mxu0 0.0
          %1355 = vmatpush2.msra.mxu0 0.0
          %1356 = vmatprep.subr.mxu0 0.0
          %1357 = vmatpush2.msra.mxu0 0.0
          %1358 = vmatprep.subr.mxu0 0.0
          %1359 = vmatpush2.msra.mxu0 0.0
          %1360 = vmatprep.subr.mxu0 0.0
          %1361 = vmatpush2.msra.mxu0 0.0
          %1362 = vmatprep.subr.mxu0 0.0
          %1363 = vmatpush2.msra.mxu0 0.0
          %1364 = vmatprep.subr.mxu0 0.0
          %1365 = vmatpush2.msra.mxu0 0.0
          %1366 = vmatprep.subr.mxu0 0.0
          %1367 = vmatpush2.msra.mxu0 0.0
          %1368 = vmatprep.subr.mxu0 0.0
          %1369 = vmatpush2.msra.mxu0 0.0
          %1370 = vmatprep.mubr.f32.mxu0 0.0
          %1371 = vmatmul.mubr.f32.gmra.mxu0 %v807
          %v1372 = vpop.f32.mrf.mxu0
          %v1373 = vadd.f32 %v761, %v1372
          %v1374 = vpop.f32.mrf.mxu0
          %v1375 = vadd.f32 %v765, %v1374
          %1376 = vmatprep.mubr.f32.mxu0 0.0
          %1377 = vmatmul.mubr.f32.gmra.mxu0 %v810
          %v1378 = vpop.f32.mrf.mxu0
          %v1379 = vadd.f32 %v761, %v1378
          %v1380 = vpop.f32.mrf.mxu0
          %v1381 = vadd.f32 %v765, %v1380
          %1382 = vdwg.mxu0
          %1383 = vmatprep.subr.mxu0 0.0
          %1384 = vmatpush1.msra.mxu0 0.0
          %1385 = vmatprep.subr.mxu0 0.0
          %1386 = vmatpush1.msra.mxu0 0.0
          %1387 = vmatprep.subr.mxu0 0.0
          %1388 = vmatpush1.msra.mxu0 0.0
          %1389 = vmatprep.subr.mxu0 0.0
          %1390 = vmatpush1.msra.mxu0 0.0
          %1391 = vmatprep.subr.mxu0 0.0
          %1392 = vmatpush1.msra.mxu0 0.0
          %1393 = vmatprep.subr.mxu0 0.0
          %1394 = vmatpush1.msra.mxu0 0.0
          %1395 = vmatprep.subr.mxu0 0.0
          %1396 = vmatpush1.msra.mxu0 0.0
          %1397 = vmatprep.subr.mxu0 0.0
          %1398 = vmatpush1.msra.mxu0 0.0
          %1399 = vmatprep.subr.mxu0 0.0
          %1400 = vmatpush1.msra.mxu0 0.0
          %1401 = vmatprep.subr.mxu0 0.0
          %1402 = vmatpush1.msra.mxu0 0.0
          %1403 = vmatprep.subr.mxu0 0.0
          %1404 = vmatpush1.msra.mxu0 0.0
          %1405 = vmatprep.subr.mxu0 0.0
          %1406 = vmatpush1.msra.mxu0 0.0
          %1407 = vmatprep.subr.mxu0 0.0
          %1408 = vmatpush1.msra.mxu0 0.0
          %1409 = vmatprep.subr.mxu0 0.0
          %1410 = vmatpush1.msra.mxu0 0.0
          %1411 = vmatprep.subr.mxu0 0.0
          %1412 = vmatpush1.msra.mxu0 0.0
          %1413 = vmatprep.subr.mxu0 %v842
          %1414 = vmatpush1.msra.mxu0 %v840
          %1415 = vmatprep.subr.mxu0 0.0
          %1416 = vmatpush2.msra.mxu0 0.0
          %1417 = vmatprep.subr.mxu0 0.0
          %1418 = vmatpush2.msra.mxu0 0.0
          %1419 = vmatprep.subr.mxu0 0.0
          %1420 = vmatpush2.msra.mxu0 0.0
          %1421 = vmatprep.subr.mxu0 0.0
          %1422 = vmatpush2.msra.mxu0 0.0
          %1423 = vmatprep.subr.mxu0 0.0
          %1424 = vmatpush2.msra.mxu0 0.0
          %1425 = vmatprep.subr.mxu0 0.0
          %1426 = vmatpush2.msra.mxu0 0.0
          %1427 = vmatprep.subr.mxu0 0.0
          %1428 = vmatpush2.msra.mxu0 0.0
          %1429 = vmatprep.subr.mxu0 0.0
          %1430 = vmatpush2.msra.mxu0 0.0
          %1431 = vmatprep.subr.mxu0 0.0
          %1432 = vmatpush2.msra.mxu0 0.0
          %1433 = vmatprep.subr.mxu0 0.0
          %1434 = vmatpush2.msra.mxu0 0.0
          %1435 = vmatprep.subr.mxu0 0.0
          %1436 = vmatpush2.msra.mxu0 0.0
          %1437 = vmatprep.subr.mxu0 0.0
          %1438 = vmatpush2.msra.mxu0 0.0
          %1439 = vmatprep.subr.mxu0 0.0
          %1440 = vmatpush2.msra.mxu0 0.0
          %1441 = vmatprep.subr.mxu0 0.0
          %1442 = vmatpush2.msra.mxu0 0.0
          %1443 = vmatprep.subr.mxu0 0.0
          %1444 = vmatpush2.msra.mxu0 0.0
          %1445 = vmatprep.subr.mxu0 0.0
          %1446 = vmatpush2.msra.mxu0 0.0
          %1447 = vmatprep.mubr.f32.mxu0 0.0
          %1448 = vmatmul.mubr.f32.gmra.mxu0 %v807
          %v1449 = vpop.f32.mrf.mxu0
          %v1450 = vadd.f32 %v769, %v1449
          %v1451 = vpop.f32.mrf.mxu0
          %v1452 = vadd.f32 %v773, %v1451
          %1453 = vmatprep.mubr.f32.mxu0 0.0
          %1454 = vmatmul.mubr.f32.gmra.mxu0 %v810
          %v1455 = vpop.f32.mrf.mxu0
          %v1456 = vadd.f32 %v769, %v1455
          %v1457 = vpop.f32.mrf.mxu0
          %v1458 = vadd.f32 %v773, %v1457
          %1459 = vdwg.mxu0
          %v1460 = vpack.c.bf16 %v917, %v911
          %v1461 = vpack.c.bf16 %v919, %v913
          %v1462 = vpack.c.bf16 %v994, %v988
          %v1463 = vpack.c.bf16 %v996, %v990
          %v1464 = vpack.c.bf16 %v1071, %v1065
          %v1465 = vpack.c.bf16 %v1073, %v1067
          %v1466 = vpack.c.bf16 %v1148, %v1142
          %v1467 = vpack.c.bf16 %v1150, %v1144
          %v1468 = vpack.c.bf16 %v1225, %v1219
          %v1469 = vpack.c.bf16 %v1227, %v1221
          %v1470 = vpack.c.bf16 %v1302, %v1296
          %v1471 = vpack.c.bf16 %v1304, %v1298
          %v1472 = vpack.c.bf16 %v1379, %v1373
          %v1473 = vpack.c.bf16 %v1381, %v1375
          %v1474 = vpack.c.bf16 %v1456, %v1450
          %v1475 = vpack.c.bf16 %v1458, %v1452
          %v1476 = vld [vmem:[#allocation4] sm:$0xff]
          %v1477 = vld [vmem:[#allocation4 + $0x8] sm:$0xff]
          %v1478 = vld [vmem:[#allocation4 + $0x10] sm:$0xff]
          %v1479 = vld [vmem:[#allocation4 + $0x18] sm:$0xff]
          %v1480 = vld [vmem:[#allocation4 + $0x20] sm:$0xff]
          %v1481 = vld [vmem:[#allocation4 + $0x28] sm:$0xff]
          %v1482 = vld [vmem:[#allocation4 + $0x30] sm:$0xff]
          %v1483 = vld [vmem:[#allocation4 + $0x38] sm:$0xff]
          %v1484 = vld [vmem:[#allocation4 + $0x40] sm:$0xff]
          %v1485 = vld [vmem:[#allocation4 + $0x48] sm:$0xff]
          %v1486 = vld [vmem:[#allocation4 + $0x50] sm:$0xff]
          %v1487 = vld [vmem:[#allocation4 + $0x58] sm:$0xff]
          %v1488 = vld [vmem:[#allocation4 + $0x60] sm:$0xff]
          %v1489 = vld [vmem:[#allocation4 + $0x68] sm:$0xff]
          %v1490 = vld [vmem:[#allocation4 + $0x70] sm:$0xff]
          %v1491 = vld [vmem:[#allocation4 + $0x78] sm:$0xff]
          %v1492 = vld [vmem:[#allocation4 + $0x80] sm:$0xff]
          %v1493 = vld [vmem:[#allocation4 + $0x88] sm:$0xff]
          %v1494 = vld [vmem:[#allocation4 + $0x90] sm:$0xff]
          %v1495 = vld [vmem:[#allocation4 + $0x98] sm:$0xff]
          %v1496 = vld [vmem:[#allocation4 + $0xa0] sm:$0xff]
          %v1497 = vld [vmem:[#allocation4 + $0xa8] sm:$0xff]
          %v1498 = vld [vmem:[#allocation4 + $0xb0] sm:$0xff]
          %v1499 = vld [vmem:[#allocation4 + $0xb8] sm:$0xff]
          %v1500 = vld [vmem:[#allocation4 + $0xc0] sm:$0xff]
          %v1501 = vld [vmem:[#allocation4 + $0xc8] sm:$0xff]
          %v1502 = vld [vmem:[#allocation4 + $0xd0] sm:$0xff]
          %v1503 = vld [vmem:[#allocation4 + $0xd8] sm:$0xff]
          %v1504 = vld [vmem:[#allocation4 + $0xe0] sm:$0xff]
          %v1505 = vld [vmem:[#allocation4 + $0xe8] sm:$0xff]
          %v1506 = vld [vmem:[#allocation4 + $0xf0] sm:$0xff]
          %v1507 = vld [vmem:[#allocation4 + $0xf8] sm:$0xff]
          %v1508 = vld [vmem:[#allocation4 + $0x100] sm:$0xff]
          %v1509 = vld [vmem:[#allocation4 + $0x108] sm:$0xff]
          %v1510 = vld [vmem:[#allocation4 + $0x110] sm:$0xff]
          %v1511 = vld [vmem:[#allocation4 + $0x118] sm:$0xff]
          %v1512 = vld [vmem:[#allocation4 + $0x120] sm:$0xff]
          %v1513 = vld [vmem:[#allocation4 + $0x128] sm:$0xff]
          %v1514 = vld [vmem:[#allocation4 + $0x130] sm:$0xff]
          %v1515 = vld [vmem:[#allocation4 + $0x138] sm:$0xff]
          %v1516 = vld [vmem:[#allocation4 + $0x140] sm:$0xff]
          %v1517 = vld [vmem:[#allocation4 + $0x148] sm:$0xff]
          %v1518 = vld [vmem:[#allocation4 + $0x150] sm:$0xff]
          %v1519 = vld [vmem:[#allocation4 + $0x158] sm:$0xff]
          %v1520 = vld [vmem:[#allocation4 + $0x160] sm:$0xff]
          %v1521 = vld [vmem:[#allocation4 + $0x168] sm:$0xff]
          %v1522 = vld [vmem:[#allocation4 + $0x170] sm:$0xff]
          %v1523 = vld [vmem:[#allocation4 + $0x178] sm:$0xff]
          %v1524 = vld [vmem:[#allocation4 + $0x180] sm:$0xff]
          %v1525 = vld [vmem:[#allocation4 + $0x188] sm:$0xff]
          %v1526 = vld [vmem:[#allocation4 + $0x190] sm:$0xff]
          %v1527 = vld [vmem:[#allocation4 + $0x198] sm:$0xff]
          %v1528 = vld [vmem:[#allocation4 + $0x1a0] sm:$0xff]
          %v1529 = vld [vmem:[#allocation4 + $0x1a8] sm:$0xff]
          %v1530 = vld [vmem:[#allocation4 + $0x1b0] sm:$0xff]
          %v1531 = vld [vmem:[#allocation4 + $0x1b8] sm:$0xff]
          %v1532 = vld [vmem:[#allocation4 + $0x1c0] sm:$0xff]
          %v1533 = vld [vmem:[#allocation4 + $0x1c8] sm:$0xff]
          %v1534 = vld [vmem:[#allocation4 + $0x1d0] sm:$0xff]
          %v1535 = vld [vmem:[#allocation4 + $0x1d8] sm:$0xff]
          %v1536 = vld [vmem:[#allocation4 + $0x1e0] sm:$0xff]
          %v1537 = vld [vmem:[#allocation4 + $0x1e8] sm:$0xff]
          %v1538 = vld [vmem:[#allocation4 + $0x1f0] sm:$0xff]
          %v1539 = vld [vmem:[#allocation4 + $0x1f8] sm:$0xff]
          %v1540 = vld [vmem:[#allocation4 + $0x200] sm:$0xff]
          %v1541 = vld [vmem:[#allocation4 + $0x208] sm:$0xff]
          %v1542 = vld [vmem:[#allocation4 + $0x210] sm:$0xff]
          %v1543 = vld [vmem:[#allocation4 + $0x218] sm:$0xff]
          %v1544 = vld [vmem:[#allocation4 + $0x220] sm:$0xff]
          %v1545 = vld [vmem:[#allocation4 + $0x228] sm:$0xff]
          %v1546 = vld [vmem:[#allocation4 + $0x230] sm:$0xff]
          %v1547 = vld [vmem:[#allocation4 + $0x238] sm:$0xff]
          %v1548 = vld [vmem:[#allocation4 + $0x240] sm:$0xff]
          %v1549 = vld [vmem:[#allocation4 + $0x248] sm:$0xff]
          %v1550 = vld [vmem:[#allocation4 + $0x250] sm:$0xff]
          %v1551 = vld [vmem:[#allocation4 + $0x258] sm:$0xff]
          %v1552 = vld [vmem:[#allocation4 + $0x260] sm:$0xff]
          %v1553 = vld [vmem:[#allocation4 + $0x268] sm:$0xff]
          %v1554 = vld [vmem:[#allocation4 + $0x270] sm:$0xff]
          %v1555 = vld [vmem:[#allocation4 + $0x278] sm:$0xff]
          %v1556 = vld [vmem:[#allocation4 + $0x280] sm:$0xff]
          %v1557 = vld [vmem:[#allocation4 + $0x288] sm:$0xff]
          %v1558 = vld [vmem:[#allocation4 + $0x290] sm:$0xff]
          %v1559 = vld [vmem:[#allocation4 + $0x298] sm:$0xff]
          %v1560 = vld [vmem:[#allocation4 + $0x2a0] sm:$0xff]
          %v1561 = vld [vmem:[#allocation4 + $0x2a8] sm:$0xff]
          %v1562 = vld [vmem:[#allocation4 + $0x2b0] sm:$0xff]
          %v1563 = vld [vmem:[#allocation4 + $0x2b8] sm:$0xff]
          %v1564 = vld [vmem:[#allocation4 + $0x2c0] sm:$0xff]
          %v1565 = vld [vmem:[#allocation4 + $0x2c8] sm:$0xff]
          %v1566 = vld [vmem:[#allocation4 + $0x2d0] sm:$0xff]
          %v1567 = vld [vmem:[#allocation4 + $0x2d8] sm:$0xff]
          %v1568 = vld [vmem:[#allocation4 + $0x2e0] sm:$0xff]
          %v1569 = vld [vmem:[#allocation4 + $0x2e8] sm:$0xff]
          %v1570 = vld [vmem:[#allocation4 + $0x2f0] sm:$0xff]
          %v1571 = vld [vmem:[#allocation4 + $0x2f8] sm:$0xff]
          %v1572 = vld [vmem:[#allocation4 + $0x300] sm:$0xff]
          %v1573 = vld [vmem:[#allocation4 + $0x308] sm:$0xff]
          %v1574 = vld [vmem:[#allocation4 + $0x310] sm:$0xff]
          %v1575 = vld [vmem:[#allocation4 + $0x318] sm:$0xff]
          %v1576 = vld [vmem:[#allocation4 + $0x320] sm:$0xff]
          %v1577 = vld [vmem:[#allocation4 + $0x328] sm:$0xff]
          %v1578 = vld [vmem:[#allocation4 + $0x330] sm:$0xff]
          %v1579 = vld [vmem:[#allocation4 + $0x338] sm:$0xff]
          %v1580 = vld [vmem:[#allocation4 + $0x340] sm:$0xff]
          %v1581 = vld [vmem:[#allocation4 + $0x348] sm:$0xff]
          %v1582 = vld [vmem:[#allocation4 + $0x350] sm:$0xff]
          %v1583 = vld [vmem:[#allocation4 + $0x358] sm:$0xff]
          %v1584 = vld [vmem:[#allocation4 + $0x360] sm:$0xff]
          %v1585 = vld [vmem:[#allocation4 + $0x368] sm:$0xff]
          %v1586 = vld [vmem:[#allocation4 + $0x370] sm:$0xff]
          %v1587 = vld [vmem:[#allocation4 + $0x378] sm:$0xff]
          %v1588 = vld [vmem:[#allocation4 + $0x380] sm:$0xff]
          %v1589 = vld [vmem:[#allocation4 + $0x388] sm:$0xff]
          %v1590 = vld [vmem:[#allocation4 + $0x390] sm:$0xff]
          %v1591 = vld [vmem:[#allocation4 + $0x398] sm:$0xff]
          %v1592 = vld [vmem:[#allocation4 + $0x3a0] sm:$0xff]
          %v1593 = vld [vmem:[#allocation4 + $0x3a8] sm:$0xff]
          %v1594 = vld [vmem:[#allocation4 + $0x3b0] sm:$0xff]
          %v1595 = vld [vmem:[#allocation4 + $0x3b8] sm:$0xff]
          %v1596 = vld [vmem:[#allocation4 + $0x3c0] sm:$0xff]
          %v1597 = vld [vmem:[#allocation4 + $0x3c8] sm:$0xff]
          %v1598 = vld [vmem:[#allocation4 + $0x3d0] sm:$0xff]
          %v1599 = vld [vmem:[#allocation4 + $0x3d8] sm:$0xff]
          %v1600 = vld [vmem:[#allocation4 + $0x3e0] sm:$0xff]
          %v1601 = vld [vmem:[#allocation4 + $0x3e8] sm:$0xff]
          %v1602 = vld [vmem:[#allocation4 + $0x3f0] sm:$0xff]
          %v1603 = vld [vmem:[#allocation4 + $0x3f8] sm:$0xff]
          %v1604 = vld [vmem:[#allocation4 + $0x400] sm:$0xff]
          %v1605 = vld [vmem:[#allocation4 + $0x408] sm:$0xff]
          %v1606 = vld [vmem:[#allocation4 + $0x410] sm:$0xff]
          %v1607 = vld [vmem:[#allocation4 + $0x418] sm:$0xff]
          %v1608 = vld [vmem:[#allocation4 + $0x420] sm:$0xff]
          %v1609 = vld [vmem:[#allocation4 + $0x428] sm:$0xff]
          %v1610 = vld [vmem:[#allocation4 + $0x430] sm:$0xff]
          %v1611 = vld [vmem:[#allocation4 + $0x438] sm:$0xff]
          %v1612 = vld [vmem:[#allocation4 + $0x440] sm:$0xff]
          %v1613 = vld [vmem:[#allocation4 + $0x448] sm:$0xff]
          %v1614 = vld [vmem:[#allocation4 + $0x450] sm:$0xff]
          %v1615 = vld [vmem:[#allocation4 + $0x458] sm:$0xff]
          %v1616 = vld [vmem:[#allocation4 + $0x460] sm:$0xff]
          %v1617 = vld [vmem:[#allocation4 + $0x468] sm:$0xff]
          %v1618 = vld [vmem:[#allocation4 + $0x470] sm:$0xff]
          %v1619 = vld [vmem:[#allocation4 + $0x478] sm:$0xff]
          %v1620 = vld [vmem:[#allocation4 + $0x480] sm:$0xff]
          %v1621 = vld [vmem:[#allocation4 + $0x488] sm:$0xff]
          %v1622 = vld [vmem:[#allocation4 + $0x490] sm:$0xff]
          %v1623 = vld [vmem:[#allocation4 + $0x498] sm:$0xff]
          %v1624 = vld [vmem:[#allocation4 + $0x4a0] sm:$0xff]
          %v1625 = vld [vmem:[#allocation4 + $0x4a8] sm:$0xff]
          %v1626 = vld [vmem:[#allocation4 + $0x4b0] sm:$0xff]
          %v1627 = vld [vmem:[#allocation4 + $0x4b8] sm:$0xff]
          %v1628 = vld [vmem:[#allocation4 + $0x4c0] sm:$0xff]
          %v1629 = vld [vmem:[#allocation4 + $0x4c8] sm:$0xff]
          %v1630 = vld [vmem:[#allocation4 + $0x4d0] sm:$0xff]
          %v1631 = vld [vmem:[#allocation4 + $0x4d8] sm:$0xff]
          %v1632 = vld [vmem:[#allocation4 + $0x4e0] sm:$0xff]
          %v1633 = vld [vmem:[#allocation4 + $0x4e8] sm:$0xff]
          %v1634 = vld [vmem:[#allocation4 + $0x4f0] sm:$0xff]
          %v1635 = vld [vmem:[#allocation4 + $0x4f8] sm:$0xff]
          %v1636 = vld [vmem:[#allocation4 + $0x500] sm:$0xff]
          %v1637 = vld [vmem:[#allocation4 + $0x508] sm:$0xff]
          %v1638 = vld [vmem:[#allocation4 + $0x510] sm:$0xff]
          %v1639 = vld [vmem:[#allocation4 + $0x518] sm:$0xff]
          %v1640 = vld [vmem:[#allocation4 + $0x520] sm:$0xff]
          %v1641 = vld [vmem:[#allocation4 + $0x528] sm:$0xff]
          %v1642 = vld [vmem:[#allocation4 + $0x530] sm:$0xff]
          %v1643 = vld [vmem:[#allocation4 + $0x538] sm:$0xff]
          %v1644 = vld [vmem:[#allocation4 + $0x540] sm:$0xff]
          %v1645 = vld [vmem:[#allocation4 + $0x548] sm:$0xff]
          %v1646 = vld [vmem:[#allocation4 + $0x550] sm:$0xff]
          %v1647 = vld [vmem:[#allocation4 + $0x558] sm:$0xff]
          %v1648 = vld [vmem:[#allocation4 + $0x560] sm:$0xff]
          %v1649 = vld [vmem:[#allocation4 + $0x568] sm:$0xff]
          %v1650 = vld [vmem:[#allocation4 + $0x570] sm:$0xff]
          %v1651 = vld [vmem:[#allocation4 + $0x578] sm:$0xff]
          %v1652 = vld [vmem:[#allocation4 + $0x580] sm:$0xff]
          %v1653 = vld [vmem:[#allocation4 + $0x588] sm:$0xff]
          %v1654 = vld [vmem:[#allocation4 + $0x590] sm:$0xff]
          %v1655 = vld [vmem:[#allocation4 + $0x598] sm:$0xff]
          %v1656 = vld [vmem:[#allocation4 + $0x5a0] sm:$0xff]
          %v1657 = vld [vmem:[#allocation4 + $0x5a8] sm:$0xff]
          %v1658 = vld [vmem:[#allocation4 + $0x5b0] sm:$0xff]
          %v1659 = vld [vmem:[#allocation4 + $0x5b8] sm:$0xff]
          %v1660 = vld [vmem:[#allocation4 + $0x5c0] sm:$0xff]
          %v1661 = vld [vmem:[#allocation4 + $0x5c8] sm:$0xff]
          %v1662 = vld [vmem:[#allocation4 + $0x5d0] sm:$0xff]
          %v1663 = vld [vmem:[#allocation4 + $0x5d8] sm:$0xff]
          %v1664 = vld [vmem:[#allocation4 + $0x5e0] sm:$0xff]
          %v1665 = vld [vmem:[#allocation4 + $0x5e8] sm:$0xff]
          %v1666 = vld [vmem:[#allocation4 + $0x5f0] sm:$0xff]
          %v1667 = vld [vmem:[#allocation4 + $0x5f8] sm:$0xff]
          %v1668 = vld [vmem:[#allocation4 + $0x600] sm:$0xff]
          %v1669 = vld [vmem:[#allocation4 + $0x608] sm:$0xff]
          %v1670 = vld [vmem:[#allocation4 + $0x610] sm:$0xff]
          %v1671 = vld [vmem:[#allocation4 + $0x618] sm:$0xff]
          %v1672 = vld [vmem:[#allocation4 + $0x620] sm:$0xff]
          %v1673 = vld [vmem:[#allocation4 + $0x628] sm:$0xff]
          %v1674 = vld [vmem:[#allocation4 + $0x630] sm:$0xff]
          %v1675 = vld [vmem:[#allocation4 + $0x638] sm:$0xff]
          %v1676 = vld [vmem:[#allocation4 + $0x640] sm:$0xff]
          %v1677 = vld [vmem:[#allocation4 + $0x648] sm:$0xff]
          %v1678 = vld [vmem:[#allocation4 + $0x650] sm:$0xff]
          %v1679 = vld [vmem:[#allocation4 + $0x658] sm:$0xff]
          %v1680 = vld [vmem:[#allocation4 + $0x660] sm:$0xff]
          %v1681 = vld [vmem:[#allocation4 + $0x668] sm:$0xff]
          %v1682 = vld [vmem:[#allocation4 + $0x670] sm:$0xff]
          %v1683 = vld [vmem:[#allocation4 + $0x678] sm:$0xff]
          %v1684 = vld [vmem:[#allocation4 + $0x680] sm:$0xff]
          %v1685 = vld [vmem:[#allocation4 + $0x688] sm:$0xff]
          %v1686 = vld [vmem:[#allocation4 + $0x690] sm:$0xff]
          %v1687 = vld [vmem:[#allocation4 + $0x698] sm:$0xff]
          %v1688 = vld [vmem:[#allocation4 + $0x6a0] sm:$0xff]
          %v1689 = vld [vmem:[#allocation4 + $0x6a8] sm:$0xff]
          %v1690 = vld [vmem:[#allocation4 + $0x6b0] sm:$0xff]
          %v1691 = vld [vmem:[#allocation4 + $0x6b8] sm:$0xff]
          %v1692 = vld [vmem:[#allocation4 + $0x6c0] sm:$0xff]
          %v1693 = vld [vmem:[#allocation4 + $0x6c8] sm:$0xff]
          %v1694 = vld [vmem:[#allocation4 + $0x6d0] sm:$0xff]
          %v1695 = vld [vmem:[#allocation4 + $0x6d8] sm:$0xff]
          %v1696 = vld [vmem:[#allocation4 + $0x6e0] sm:$0xff]
          %v1697 = vld [vmem:[#allocation4 + $0x6e8] sm:$0xff]
          %v1698 = vld [vmem:[#allocation4 + $0x6f0] sm:$0xff]
          %v1699 = vld [vmem:[#allocation4 + $0x6f8] sm:$0xff]
          %v1700 = vld [vmem:[#allocation4 + $0x700] sm:$0xff]
          %v1701 = vld [vmem:[#allocation4 + $0x708] sm:$0xff]
          %v1702 = vld [vmem:[#allocation4 + $0x710] sm:$0xff]
          %v1703 = vld [vmem:[#allocation4 + $0x718] sm:$0xff]
          %v1704 = vld [vmem:[#allocation4 + $0x720] sm:$0xff]
          %v1705 = vld [vmem:[#allocation4 + $0x728] sm:$0xff]
          %v1706 = vld [vmem:[#allocation4 + $0x730] sm:$0xff]
          %v1707 = vld [vmem:[#allocation4 + $0x738] sm:$0xff]
          %v1708 = vld [vmem:[#allocation4 + $0x740] sm:$0xff]
          %v1709 = vld [vmem:[#allocation4 + $0x748] sm:$0xff]
          %v1710 = vld [vmem:[#allocation4 + $0x750] sm:$0xff]
          %v1711 = vld [vmem:[#allocation4 + $0x758] sm:$0xff]
          %v1712 = vld [vmem:[#allocation4 + $0x760] sm:$0xff]
          %v1713 = vld [vmem:[#allocation4 + $0x768] sm:$0xff]
          %v1714 = vld [vmem:[#allocation4 + $0x770] sm:$0xff]
          %v1715 = vld [vmem:[#allocation4 + $0x778] sm:$0xff]
          %v1716 = vld [vmem:[#allocation4 + $0x780] sm:$0xff]
          %v1717 = vld [vmem:[#allocation4 + $0x788] sm:$0xff]
          %v1718 = vld [vmem:[#allocation4 + $0x790] sm:$0xff]
          %v1719 = vld [vmem:[#allocation4 + $0x798] sm:$0xff]
          %v1720 = vld [vmem:[#allocation4 + $0x7a0] sm:$0xff]
          %v1721 = vld [vmem:[#allocation4 + $0x7a8] sm:$0xff]
          %v1722 = vld [vmem:[#allocation4 + $0x7b0] sm:$0xff]
          %v1723 = vld [vmem:[#allocation4 + $0x7b8] sm:$0xff]
          %v1724 = vld [vmem:[#allocation4 + $0x7c0] sm:$0xff]
          %v1725 = vld [vmem:[#allocation4 + $0x7c8] sm:$0xff]
          %v1726 = vld [vmem:[#allocation4 + $0x7d0] sm:$0xff]
          %v1727 = vld [vmem:[#allocation4 + $0x7d8] sm:$0xff]
          %v1728 = vld [vmem:[#allocation4 + $0x7e0] sm:$0xff]
          %v1729 = vld [vmem:[#allocation4 + $0x7e8] sm:$0xff]
          %v1730 = vld [vmem:[#allocation4 + $0x7f0] sm:$0xff]
          %v1731 = vld [vmem:[#allocation4 + $0x7f8] sm:$0xff]
          %v1732 = vld [vmem:[%s5] sm:$0x3]
          %v1734 = vlaneseq
          %v1735 = vshrl.u32 %v1734, 7
          %v1736 = vsub.s32 0, %v1735
          %v1737 = vrot.slane %v1732, %v1736
          %v1738 = vlaneseq
          %v1739 = vshrl.u32 %v1738, 7
          %v1740 = vsub.s32 1, %v1739
          %v1741 = vrot.slane %v1732, %v1740
          %v2000 = vunpack.c.l.b16 %v1476
          %v2001 = vunpack.c.h.b16 %v1476
          %v2002 = vunpack.c.l.b16 %v1477
          %v2003 = vunpack.c.h.b16 %v1477
          %v2004 = vunpack.c.l.b16 %v1478
          %v2005 = vunpack.c.h.b16 %v1478
          %v2006 = vunpack.c.l.b16 %v1479
          %v2007 = vunpack.c.h.b16 %v1479
          %v2008 = vunpack.c.l.b16 %v1480
          %v2009 = vunpack.c.h.b16 %v1480
          %v2010 = vunpack.c.l.b16 %v1481
          %v2011 = vunpack.c.h.b16 %v1481
          %v2012 = vunpack.c.l.b16 %v1482
          %v2013 = vunpack.c.h.b16 %v1482
          %v2014 = vunpack.c.l.b16 %v1483
          %v2015 = vunpack.c.h.b16 %v1483
          %v2016 = vunpack.c.l.b16 %v1484
          %v2017 = vunpack.c.h.b16 %v1484
          %v2018 = vunpack.c.l.b16 %v1485
          %v2019 = vunpack.c.h.b16 %v1485
          %v2020 = vunpack.c.l.b16 %v1486
          %v2021 = vunpack.c.h.b16 %v1486
          %v2022 = vunpack.c.l.b16 %v1487
          %v2023 = vunpack.c.h.b16 %v1487
          %v2024 = vunpack.c.l.b16 %v1488
          %v2025 = vunpack.c.h.b16 %v1488
          %v2026 = vunpack.c.l.b16 %v1489
          %v2027 = vunpack.c.h.b16 %v1489
          %v2028 = vunpack.c.l.b16 %v1490
          %v2029 = vunpack.c.h.b16 %v1490
          %v2030 = vunpack.c.l.b16 %v1491
          %v2031 = vunpack.c.h.b16 %v1491
          %v2032 = vunpack.c.l.b16 %v1492
          %v2033 = vunpack.c.h.b16 %v1492
          %v2034 = vunpack.c.l.b16 %v1493
          %v2035 = vunpack.c.h.b16 %v1493
          %v2036 = vunpack.c.l.b16 %v1494
          %v2037 = vunpack.c.h.b16 %v1494
          %v2038 = vunpack.c.l.b16 %v1495
          %v2039 = vunpack.c.h.b16 %v1495
          %v2040 = vunpack.c.l.b16 %v1496
          %v2041 = vunpack.c.h.b16 %v1496
          %v2042 = vunpack.c.l.b16 %v1497
          %v2043 = vunpack.c.h.b16 %v1497
          %v2044 = vunpack.c.l.b16 %v1498
          %v2045 = vunpack.c.h.b16 %v1498
          %v2046 = vunpack.c.l.b16 %v1499
          %v2047 = vunpack.c.h.b16 %v1499
          %v2048 = vunpack.c.l.b16 %v1500
          %v2049 = vunpack.c.h.b16 %v1500
          %v2050 = vunpack.c.l.b16 %v1501
          %v2051 = vunpack.c.h.b16 %v1501
          %v2052 = vunpack.c.l.b16 %v1502
          %v2053 = vunpack.c.h.b16 %v1502
          %v2054 = vunpack.c.l.b16 %v1503
          %v2055 = vunpack.c.h.b16 %v1503
          %v2056 = vunpack.c.l.b16 %v1504
          %v2057 = vunpack.c.h.b16 %v1504
          %v2058 = vunpack.c.l.b16 %v1505
          %v2059 = vunpack.c.h.b16 %v1505
          %v2060 = vunpack.c.l.b16 %v1506
          %v2061 = vunpack.c.h.b16 %v1506
          %v2062 = vunpack.c.l.b16 %v1507
          %v2063 = vunpack.c.h.b16 %v1507
          %v2064 = vunpack.c.l.b16 %v1508
          %v2065 = vunpack.c.h.b16 %v1508
          %v2066 = vunpack.c.l.b16 %v1509
          %v2067 = vunpack.c.h.b16 %v1509
          %v2068 = vunpack.c.l.b16 %v1510
          %v2069 = vunpack.c.h.b16 %v1510
          %v2070 = vunpack.c.l.b16 %v1511
          %v2071 = vunpack.c.h.b16 %v1511
          %v2072 = vunpack.c.l.b16 %v1512
          %v2073 = vunpack.c.h.b16 %v1512
          %v2074 = vunpack.c.l.b16 %v1513
          %v2075 = vunpack.c.h.b16 %v1513
          %v2076 = vunpack.c.l.b16 %v1514
          %v2077 = vunpack.c.h.b16 %v1514
          %v2078 = vunpack.c.l.b16 %v1515
          %v2079 = vunpack.c.h.b16 %v1515
          %v2080 = vunpack.c.l.b16 %v1516
          %v2081 = vunpack.c.h.b16 %v1516
          %v2082 = vunpack.c.l.b16 %v1517
          %v2083 = vunpack.c.h.b16 %v1517
          %v2084 = vunpack.c.l.b16 %v1518
          %v2085 = vunpack.c.h.b16 %v1518
          %v2086 = vunpack.c.l.b16 %v1519
          %v2087 = vunpack.c.h.b16 %v1519
          %v2088 = vunpack.c.l.b16 %v1520
          %v2089 = vunpack.c.h.b16 %v1520
          %v2090 = vunpack.c.l.b16 %v1521
          %v2091 = vunpack.c.h.b16 %v1521
          %v2092 = vunpack.c.l.b16 %v1522
          %v2093 = vunpack.c.h.b16 %v1522
          %v2094 = vunpack.c.l.b16 %v1523
          %v2095 = vunpack.c.h.b16 %v1523
          %v2096 = vunpack.c.l.b16 %v1524
          %v2097 = vunpack.c.h.b16 %v1524
          %v2098 = vunpack.c.l.b16 %v1525
          %v2099 = vunpack.c.h.b16 %v1525
          %v2100 = vunpack.c.l.b16 %v1526
          %v2101 = vunpack.c.h.b16 %v1526
          %v2102 = vunpack.c.l.b16 %v1527
          %v2103 = vunpack.c.h.b16 %v1527
          %v2104 = vunpack.c.l.b16 %v1528
          %v2105 = vunpack.c.h.b16 %v1528
          %v2106 = vunpack.c.l.b16 %v1529
          %v2107 = vunpack.c.h.b16 %v1529
          %v2108 = vunpack.c.l.b16 %v1530
          %v2109 = vunpack.c.h.b16 %v1530
          %v2110 = vunpack.c.l.b16 %v1531
          %v2111 = vunpack.c.h.b16 %v1531
          %v2112 = vunpack.c.l.b16 %v1532
          %v2113 = vunpack.c.h.b16 %v1532
          %v2114 = vunpack.c.l.b16 %v1533
          %v2115 = vunpack.c.h.b16 %v1533
          %v2116 = vunpack.c.l.b16 %v1534
          %v2117 = vunpack.c.h.b16 %v1534
          %v2118 = vunpack.c.l.b16 %v1535
          %v2119 = vunpack.c.h.b16 %v1535
          %v2120 = vunpack.c.l.b16 %v1536
          %v2121 = vunpack.c.h.b16 %v1536
          %v2122 = vunpack.c.l.b16 %v1537
          %v2123 = vunpack.c.h.b16 %v1537
          %v2124 = vunpack.c.l.b16 %v1538
          %v2125 = vunpack.c.h.b16 %v1538
          %v2126 = vunpack.c.l.b16 %v1539
          %v2127 = vunpack.c.h.b16 %v1539
          %v2128 = vunpack.c.l.b16 %v1540
          %v2129 = vunpack.c.h.b16 %v1540
          %v2130 = vunpack.c.l.b16 %v1541
          %v2131 = vunpack.c.h.b16 %v1541
          %v2132 = vunpack.c.l.b16 %v1542
          %v2133 = vunpack.c.h.b16 %v1542
          %v2134 = vunpack.c.l.b16 %v1543
          %v2135 = vunpack.c.h.b16 %v1543
          %v2136 = vunpack.c.l.b16 %v1544
          %v2137 = vunpack.c.h.b16 %v1544
          %v2138 = vunpack.c.l.b16 %v1545
          %v2139 = vunpack.c.h.b16 %v1545
          %v2140 = vunpack.c.l.b16 %v1546
          %v2141 = vunpack.c.h.b16 %v1546
          %v2142 = vunpack.c.l.b16 %v1547
          %v2143 = vunpack.c.h.b16 %v1547
          %v2144 = vunpack.c.l.b16 %v1548
          %v2145 = vunpack.c.h.b16 %v1548
          %v2146 = vunpack.c.l.b16 %v1549
          %v2147 = vunpack.c.h.b16 %v1549
          %v2148 = vunpack.c.l.b16 %v1550
          %v2149 = vunpack.c.h.b16 %v1550
          %v2150 = vunpack.c.l.b16 %v1551
          %v2151 = vunpack.c.h.b16 %v1551
          %v2152 = vunpack.c.l.b16 %v1552
          %v2153 = vunpack.c.h.b16 %v1552
          %v2154 = vunpack.c.l.b16 %v1553
          %v2155 = vunpack.c.h.b16 %v1553
          %v2156 = vunpack.c.l.b16 %v1554
          %v2157 = vunpack.c.h.b16 %v1554
          %v2158 = vunpack.c.l.b16 %v1555
          %v2159 = vunpack.c.h.b16 %v1555
          %v2160 = vunpack.c.l.b16 %v1556
          %v2161 = vunpack.c.h.b16 %v1556
          %v2162 = vunpack.c.l.b16 %v1557
          %v2163 = vunpack.c.h.b16 %v1557
          %v2164 = vunpack.c.l.b16 %v1558
          %v2165 = vunpack.c.h.b16 %v1558
          %v2166 = vunpack.c.l.b16 %v1559
          %v2167 = vunpack.c.h.b16 %v1559
          %v2168 = vunpack.c.l.b16 %v1560
          %v2169 = vunpack.c.h.b16 %v1560
          %v2170 = vunpack.c.l.b16 %v1561
          %v2171 = vunpack.c.h.b16 %v1561
          %v2172 = vunpack.c.l.b16 %v1562
          %v2173 = vunpack.c.h.b16 %v1562
          %v2174 = vunpack.c.l.b16 %v1563
          %v2175 = vunpack.c.h.b16 %v1563
          %v2176 = vunpack.c.l.b16 %v1564
          %v2177 = vunpack.c.h.b16 %v1564
          %v2178 = vunpack.c.l.b16 %v1565
          %v2179 = vunpack.c.h.b16 %v1565
          %v2180 = vunpack.c.l.b16 %v1566
          %v2181 = vunpack.c.h.b16 %v1566
          %v2182 = vunpack.c.l.b16 %v1567
          %v2183 = vunpack.c.h.b16 %v1567
          %v2184 = vunpack.c.l.b16 %v1568
          %v2185 = vunpack.c.h.b16 %v1568
          %v2186 = vunpack.c.l.b16 %v1569
          %v2187 = vunpack.c.h.b16 %v1569
          %v2188 = vunpack.c.l.b16 %v1570
          %v2189 = vunpack.c.h.b16 %v1570
          %v2190 = vunpack.c.l.b16 %v1571
          %v2191 = vunpack.c.h.b16 %v1571
          %v2192 = vunpack.c.l.b16 %v1572
          %v2193 = vunpack.c.h.b16 %v1572
          %v2194 = vunpack.c.l.b16 %v1573
          %v2195 = vunpack.c.h.b16 %v1573
          %v2196 = vunpack.c.l.b16 %v1574
          %v2197 = vunpack.c.h.b16 %v1574
          %v2198 = vunpack.c.l.b16 %v1575
          %v2199 = vunpack.c.h.b16 %v1575
          %v2200 = vunpack.c.l.b16 %v1576
          %v2201 = vunpack.c.h.b16 %v1576
          %v2202 = vunpack.c.l.b16 %v1577
          %v2203 = vunpack.c.h.b16 %v1577
          %v2204 = vunpack.c.l.b16 %v1578
          %v2205 = vunpack.c.h.b16 %v1578
          %v2206 = vunpack.c.l.b16 %v1579
          %v2207 = vunpack.c.h.b16 %v1579
          %v2208 = vunpack.c.l.b16 %v1580
          %v2209 = vunpack.c.h.b16 %v1580
          %v2210 = vunpack.c.l.b16 %v1581
          %v2211 = vunpack.c.h.b16 %v1581
          %v2212 = vunpack.c.l.b16 %v1582
          %v2213 = vunpack.c.h.b16 %v1582
          %v2214 = vunpack.c.l.b16 %v1583
          %v2215 = vunpack.c.h.b16 %v1583
          %v2216 = vunpack.c.l.b16 %v1584
          %v2217 = vunpack.c.h.b16 %v1584
          %v2218 = vunpack.c.l.b16 %v1585
          %v2219 = vunpack.c.h.b16 %v1585
          %v2220 = vunpack.c.l.b16 %v1586
          %v2221 = vunpack.c.h.b16 %v1586
          %v2222 = vunpack.c.l.b16 %v1587
          %v2223 = vunpack.c.h.b16 %v1587
          %v2224 = vunpack.c.l.b16 %v1588
          %v2225 = vunpack.c.h.b16 %v1588
          %v2226 = vunpack.c.l.b16 %v1589
          %v2227 = vunpack.c.h.b16 %v1589
          %v2228 = vunpack.c.l.b16 %v1590
          %v2229 = vunpack.c.h.b16 %v1590
          %v2230 = vunpack.c.l.b16 %v1591
          %v2231 = vunpack.c.h.b16 %v1591
          %v2232 = vunpack.c.l.b16 %v1592
          %v2233 = vunpack.c.h.b16 %v1592
          %v2234 = vunpack.c.l.b16 %v1593
          %v2235 = vunpack.c.h.b16 %v1593
          %v2236 = vunpack.c.l.b16 %v1594
          %v2237 = vunpack.c.h.b16 %v1594
          %v2238 = vunpack.c.l.b16 %v1595
          %v2239 = vunpack.c.h.b16 %v1595
          %v2240 = vunpack.c.l.b16 %v1596
          %v2241 = vunpack.c.h.b16 %v1596
          %v2242 = vunpack.c.l.b16 %v1597
          %v2243 = vunpack.c.h.b16 %v1597
          %v2244 = vunpack.c.l.b16 %v1598
          %v2245 = vunpack.c.h.b16 %v1598
          %v2246 = vunpack.c.l.b16 %v1599
          %v2247 = vunpack.c.h.b16 %v1599
          %v2248 = vunpack.c.l.b16 %v1600
          %v2249 = vunpack.c.h.b16 %v1600
          %v2250 = vunpack.c.l.b16 %v1601
          %v2251 = vunpack.c.h.b16 %v1601
          %v2252 = vunpack.c.l.b16 %v1602
          %v2253 = vunpack.c.h.b16 %v1602
          %v2254 = vunpack.c.l.b16 %v1603
          %v2255 = vunpack.c.h.b16 %v1603
          %v2256 = vunpack.c.l.b16 %v1604
          %v2257 = vunpack.c.h.b16 %v1604
          %v2258 = vunpack.c.l.b16 %v1605
          %v2259 = vunpack.c.h.b16 %v1605
          %v2260 = vunpack.c.l.b16 %v1606
          %v2261 = vunpack.c.h.b16 %v1606
          %v2262 = vunpack.c.l.b16 %v1607
          %v2263 = vunpack.c.h.b16 %v1607
          %v2264 = vunpack.c.l.b16 %v1608
          %v2265 = vunpack.c.h.b16 %v1608
          %v2266 = vunpack.c.l.b16 %v1609
          %v2267 = vunpack.c.h.b16 %v1609
          %v2268 = vunpack.c.l.b16 %v1610
          %v2269 = vunpack.c.h.b16 %v1610
          %v2270 = vunpack.c.l.b16 %v1611
          %v2271 = vunpack.c.h.b16 %v1611
          %v2272 = vunpack.c.l.b16 %v1612
          %v2273 = vunpack.c.h.b16 %v1612
          %v2274 = vunpack.c.l.b16 %v1613
          %v2275 = vunpack.c.h.b16 %v1613
          %v2276 = vunpack.c.l.b16 %v1614
          %v2277 = vunpack.c.h.b16 %v1614
          %v2278 = vunpack.c.l.b16 %v1615
          %v2279 = vunpack.c.h.b16 %v1615
          %v2280 = vunpack.c.l.b16 %v1616
          %v2281 = vunpack.c.h.b16 %v1616
          %v2282 = vunpack.c.l.b16 %v1617
          %v2283 = vunpack.c.h.b16 %v1617
          %v2284 = vunpack.c.l.b16 %v1618
          %v2285 = vunpack.c.h.b16 %v1618
          %v2286 = vunpack.c.l.b16 %v1619
          %v2287 = vunpack.c.h.b16 %v1619
          %v2288 = vunpack.c.l.b16 %v1620
          %v2289 = vunpack.c.h.b16 %v1620
          %v2290 = vunpack.c.l.b16 %v1621
          %v2291 = vunpack.c.h.b16 %v1621
          %v2292 = vunpack.c.l.b16 %v1622
          %v2293 = vunpack.c.h.b16 %v1622
          %v2294 = vunpack.c.l.b16 %v1623
          %v2295 = vunpack.c.h.b16 %v1623
          %v2296 = vunpack.c.l.b16 %v1624
          %v2297 = vunpack.c.h.b16 %v1624
          %v2298 = vunpack.c.l.b16 %v1625
          %v2299 = vunpack.c.h.b16 %v1625
          %v2300 = vunpack.c.l.b16 %v1626
          %v2301 = vunpack.c.h.b16 %v1626
          %v2302 = vunpack.c.l.b16 %v1627
          %v2303 = vunpack.c.h.b16 %v1627
          %v2304 = vunpack.c.l.b16 %v1628
          %v2305 = vunpack.c.h.b16 %v1628
          %v2306 = vunpack.c.l.b16 %v1629
          %v2307 = vunpack.c.h.b16 %v1629
          %v2308 = vunpack.c.l.b16 %v1630
          %v2309 = vunpack.c.h.b16 %v1630
          %v2310 = vunpack.c.l.b16 %v1631
          %v2311 = vunpack.c.h.b16 %v1631
          %v2312 = vunpack.c.l.b16 %v1632
          %v2313 = vunpack.c.h.b16 %v1632
          %v2314 = vunpack.c.l.b16 %v1633
          %v2315 = vunpack.c.h.b16 %v1633
          %v2316 = vunpack.c.l.b16 %v1634
          %v2317 = vunpack.c.h.b16 %v1634
          %v2318 = vunpack.c.l.b16 %v1635
          %v2319 = vunpack.c.h.b16 %v1635
          %v2320 = vunpack.c.l.b16 %v1636
          %v2321 = vunpack.c.h.b16 %v1636
          %v2322 = vunpack.c.l.b16 %v1637
          %v2323 = vunpack.c.h.b16 %v1637
          %v2324 = vunpack.c.l.b16 %v1638
          %v2325 = vunpack.c.h.b16 %v1638
          %v2326 = vunpack.c.l.b16 %v1639
          %v2327 = vunpack.c.h.b16 %v1639
          %v2328 = vunpack.c.l.b16 %v1640
          %v2329 = vunpack.c.h.b16 %v1640
          %v2330 = vunpack.c.l.b16 %v1641
          %v2331 = vunpack.c.h.b16 %v1641
          %v2332 = vunpack.c.l.b16 %v1642
          %v2333 = vunpack.c.h.b16 %v1642
          %v2334 = vunpack.c.l.b16 %v1643
          %v2335 = vunpack.c.h.b16 %v1643
          %v2336 = vunpack.c.l.b16 %v1644
          %v2337 = vunpack.c.h.b16 %v1644
          %v2338 = vunpack.c.l.b16 %v1645
          %v2339 = vunpack.c.h.b16 %v1645
          %v2340 = vunpack.c.l.b16 %v1646
          %v2341 = vunpack.c.h.b16 %v1646
          %v2342 = vunpack.c.l.b16 %v1647
          %v2343 = vunpack.c.h.b16 %v1647
          %v2344 = vunpack.c.l.b16 %v1648
          %v2345 = vunpack.c.h.b16 %v1648
          %v2346 = vunpack.c.l.b16 %v1649
          %v2347 = vunpack.c.h.b16 %v1649
          %v2348 = vunpack.c.l.b16 %v1650
          %v2349 = vunpack.c.h.b16 %v1650
          %v2350 = vunpack.c.l.b16 %v1651
          %v2351 = vunpack.c.h.b16 %v1651
          %v2352 = vunpack.c.l.b16 %v1652
          %v2353 = vunpack.c.h.b16 %v1652
          %v2354 = vunpack.c.l.b16 %v1653
          %v2355 = vunpack.c.h.b16 %v1653
          %v2356 = vunpack.c.l.b16 %v1654
          %v2357 = vunpack.c.h.b16 %v1654
          %v2358 = vunpack.c.l.b16 %v1655
          %v2359 = vunpack.c.h.b16 %v1655
          %v2360 = vunpack.c.l.b16 %v1656
          %v2361 = vunpack.c.h.b16 %v1656
          %v2362 = vunpack.c.l.b16 %v1657
          %v2363 = vunpack.c.h.b16 %v1657
          %v2364 = vunpack.c.l.b16 %v1658
          %v2365 = vunpack.c.h.b16 %v1658
          %v2366 = vunpack.c.l.b16 %v1659
          %v2367 = vunpack.c.h.b16 %v1659
          %v2368 = vunpack.c.l.b16 %v1660
          %v2369 = vunpack.c.h.b16 %v1660
          %v2370 = vunpack.c.l.b16 %v1661
          %v2371 = vunpack.c.h.b16 %v1661
          %v2372 = vunpack.c.l.b16 %v1662
          %v2373 = vunpack.c.h.b16 %v1662
          %v2374 = vunpack.c.l.b16 %v1663
          %v2375 = vunpack.c.h.b16 %v1663
          %v2376 = vunpack.c.l.b16 %v1664
          %v2377 = vunpack.c.h.b16 %v1664
          %v2378 = vunpack.c.l.b16 %v1665
          %v2379 = vunpack.c.h.b16 %v1665
          %v2380 = vunpack.c.l.b16 %v1666
          %v2381 = vunpack.c.h.b16 %v1666
          %v2382 = vunpack.c.l.b16 %v1667
          %v2383 = vunpack.c.h.b16 %v1667
          %v2384 = vunpack.c.l.b16 %v1668
          %v2385 = vunpack.c.h.b16 %v1668
          %v2386 = vunpack.c.l.b16 %v1669
          %v2387 = vunpack.c.h.b16 %v1669
          %v2388 = vunpack.c.l.b16 %v1670
          %v2389 = vunpack.c.h.b16 %v1670
          %v2390 = vunpack.c.l.b16 %v1671
          %v2391 = vunpack.c.h.b16 %v1671
          %v2392 = vunpack.c.l.b16 %v1672
          %v2393 = vunpack.c.h.b16 %v1672
          %v2394 = vunpack.c.l.b16 %v1673
          %v2395 = vunpack.c.h.b16 %v1673
          %v2396 = vunpack.c.l.b16 %v1674
          %v2397 = vunpack.c.h.b16 %v1674
          %v2398 = vunpack.c.l.b16 %v1675
          %v2399 = vunpack.c.h.b16 %v1675
          %v2400 = vunpack.c.l.b16 %v1676
          %v2401 = vunpack.c.h.b16 %v1676
          %v2402 = vunpack.c.l.b16 %v1677
          %v2403 = vunpack.c.h.b16 %v1677
          %v2404 = vunpack.c.l.b16 %v1678
          %v2405 = vunpack.c.h.b16 %v1678
          %v2406 = vunpack.c.l.b16 %v1679
          %v2407 = vunpack.c.h.b16 %v1679
          %v2408 = vunpack.c.l.b16 %v1680
          %v2409 = vunpack.c.h.b16 %v1680
          %v2410 = vunpack.c.l.b16 %v1681
          %v2411 = vunpack.c.h.b16 %v1681
          %v2412 = vunpack.c.l.b16 %v1682
          %v2413 = vunpack.c.h.b16 %v1682
          %v2414 = vunpack.c.l.b16 %v1683
          %v2415 = vunpack.c.h.b16 %v1683
          %v2416 = vunpack.c.l.b16 %v1684
          %v2417 = vunpack.c.h.b16 %v1684
          %v2418 = vunpack.c.l.b16 %v1685
          %v2419 = vunpack.c.h.b16 %v1685
          %v2420 = vunpack.c.l.b16 %v1686
          %v2421 = vunpack.c.h.b16 %v1686
          %v2422 = vunpack.c.l.b16 %v1687
          %v2423 = vunpack.c.h.b16 %v1687
          %v2424 = vunpack.c.l.b16 %v1688
          %v2425 = vunpack.c.h.b16 %v1688
          %v2426 = vunpack.c.l.b16 %v1689
          %v2427 = vunpack.c.h.b16 %v1689
          %v2428 = vunpack.c.l.b16 %v1690
          %v2429 = vunpack.c.h.b16 %v1690
          %v2430 = vunpack.c.l.b16 %v1691
          %v2431 = vunpack.c.h.b16 %v1691
          %v2432 = vunpack.c.l.b16 %v1692
          %v2433 = vunpack.c.h.b16 %v1692
          %v2434 = vunpack.c.l.b16 %v1693
          %v2435 = vunpack.c.h.b16 %v1693
          %v2436 = vunpack.c.l.b16 %v1694
          %v2437 = vunpack.c.h.b16 %v1694
          %v2438 = vunpack.c.l.b16 %v1695
          %v2439 = vunpack.c.h.b16 %v1695
          %v2440 = vunpack.c.l.b16 %v1696
          %v2441 = vunpack.c.h.b16 %v1696
          %v2442 = vunpack.c.l.b16 %v1697
          %v2443 = vunpack.c.h.b16 %v1697
          %v2444 = vunpack.c.l.b16 %v1698
          %v2445 = vunpack.c.h.b16 %v1698
          %v2446 = vunpack.c.l.b16 %v1699
          %v2447 = vunpack.c.h.b16 %v1699
          %v2448 = vunpack.c.l.b16 %v1700
          %v2449 = vunpack.c.h.b16 %v1700
          %v2450 = vunpack.c.l.b16 %v1701
          %v2451 = vunpack.c.h.b16 %v1701
          %v2452 = vunpack.c.l.b16 %v1702
          %v2453 = vunpack.c.h.b16 %v1702
          %v2454 = vunpack.c.l.b16 %v1703
          %v2455 = vunpack.c.h.b16 %v1703
          %v2456 = vunpack.c.l.b16 %v1704
          %v2457 = vunpack.c.h.b16 %v1704
          %v2458 = vunpack.c.l.b16 %v1705
          %v2459 = vunpack.c.h.b16 %v1705
          %v2460 = vunpack.c.l.b16 %v1706
          %v2461 = vunpack.c.h.b16 %v1706
          %v2462 = vunpack.c.l.b16 %v1707
          %v2463 = vunpack.c.h.b16 %v1707
          %v2464 = vunpack.c.l.b16 %v1708
          %v2465 = vunpack.c.h.b16 %v1708
          %v2466 = vunpack.c.l.b16 %v1709
          %v2467 = vunpack.c.h.b16 %v1709
          %v2468 = vunpack.c.l.b16 %v1710
          %v2469 = vunpack.c.h.b16 %v1710
          %v2470 = vunpack.c.l.b16 %v1711
          %v2471 = vunpack.c.h.b16 %v1711
          %v2472 = vunpack.c.l.b16 %v1712
          %v2473 = vunpack.c.h.b16 %v1712
          %v2474 = vunpack.c.l.b16 %v1713
          %v2475 = vunpack.c.h.b16 %v1713
          %v2476 = vunpack.c.l.b16 %v1714
          %v2477 = vunpack.c.h.b16 %v1714
          %v2478 = vunpack.c.l.b16 %v1715
          %v2479 = vunpack.c.h.b16 %v1715
          %v2480 = vunpack.c.l.b16 %v1716
          %v2481 = vunpack.c.h.b16 %v1716
          %v2482 = vunpack.c.l.b16 %v1717
          %v2483 = vunpack.c.h.b16 %v1717
          %v2484 = vunpack.c.l.b16 %v1718
          %v2485 = vunpack.c.h.b16 %v1718
          %v2486 = vunpack.c.l.b16 %v1719
          %v2487 = vunpack.c.h.b16 %v1719
          %v2488 = vunpack.c.l.b16 %v1720
          %v2489 = vunpack.c.h.b16 %v1720
          %v2490 = vunpack.c.l.b16 %v1721
          %v2491 = vunpack.c.h.b16 %v1721
          %v2492 = vunpack.c.l.b16 %v1722
          %v2493 = vunpack.c.h.b16 %v1722
          %v2494 = vunpack.c.l.b16 %v1723
          %v2495 = vunpack.c.h.b16 %v1723
          %v2496 = vunpack.c.l.b16 %v1724
          %v2497 = vunpack.c.h.b16 %v1724
          %v2498 = vunpack.c.l.b16 %v1725
          %v2499 = vunpack.c.h.b16 %v1725
          %v2500 = vunpack.c.l.b16 %v1726
          %v2501 = vunpack.c.h.b16 %v1726
          %v2502 = vunpack.c.l.b16 %v1727
          %v2503 = vunpack.c.h.b16 %v1727
          %v2504 = vunpack.c.l.b16 %v1728
          %v2505 = vunpack.c.h.b16 %v1728
          %v2506 = vunpack.c.l.b16 %v1729
          %v2507 = vunpack.c.h.b16 %v1729
          %v2508 = vunpack.c.l.b16 %v1730
          %v2509 = vunpack.c.h.b16 %v1730
          %v2510 = vunpack.c.l.b16 %v1731
          %v2511 = vunpack.c.h.b16 %v1731
          %v2512 = vpack.c.b16 %v2002, %v2000
          %v2513 = vpack.c.b16 %v2003, %v2001
          %v2514 = vpack.c.b16 %v2006, %v2004
          %v2515 = vpack.c.b16 %v2007, %v2005
          %v2516 = vpack.c.b16 %v2010, %v2008
          %v2517 = vpack.c.b16 %v2011, %v2009
          %v2518 = vpack.c.b16 %v2014, %v2012
          %v2519 = vpack.c.b16 %v2015, %v2013
          %v2520 = vpack.c.b16 %v2018, %v2016
          %v2521 = vpack.c.b16 %v2019, %v2017
          %v2522 = vpack.c.b16 %v2022, %v2020
          %v2523 = vpack.c.b16 %v2023, %v2021
          %v2524 = vpack.c.b16 %v2026, %v2024
          %v2525 = vpack.c.b16 %v2027, %v2025
          %v2526 = vpack.c.b16 %v2030, %v2028
          %v2527 = vpack.c.b16 %v2031, %v2029
          %v2528 = vpack.c.b16 %v2034, %v2032
          %v2529 = vpack.c.b16 %v2035, %v2033
          %v2530 = vpack.c.b16 %v2038, %v2036
          %v2531 = vpack.c.b16 %v2039, %v2037
          %v2532 = vpack.c.b16 %v2042, %v2040
          %v2533 = vpack.c.b16 %v2043, %v2041
          %v2534 = vpack.c.b16 %v2046, %v2044
          %v2535 = vpack.c.b16 %v2047, %v2045
          %v2536 = vpack.c.b16 %v2050, %v2048
          %v2537 = vpack.c.b16 %v2051, %v2049
          %v2538 = vpack.c.b16 %v2054, %v2052
          %v2539 = vpack.c.b16 %v2055, %v2053
          %v2540 = vpack.c.b16 %v2058, %v2056
          %v2541 = vpack.c.b16 %v2059, %v2057
          %v2542 = vpack.c.b16 %v2062, %v2060
          %v2543 = vpack.c.b16 %v2063, %v2061
          %v2544 = vpack.c.b16 %v2066, %v2064
          %v2545 = vpack.c.b16 %v2067, %v2065
          %v2546 = vpack.c.b16 %v2070, %v2068
          %v2547 = vpack.c.b16 %v2071, %v2069
          %v2548 = vpack.c.b16 %v2074, %v2072
          %v2549 = vpack.c.b16 %v2075, %v2073
          %v2550 = vpack.c.b16 %v2078, %v2076
          %v2551 = vpack.c.b16 %v2079, %v2077
          %v2552 = vpack.c.b16 %v2082, %v2080
          %v2553 = vpack.c.b16 %v2083, %v2081
          %v2554 = vpack.c.b16 %v2086, %v2084
          %v2555 = vpack.c.b16 %v2087, %v2085
          %v2556 = vpack.c.b16 %v2090, %v2088
          %v2557 = vpack.c.b16 %v2091, %v2089
          %v2558 = vpack.c.b16 %v2094, %v2092
          %v2559 = vpack.c.b16 %v2095, %v2093
          %v2560 = vpack.c.b16 %v2098, %v2096
          %v2561 = vpack.c.b16 %v2099, %v2097
          %v2562 = vpack.c.b16 %v2102, %v2100
          %v2563 = vpack.c.b16 %v2103, %v2101
          %v2564 = vpack.c.b16 %v2106, %v2104
          %v2565 = vpack.c.b16 %v2107, %v2105
          %v2566 = vpack.c.b16 %v2110, %v2108
          %v2567 = vpack.c.b16 %v2111, %v2109
          %v2568 = vpack.c.b16 %v2114, %v2112
          %v2569 = vpack.c.b16 %v2115, %v2113
          %v2570 = vpack.c.b16 %v2118, %v2116
          %v2571 = vpack.c.b16 %v2119, %v2117
          %v2572 = vpack.c.b16 %v2122, %v2120
          %v2573 = vpack.c.b16 %v2123, %v2121
          %v2574 = vpack.c.b16 %v2126, %v2124
          %v2575 = vpack.c.b16 %v2127, %v2125
          %v2576 = vpack.c.b16 %v2130, %v2128
          %v2577 = vpack.c.b16 %v2131, %v2129
          %v2578 = vpack.c.b16 %v2134, %v2132
          %v2579 = vpack.c.b16 %v2135, %v2133
          %v2580 = vpack.c.b16 %v2138, %v2136
          %v2581 = vpack.c.b16 %v2139, %v2137
          %v2582 = vpack.c.b16 %v2142, %v2140
          %v2583 = vpack.c.b16 %v2143, %v2141
          %v2584 = vpack.c.b16 %v2146, %v2144
          %v2585 = vpack.c.b16 %v2147, %v2145
          %v2586 = vpack.c.b16 %v2150, %v2148
          %v2587 = vpack.c.b16 %v2151, %v2149
          %v2588 = vpack.c.b16 %v2154, %v2152
          %v2589 = vpack.c.b16 %v2155, %v2153
          %v2590 = vpack.c.b16 %v2158, %v2156
          %v2591 = vpack.c.b16 %v2159, %v2157
          %v2592 = vpack.c.b16 %v2162, %v2160
          %v2593 = vpack.c.b16 %v2163, %v2161
          %v2594 = vpack.c.b16 %v2166, %v2164
          %v2595 = vpack.c.b16 %v2167, %v2165
          %v2596 = vpack.c.b16 %v2170, %v2168
          %v2597 = vpack.c.b16 %v2171, %v2169
          %v2598 = vpack.c.b16 %v2174, %v2172
          %v2599 = vpack.c.b16 %v2175, %v2173
          %v2600 = vpack.c.b16 %v2178, %v2176
          %v2601 = vpack.c.b16 %v2179, %v2177
          %v2602 = vpack.c.b16 %v2182, %v2180
          %v2603 = vpack.c.b16 %v2183, %v2181
          %v2604 = vpack.c.b16 %v2186, %v2184
          %v2605 = vpack.c.b16 %v2187, %v2185
          %v2606 = vpack.c.b16 %v2190, %v2188
          %v2607 = vpack.c.b16 %v2191, %v2189
          %v2608 = vpack.c.b16 %v2194, %v2192
          %v2609 = vpack.c.b16 %v2195, %v2193
          %v2610 = vpack.c.b16 %v2198, %v2196
          %v2611 = vpack.c.b16 %v2199, %v2197
          %v2612 = vpack.c.b16 %v2202, %v2200
          %v2613 = vpack.c.b16 %v2203, %v2201
          %v2614 = vpack.c.b16 %v2206, %v2204
          %v2615 = vpack.c.b16 %v2207, %v2205
          %v2616 = vpack.c.b16 %v2210, %v2208
          %v2617 = vpack.c.b16 %v2211, %v2209
          %v2618 = vpack.c.b16 %v2214, %v2212
          %v2619 = vpack.c.b16 %v2215, %v2213
          %v2620 = vpack.c.b16 %v2218, %v2216
          %v2621 = vpack.c.b16 %v2219, %v2217
          %v2622 = vpack.c.b16 %v2222, %v2220
          %v2623 = vpack.c.b16 %v2223, %v2221
          %v2624 = vpack.c.b16 %v2226, %v2224
          %v2625 = vpack.c.b16 %v2227, %v2225
          %v2626 = vpack.c.b16 %v2230, %v2228
          %v2627 = vpack.c.b16 %v2231, %v2229
          %v2628 = vpack.c.b16 %v2234, %v2232
          %v2629 = vpack.c.b16 %v2235, %v2233
          %v2630 = vpack.c.b16 %v2238, %v2236
          %v2631 = vpack.c.b16 %v2239, %v2237
          %v2632 = vpack.c.b16 %v2242, %v2240
          %v2633 = vpack.c.b16 %v2243, %v2241
          %v2634 = vpack.c.b16 %v2246, %v2244
          %v2635 = vpack.c.b16 %v2247, %v2245
          %v2636 = vpack.c.b16 %v2250, %v2248
          %v2637 = vpack.c.b16 %v2251, %v2249
          %v2638 = vpack.c.b16 %v2254, %v2252
          %v2639 = vpack.c.b16 %v2255, %v2253
          %v2640 = vpack.c.b16 %v2258, %v2256
          %v2641 = vpack.c.b16 %v2259, %v2257
          %v2642 = vpack.c.b16 %v2262, %v2260
          %v2643 = vpack.c.b16 %v2263, %v2261
          %v2644 = vpack.c.b16 %v2266, %v2264
          %v2645 = vpack.c.b16 %v2267, %v2265
          %v2646 = vpack.c.b16 %v2270, %v2268
          %v2647 = vpack.c.b16 %v2271, %v2269
          %v2648 = vpack.c.b16 %v2274, %v2272
          %v2649 = vpack.c.b16 %v2275, %v2273
          %v2650 = vpack.c.b16 %v2278, %v2276
          %v2651 = vpack.c.b16 %v2279, %v2277
          %v2652 = vpack.c.b16 %v2282, %v2280
          %v2653 = vpack.c.b16 %v2283, %v2281
          %v2654 = vpack.c.b16 %v2286, %v2284
          %v2655 = vpack.c.b16 %v2287, %v2285
          %v2656 = vpack.c.b16 %v2290, %v2288
          %v2657 = vpack.c.b16 %v2291, %v2289
          %v2658 = vpack.c.b16 %v2294, %v2292
          %v2659 = vpack.c.b16 %v2295, %v2293
          %v2660 = vpack.c.b16 %v2298, %v2296
          %v2661 = vpack.c.b16 %v2299, %v2297
          %v2662 = vpack.c.b16 %v2302, %v2300
          %v2663 = vpack.c.b16 %v2303, %v2301
          %v2664 = vpack.c.b16 %v2306, %v2304
          %v2665 = vpack.c.b16 %v2307, %v2305
          %v2666 = vpack.c.b16 %v2310, %v2308
          %v2667 = vpack.c.b16 %v2311, %v2309
          %v2668 = vpack.c.b16 %v2314, %v2312
          %v2669 = vpack.c.b16 %v2315, %v2313
          %v2670 = vpack.c.b16 %v2318, %v2316
          %v2671 = vpack.c.b16 %v2319, %v2317
          %v2672 = vpack.c.b16 %v2322, %v2320
          %v2673 = vpack.c.b16 %v2323, %v2321
          %v2674 = vpack.c.b16 %v2326, %v2324
          %v2675 = vpack.c.b16 %v2327, %v2325
          %v2676 = vpack.c.b16 %v2330, %v2328
          %v2677 = vpack.c.b16 %v2331, %v2329
          %v2678 = vpack.c.b16 %v2334, %v2332
          %v2679 = vpack.c.b16 %v2335, %v2333
          %v2680 = vpack.c.b16 %v2338, %v2336
          %v2681 = vpack.c.b16 %v2339, %v2337
          %v2682 = vpack.c.b16 %v2342, %v2340
          %v2683 = vpack.c.b16 %v2343, %v2341
          %v2684 = vpack.c.b16 %v2346, %v2344
          %v2685 = vpack.c.b16 %v2347, %v2345
          %v2686 = vpack.c.b16 %v2350, %v2348
          %v2687 = vpack.c.b16 %v2351, %v2349
          %v2688 = vpack.c.b16 %v2354, %v2352
          %v2689 = vpack.c.b16 %v2355, %v2353
          %v2690 = vpack.c.b16 %v2358, %v2356
          %v2691 = vpack.c.b16 %v2359, %v2357
          %v2692 = vpack.c.b16 %v2362, %v2360
          %v2693 = vpack.c.b16 %v2363, %v2361
          %v2694 = vpack.c.b16 %v2366, %v2364
          %v2695 = vpack.c.b16 %v2367, %v2365
          %v2696 = vpack.c.b16 %v2370, %v2368
          %v2697 = vpack.c.b16 %v2371, %v2369
          %v2698 = vpack.c.b16 %v2374, %v2372
          %v2699 = vpack.c.b16 %v2375, %v2373
          %v2700 = vpack.c.b16 %v2378, %v2376
          %v2701 = vpack.c.b16 %v2379, %v2377
          %v2702 = vpack.c.b16 %v2382, %v2380
          %v2703 = vpack.c.b16 %v2383, %v2381
          %v2704 = vpack.c.b16 %v2386, %v2384
          %v2705 = vpack.c.b16 %v2387, %v2385
          %v2706 = vpack.c.b16 %v2390, %v2388
          %v2707 = vpack.c.b16 %v2391, %v2389
          %v2708 = vpack.c.b16 %v2394, %v2392
          %v2709 = vpack.c.b16 %v2395, %v2393
          %v2710 = vpack.c.b16 %v2398, %v2396
          %v2711 = vpack.c.b16 %v2399, %v2397
          %v2712 = vpack.c.b16 %v2402, %v2400
          %v2713 = vpack.c.b16 %v2403, %v2401
          %v2714 = vpack.c.b16 %v2406, %v2404
          %v2715 = vpack.c.b16 %v2407, %v2405
          %v2716 = vpack.c.b16 %v2410, %v2408
          %v2717 = vpack.c.b16 %v2411, %v2409
          %v2718 = vpack.c.b16 %v2414, %v2412
          %v2719 = vpack.c.b16 %v2415, %v2413
          %v2720 = vpack.c.b16 %v2418, %v2416
          %v2721 = vpack.c.b16 %v2419, %v2417
          %v2722 = vpack.c.b16 %v2422, %v2420
          %v2723 = vpack.c.b16 %v2423, %v2421
          %v2724 = vpack.c.b16 %v2426, %v2424
          %v2725 = vpack.c.b16 %v2427, %v2425
          %v2726 = vpack.c.b16 %v2430, %v2428
          %v2727 = vpack.c.b16 %v2431, %v2429
          %v2728 = vpack.c.b16 %v2434, %v2432
          %v2729 = vpack.c.b16 %v2435, %v2433
          %v2730 = vpack.c.b16 %v2438, %v2436
          %v2731 = vpack.c.b16 %v2439, %v2437
          %v2732 = vpack.c.b16 %v2442, %v2440
          %v2733 = vpack.c.b16 %v2443, %v2441
          %v2734 = vpack.c.b16 %v2446, %v2444
          %v2735 = vpack.c.b16 %v2447, %v2445
          %v2736 = vpack.c.b16 %v2450, %v2448
          %v2737 = vpack.c.b16 %v2451, %v2449
          %v2738 = vpack.c.b16 %v2454, %v2452
          %v2739 = vpack.c.b16 %v2455, %v2453
          %v2740 = vpack.c.b16 %v2458, %v2456
          %v2741 = vpack.c.b16 %v2459, %v2457
          %v2742 = vpack.c.b16 %v2462, %v2460
          %v2743 = vpack.c.b16 %v2463, %v2461
          %v2744 = vpack.c.b16 %v2466, %v2464
          %v2745 = vpack.c.b16 %v2467, %v2465
          %v2746 = vpack.c.b16 %v2470, %v2468
          %v2747 = vpack.c.b16 %v2471, %v2469
          %v2748 = vpack.c.b16 %v2474, %v2472
          %v2749 = vpack.c.b16 %v2475, %v2473
          %v2750 = vpack.c.b16 %v2478, %v2476
          %v2751 = vpack.c.b16 %v2479, %v2477
          %v2752 = vpack.c.b16 %v2482, %v2480
          %v2753 = vpack.c.b16 %v2483, %v2481
          %v2754 = vpack.c.b16 %v2486, %v2484
          %v2755 = vpack.c.b16 %v2487, %v2485
          %v2756 = vpack.c.b16 %v2490, %v2488
          %v2757 = vpack.c.b16 %v2491, %v2489
          %v2758 = vpack.c.b16 %v2494, %v2492
          %v2759 = vpack.c.b16 %v2495, %v2493
          %v2760 = vpack.c.b16 %v2498, %v2496
          %v2761 = vpack.c.b16 %v2499, %v2497
          %v2762 = vpack.c.b16 %v2502, %v2500
          %v2763 = vpack.c.b16 %v2503, %v2501
          %v2764 = vpack.c.b16 %v2506, %v2504
          %v2765 = vpack.c.b16 %v2507, %v2505
          %v2766 = vpack.c.b16 %v2510, %v2508
          %v2767 = vpack.c.b16 %v2511, %v2509
          %3024 = vmatprep.subr.bf16.mxu0 %v2527
          %3025 = vmatpush1.bf16.msra.mxu0 %v2526
          %3026 = vmatprep.subr.bf16.mxu0 %v2525
          %3027 = vmatpush1.bf16.msra.mxu0 %v2524
          %3028 = vmatprep.subr.bf16.mxu0 %v2523
          %3029 = vmatpush1.bf16.msra.mxu0 %v2522
          %3030 = vmatprep.subr.bf16.mxu0 %v2521
          %3031 = vmatpush1.bf16.msra.mxu0 %v2520
          %3032 = vmatprep.subr.bf16.mxu0 %v2519
          %3033 = vmatpush1.bf16.msra.mxu0 %v2518
          %3034 = vmatprep.subr.bf16.mxu0 %v2517
          %3035 = vmatpush1.bf16.msra.mxu0 %v2516
          %3036 = vmatprep.subr.bf16.mxu0 %v2515
          %3037 = vmatpush1.bf16.msra.mxu0 %v2514
          %3038 = vmatprep.subr.bf16.mxu0 %v2513
          %3039 = vmatpush1.bf16.msra.mxu0 %v2512
          %3040 = vmatprep.subr.bf16.mxu0 %v2543
          %3041 = vmatpush2.bf16.msra.mxu0 %v2542
          %3042 = vmatprep.subr.bf16.mxu0 %v2541
          %3043 = vmatpush2.bf16.msra.mxu0 %v2540
          %3044 = vmatprep.subr.bf16.mxu0 %v2539
          %3045 = vmatpush2.bf16.msra.mxu0 %v2538
          %3046 = vmatprep.subr.bf16.mxu0 %v2537
          %3047 = vmatpush2.bf16.msra.mxu0 %v2536
          %3048 = vmatprep.subr.bf16.mxu0 %v2535
          %3049 = vmatpush2.bf16.msra.mxu0 %v2534
          %3050 = vmatprep.subr.bf16.mxu0 %v2533
          %3051 = vmatpush2.bf16.msra.mxu0 %v2532
          %3052 = vmatprep.subr.bf16.mxu0 %v2531
          %3053 = vmatpush2.bf16.msra.mxu0 %v2530
          %3054 = vmatprep.subr.bf16.mxu0 %v2529
          %3055 = vmatpush2.bf16.msra.mxu0 %v2528
          %3056 = vmatprep.mubr.bf16.mxu0 %v1461
          %3057 = vmatmul.mubr.bf16.gmra.mxu0 %v1460
          %v3058 = vpop.f32.mrf.mxu0
          %v3059 = vadd.f32 %v1737, %v3058
          %v3060 = vpop.f32.mrf.mxu0
          %v3061 = vadd.f32 %v1741, %v3060
          %v3062 = vpop.f32.mrf.mxu0
          %v3063 = vadd.f32 %v1737, %v3062
          %v3064 = vpop.f32.mrf.mxu0
          %v3065 = vadd.f32 %v1741, %v3064
          %3066 = vdwg.mxu0
          %3067 = vmatprep.subr.bf16.mxu0 %v2559
          %3068 = vmatpush1.bf16.msra.mxu0 %v2558
          %3069 = vmatprep.subr.bf16.mxu0 %v2557
          %3070 = vmatpush1.bf16.msra.mxu0 %v2556
          %3071 = vmatprep.subr.bf16.mxu0 %v2555
          %3072 = vmatpush1.bf16.msra.mxu0 %v2554
          %3073 = vmatprep.subr.bf16.mxu0 %v2553
          %3074 = vmatpush1.bf16.msra.mxu0 %v2552
          %3075 = vmatprep.subr.bf16.mxu0 %v2551
          %3076 = vmatpush1.bf16.msra.mxu0 %v2550
          %3077 = vmatprep.subr.bf16.mxu0 %v2549
          %3078 = vmatpush1.bf16.msra.mxu0 %v2548
          %3079 = vmatprep.subr.bf16.mxu0 %v2547
          %3080 = vmatpush1.bf16.msra.mxu0 %v2546
          %3081 = vmatprep.subr.bf16.mxu0 %v2545
          %3082 = vmatpush1.bf16.msra.mxu0 %v2544
          %3083 = vmatprep.subr.bf16.mxu0 %v2575
          %3084 = vmatpush2.bf16.msra.mxu0 %v2574
          %3085 = vmatprep.subr.bf16.mxu0 %v2573
          %3086 = vmatpush2.bf16.msra.mxu0 %v2572
          %3087 = vmatprep.subr.bf16.mxu0 %v2571
          %3088 = vmatpush2.bf16.msra.mxu0 %v2570
          %3089 = vmatprep.subr.bf16.mxu0 %v2569
          %3090 = vmatpush2.bf16.msra.mxu0 %v2568
          %3091 = vmatprep.subr.bf16.mxu0 %v2567
          %3092 = vmatpush2.bf16.msra.mxu0 %v2566
          %3093 = vmatprep.subr.bf16.mxu0 %v2565
          %3094 = vmatpush2.bf16.msra.mxu0 %v2564
          %3095 = vmatprep.subr.bf16.mxu0 %v2563
          %3096 = vmatpush2.bf16.msra.mxu0 %v2562
          %3097 = vmatprep.subr.bf16.mxu0 %v2561
          %3098 = vmatpush2.bf16.msra.mxu0 %v2560
          %3099 = vmatprep.mubr.bf16.mxu0 %v1463
          %3100 = vmatmul.mubr.bf16.gmra.mxu0 %v1462
          %v3101 = vpop.f32.mrf.mxu0
          %v3102 = vadd.f32 %v3059, %v3101
          %v3103 = vpop.f32.mrf.mxu0
          %v3104 = vadd.f32 %v3061, %v3103
          %v3105 = vpop.f32.mrf.mxu0
          %v3106 = vadd.f32 %v3063, %v3105
          %v3107 = vpop.f32.mrf.mxu0
          %v3108 = vadd.f32 %v3065, %v3107
          %3109 = vdwg.mxu0
          %3110 = vmatprep.subr.bf16.mxu0 %v2591
          %3111 = vmatpush1.bf16.msra.mxu0 %v2590
          %3112 = vmatprep.subr.bf16.mxu0 %v2589
          %3113 = vmatpush1.bf16.msra.mxu0 %v2588
          %3114 = vmatprep.subr.bf16.mxu0 %v2587
          %3115 = vmatpush1.bf16.msra.mxu0 %v2586
          %3116 = vmatprep.subr.bf16.mxu0 %v2585
          %3117 = vmatpush1.bf16.msra.mxu0 %v2584
          %3118 = vmatprep.subr.bf16.mxu0 %v2583
          %3119 = vmatpush1.bf16.msra.mxu0 %v2582
          %3120 = vmatprep.subr.bf16.mxu0 %v2581
          %3121 = vmatpush1.bf16.msra.mxu0 %v2580
          %3122 = vmatprep.subr.bf16.mxu0 %v2579
          %3123 = vmatpush1.bf16.msra.mxu0 %v2578
          %3124 = vmatprep.subr.bf16.mxu0 %v2577
          %3125 = vmatpush1.bf16.msra.mxu0 %v2576
          %3126 = vmatprep.subr.bf16.mxu0 %v2607
          %3127 = vmatpush2.bf16.msra.mxu0 %v2606
          %3128 = vmatprep.subr.bf16.mxu0 %v2605
          %3129 = vmatpush2.bf16.msra.mxu0 %v2604
          %3130 = vmatprep.subr.bf16.mxu0 %v2603
          %3131 = vmatpush2.bf16.msra.mxu0 %v2602
          %3132 = vmatprep.subr.bf16.mxu0 %v2601
          %3133 = vmatpush2.bf16.msra.mxu0 %v2600
          %3134 = vmatprep.subr.bf16.mxu0 %v2599
          %3135 = vmatpush2.bf16.msra.mxu0 %v2598
          %3136 = vmatprep.subr.bf16.mxu0 %v2597
          %3137 = vmatpush2.bf16.msra.mxu0 %v2596
          %3138 = vmatprep.subr.bf16.mxu0 %v2595
          %3139 = vmatpush2.bf16.msra.mxu0 %v2594
          %3140 = vmatprep.subr.bf16.mxu0 %v2593
          %3141 = vmatpush2.bf16.msra.mxu0 %v2592
          %3142 = vmatprep.mubr.bf16.mxu0 %v1465
          %3143 = vmatmul.mubr.bf16.gmra.mxu0 %v1464
          %v3144 = vpop.f32.mrf.mxu0
          %v3145 = vadd.f32 %v3102, %v3144
          %v3146 = vpop.f32.mrf.mxu0
          %v3147 = vadd.f32 %v3104, %v3146
          %v3148 = vpop.f32.mrf.mxu0
          %v3149 = vadd.f32 %v3106, %v3148
          %v3150 = vpop.f32.mrf.mxu0
          %v3151 = vadd.f32 %v3108, %v3150
          %3152 = vdwg.mxu0
          %3153 = vmatprep.subr.bf16.mxu0 %v2623
          %3154 = vmatpush1.bf16.msra.mxu0 %v2622
          %3155 = vmatprep.subr.bf16.mxu0 %v2621
          %3156 = vmatpush1.bf16.msra.mxu0 %v2620
          %3157 = vmatprep.subr.bf16.mxu0 %v2619
          %3158 = vmatpush1.bf16.msra.mxu0 %v2618
          %3159 = vmatprep.subr.bf16.mxu0 %v2617
          %3160 = vmatpush1.bf16.msra.mxu0 %v2616
          %3161 = vmatprep.subr.bf16.mxu0 %v2615
          %3162 = vmatpush1.bf16.msra.mxu0 %v2614
          %3163 = vmatprep.subr.bf16.mxu0 %v2613
          %3164 = vmatpush1.bf16.msra.mxu0 %v2612
          %3165 = vmatprep.subr.bf16.mxu0 %v2611
          %3166 = vmatpush1.bf16.msra.mxu0 %v2610
          %3167 = vmatprep.subr.bf16.mxu0 %v2609
          %3168 = vmatpush1.bf16.msra.mxu0 %v2608
          %3169 = vmatprep.subr.bf16.mxu0 %v2639
          %3170 = vmatpush2.bf16.msra.mxu0 %v2638
          %3171 = vmatprep.subr.bf16.mxu0 %v2637
          %3172 = vmatpush2.bf16.msra.mxu0 %v2636
          %3173 = vmatprep.subr.bf16.mxu0 %v2635
          %3174 = vmatpush2.bf16.msra.mxu0 %v2634
          %3175 = vmatprep.subr.bf16.mxu0 %v2633
          %3176 = vmatpush2.bf16.msra.mxu0 %v2632
          %3177 = vmatprep.subr.bf16.mxu0 %v2631
          %3178 = vmatpush2.bf16.msra.mxu0 %v2630
          %3179 = vmatprep.subr.bf16.mxu0 %v2629
          %3180 = vmatpush2.bf16.msra.mxu0 %v2628
          %3181 = vmatprep.subr.bf16.mxu0 %v2627
          %3182 = vmatpush2.bf16.msra.mxu0 %v2626
          %3183 = vmatprep.subr.bf16.mxu0 %v2625
          %3184 = vmatpush2.bf16.msra.mxu0 %v2624
          %3185 = vmatprep.mubr.bf16.mxu0 %v1467
          %3186 = vmatmul.mubr.bf16.gmra.mxu0 %v1466
          %v3187 = vpop.f32.mrf.mxu0
          %v3188 = vadd.f32 %v3145, %v3187
          %v3189 = vpop.f32.mrf.mxu0
          %v3190 = vadd.f32 %v3147, %v3189
          %v3191 = vpop.f32.mrf.mxu0
          %v3192 = vadd.f32 %v3149, %v3191
          %v3193 = vpop.f32.mrf.mxu0
          %v3194 = vadd.f32 %v3151, %v3193
          %3195 = vdwg.mxu0
          %3196 = vmatprep.subr.bf16.mxu0 %v2655
          %3197 = vmatpush1.bf16.msra.mxu0 %v2654
          %3198 = vmatprep.subr.bf16.mxu0 %v2653
          %3199 = vmatpush1.bf16.msra.mxu0 %v2652
          %3200 = vmatprep.subr.bf16.mxu0 %v2651
          %3201 = vmatpush1.bf16.msra.mxu0 %v2650
          %3202 = vmatprep.subr.bf16.mxu0 %v2649
          %3203 = vmatpush1.bf16.msra.mxu0 %v2648
          %3204 = vmatprep.subr.bf16.mxu0 %v2647
          %3205 = vmatpush1.bf16.msra.mxu0 %v2646
          %3206 = vmatprep.subr.bf16.mxu0 %v2645
          %3207 = vmatpush1.bf16.msra.mxu0 %v2644
          %3208 = vmatprep.subr.bf16.mxu0 %v2643
          %3209 = vmatpush1.bf16.msra.mxu0 %v2642
          %3210 = vmatprep.subr.bf16.mxu0 %v2641
          %3211 = vmatpush1.bf16.msra.mxu0 %v2640
          %3212 = vmatprep.subr.bf16.mxu0 %v2671
          %3213 = vmatpush2.bf16.msra.mxu0 %v2670
          %3214 = vmatprep.subr.bf16.mxu0 %v2669
          %3215 = vmatpush2.bf16.msra.mxu0 %v2668
          %3216 = vmatprep.subr.bf16.mxu0 %v2667
          %3217 = vmatpush2.bf16.msra.mxu0 %v2666
          %3218 = vmatprep.subr.bf16.mxu0 %v2665
          %3219 = vmatpush2.bf16.msra.mxu0 %v2664
          %3220 = vmatprep.subr.bf16.mxu0 %v2663
          %3221 = vmatpush2.bf16.msra.mxu0 %v2662
          %3222 = vmatprep.subr.bf16.mxu0 %v2661
          %3223 = vmatpush2.bf16.msra.mxu0 %v2660
          %3224 = vmatprep.subr.bf16.mxu0 %v2659
          %3225 = vmatpush2.bf16.msra.mxu0 %v2658
          %3226 = vmatprep.subr.bf16.mxu0 %v2657
          %3227 = vmatpush2.bf16.msra.mxu0 %v2656
          %3228 = vmatprep.mubr.bf16.mxu0 %v1469
          %3229 = vmatmul.mubr.bf16.gmra.mxu0 %v1468
          %v3230 = vpop.f32.mrf.mxu0
          %v3231 = vadd.f32 %v3188, %v3230
          %v3232 = vpop.f32.mrf.mxu0
          %v3233 = vadd.f32 %v3190, %v3232
          %v3234 = vpop.f32.mrf.mxu0
          %v3235 = vadd.f32 %v3192, %v3234
          %v3236 = vpop.f32.mrf.mxu0
          %v3237 = vadd.f32 %v3194, %v3236
          %3238 = vdwg.mxu0
          %3239 = vmatprep.subr.bf16.mxu0 %v2687
          %3240 = vmatpush1.bf16.msra.mxu0 %v2686
          %3241 = vmatprep.subr.bf16.mxu0 %v2685
          %3242 = vmatpush1.bf16.msra.mxu0 %v2684
          %3243 = vmatprep.subr.bf16.mxu0 %v2683
          %3244 = vmatpush1.bf16.msra.mxu0 %v2682
          %3245 = vmatprep.subr.bf16.mxu0 %v2681
          %3246 = vmatpush1.bf16.msra.mxu0 %v2680
          %3247 = vmatprep.subr.bf16.mxu0 %v2679
          %3248 = vmatpush1.bf16.msra.mxu0 %v2678
          %3249 = vmatprep.subr.bf16.mxu0 %v2677
          %3250 = vmatpush1.bf16.msra.mxu0 %v2676
          %3251 = vmatprep.subr.bf16.mxu0 %v2675
          %3252 = vmatpush1.bf16.msra.mxu0 %v2674
          %3253 = vmatprep.subr.bf16.mxu0 %v2673
          %3254 = vmatpush1.bf16.msra.mxu0 %v2672
          %3255 = vmatprep.subr.bf16.mxu0 %v2703
          %3256 = vmatpush2.bf16.msra.mxu0 %v2702
          %3257 = vmatprep.subr.bf16.mxu0 %v2701
          %3258 = vmatpush2.bf16.msra.mxu0 %v2700
          %3259 = vmatprep.subr.bf16.mxu0 %v2699
          %3260 = vmatpush2.bf16.msra.mxu0 %v2698
          %3261 = vmatprep.subr.bf16.mxu0 %v2697
          %3262 = vmatpush2.bf16.msra.mxu0 %v2696
          %3263 = vmatprep.subr.bf16.mxu0 %v2695
          %3264 = vmatpush2.bf16.msra.mxu0 %v2694
          %3265 = vmatprep.subr.bf16.mxu0 %v2693
          %3266 = vmatpush2.bf16.msra.mxu0 %v2692
          %3267 = vmatprep.subr.bf16.mxu0 %v2691
          %3268 = vmatpush2.bf16.msra.mxu0 %v2690
          %3269 = vmatprep.subr.bf16.mxu0 %v2689
          %3270 = vmatpush2.bf16.msra.mxu0 %v2688
          %3271 = vmatprep.mubr.bf16.mxu0 %v1471
          %3272 = vmatmul.mubr.bf16.gmra.mxu0 %v1470
          %v3273 = vpop.f32.mrf.mxu0
          %v3274 = vadd.f32 %v3231, %v3273
          %v3275 = vpop.f32.mrf.mxu0
          %v3276 = vadd.f32 %v3233, %v3275
          %v3277 = vpop.f32.mrf.mxu0
          %v3278 = vadd.f32 %v3235, %v3277
          %v3279 = vpop.f32.mrf.mxu0
          %v3280 = vadd.f32 %v3237, %v3279
          %3281 = vdwg.mxu0
          %3282 = vmatprep.subr.bf16.mxu0 %v2719
          %3283 = vmatpush1.bf16.msra.mxu0 %v2718
          %3284 = vmatprep.subr.bf16.mxu0 %v2717
          %3285 = vmatpush1.bf16.msra.mxu0 %v2716
          %3286 = vmatprep.subr.bf16.mxu0 %v2715
          %3287 = vmatpush1.bf16.msra.mxu0 %v2714
          %3288 = vmatprep.subr.bf16.mxu0 %v2713
          %3289 = vmatpush1.bf16.msra.mxu0 %v2712
          %3290 = vmatprep.subr.bf16.mxu0 %v2711
          %3291 = vmatpush1.bf16.msra.mxu0 %v2710
          %3292 = vmatprep.subr.bf16.mxu0 %v2709
          %3293 = vmatpush1.bf16.msra.mxu0 %v2708
          %3294 = vmatprep.subr.bf16.mxu0 %v2707
          %3295 = vmatpush1.bf16.msra.mxu0 %v2706
          %3296 = vmatprep.subr.bf16.mxu0 %v2705
          %3297 = vmatpush1.bf16.msra.mxu0 %v2704
          %3298 = vmatprep.subr.bf16.mxu0 %v2735
          %3299 = vmatpush2.bf16.msra.mxu0 %v2734
          %3300 = vmatprep.subr.bf16.mxu0 %v2733
          %3301 = vmatpush2.bf16.msra.mxu0 %v2732
          %3302 = vmatprep.subr.bf16.mxu0 %v2731
          %3303 = vmatpush2.bf16.msra.mxu0 %v2730
          %3304 = vmatprep.subr.bf16.mxu0 %v2729
          %3305 = vmatpush2.bf16.msra.mxu0 %v2728
          %3306 = vmatprep.subr.bf16.mxu0 %v2727
          %3307 = vmatpush2.bf16.msra.mxu0 %v2726
          %3308 = vmatprep.subr.bf16.mxu0 %v2725
          %3309 = vmatpush2.bf16.msra.mxu0 %v2724
          %3310 = vmatprep.subr.bf16.mxu0 %v2723
          %3311 = vmatpush2.bf16.msra.mxu0 %v2722
          %3312 = vmatprep.subr.bf16.mxu0 %v2721
          %3313 = vmatpush2.bf16.msra.mxu0 %v2720
          %3314 = vmatprep.mubr.bf16.mxu0 %v1473
          %3315 = vmatmul.mubr.bf16.gmra.mxu0 %v1472
          %v3316 = vpop.f32.mrf.mxu0
          %v3317 = vadd.f32 %v3274, %v3316
          %v3318 = vpop.f32.mrf.mxu0
          %v3319 = vadd.f32 %v3276, %v3318
          %v3320 = vpop.f32.mrf.mxu0
          %v3321 = vadd.f32 %v3278, %v3320
          %v3322 = vpop.f32.mrf.mxu0
          %v3323 = vadd.f32 %v3280, %v3322
          %3324 = vdwg.mxu0
          %3325 = vmatprep.subr.bf16.mxu0 %v2751
          %3326 = vmatpush1.bf16.msra.mxu0 %v2750
          %3327 = vmatprep.subr.bf16.mxu0 %v2749
          %3328 = vmatpush1.bf16.msra.mxu0 %v2748
          %3329 = vmatprep.subr.bf16.mxu0 %v2747
          %3330 = vmatpush1.bf16.msra.mxu0 %v2746
          %3331 = vmatprep.subr.bf16.mxu0 %v2745
          %3332 = vmatpush1.bf16.msra.mxu0 %v2744
          %3333 = vmatprep.subr.bf16.mxu0 %v2743
          %3334 = vmatpush1.bf16.msra.mxu0 %v2742
          %3335 = vmatprep.subr.bf16.mxu0 %v2741
          %3336 = vmatpush1.bf16.msra.mxu0 %v2740
          %3337 = vmatprep.subr.bf16.mxu0 %v2739
          %3338 = vmatpush1.bf16.msra.mxu0 %v2738
          %3339 = vmatprep.subr.bf16.mxu0 %v2737
          %3340 = vmatpush1.bf16.msra.mxu0 %v2736
          %3341 = vmatprep.subr.bf16.mxu0 %v2767
          %3342 = vmatpush2.bf16.msra.mxu0 %v2766
          %3343 = vmatprep.subr.bf16.mxu0 %v2765
          %3344 = vmatpush2.bf16.msra.mxu0 %v2764
          %3345 = vmatprep.subr.bf16.mxu0 %v2763
          %3346 = vmatpush2.bf16.msra.mxu0 %v2762
          %3347 = vmatprep.subr.bf16.mxu0 %v2761
          %3348 = vmatpush2.bf16.msra.mxu0 %v2760
          %3349 = vmatprep.subr.bf16.mxu0 %v2759
          %3350 = vmatpush2.bf16.msra.mxu0 %v2758
          %3351 = vmatprep.subr.bf16.mxu0 %v2757
          %3352 = vmatpush2.bf16.msra.mxu0 %v2756
          %3353 = vmatprep.subr.bf16.mxu0 %v2755
          %3354 = vmatpush2.bf16.msra.mxu0 %v2754
          %3355 = vmatprep.subr.bf16.mxu0 %v2753
          %3356 = vmatpush2.bf16.msra.mxu0 %v2752
          %3357 = vmatprep.mubr.bf16.mxu0 %v1475
          %3358 = vmatmul.mubr.bf16.gmra.mxu0 %v1474
          %v3359 = vpop.f32.mrf.mxu0
          %v3360 = vadd.f32 %v3317, %v3359
          %v3361 = vpop.f32.mrf.mxu0
          %v3362 = vadd.f32 %v3319, %v3361
          %v3363 = vpop.f32.mrf.mxu0
          %v3364 = vadd.f32 %v3321, %v3363
          %v3365 = vpop.f32.mrf.mxu0
          %v3366 = vadd.f32 %v3323, %v3365
          %3367 = vdwg.mxu0
          %v3368 = vlaneseq
          %v3369 = vshrl.u32 %v3368, 7
          %v3370 = vadd.s32 %v3369, 8
          %vm3371 = vcmp.lt.s32.totalorder %v3369, 2
          %vm3372 = vcmp.lt.s32.totalorder %v3370, 2
          %v3373 = vsel %vm3371, 1, 0
          %v3374 = vsel %vm3372, 1, 0
          %v3375 = vcvt.s32.f32 %v3373
          %v3376 = vcvt.s32.f32 %v3374
          %vm3377 = vcmp.ge.s32.totalorder %v3369, 8
          %vm3378 = vcmp.ge.s32.totalorder %v3370, 8
          %vm3379 = vcmp.lt.s32.totalorder %v3369, 10
          %vm3380 = vcmp.lt.s32.totalorder %v3370, 10
          %vm3381 = vmand %vm3377, %vm3379
          %vm3382 = vmand %vm3378, %vm3380
          %v3383 = vsel %vm3381, 1, 0
          %v3384 = vsel %vm3382, 1, 0
          %v3385 = vcvt.s32.f32 %v3383
          %v3386 = vcvt.s32.f32 %v3384
          %v3387 = vadd.f32 %v3375, %v3385
          %v3388 = vadd.f32 %v3376, %v3386
          %v3389 = vmul.f32 %v3360, %v3375
          %v3390 = vmul.f32 %v3362, %v3375
          %v3391 = vmul.f32 %v3364, %v3376
          %v3392 = vmul.f32 %v3366, %v3376
          %v3393 = vadd.f32 %v3389, %v3391
          %v3394 = vrot.slane %v3393, 4
          %v3395 = vadd.f32 %v3393, %v3394
          %v3396 = vrot.slane %v3395, 2
          %v3397 = vadd.f32 %v3395, %v3396
          %v3398 = vrot.slane %v3397, 1
          %v3399 = vadd.f32 %v3397, %v3398
          %v3400 = vadd.f32 %v3390, %v3392
          %v3401 = vrot.slane %v3400, 4
          %v3402 = vadd.f32 %v3400, %v3401
          %v3403 = vrot.slane %v3402, 2
          %v3404 = vadd.f32 %v3402, %v3403
          %v3405 = vrot.slane %v3404, 1
          %v3406 = vadd.f32 %v3404, %v3405
          %v3407 = vmul.f32 %v3399, 0.5
          %v3408 = vmul.f32 %v3406, 0.5
          %v3409 = vmul.f32 %v3360, %v3385
          %v3410 = vmul.f32 %v3362, %v3385
          %v3411 = vmul.f32 %v3364, %v3386
          %v3412 = vmul.f32 %v3366, %v3386
          %v3413 = vadd.f32 %v3409, %v3411
          %v3414 = vrot.slane %v3413, 4
          %v3415 = vadd.f32 %v3413, %v3414
          %v3416 = vrot.slane %v3415, 2
          %v3417 = vadd.f32 %v3415, %v3416
          %v3418 = vrot.slane %v3417, 1
          %v3419 = vadd.f32 %v3417, %v3418
          %v3420 = vadd.f32 %v3410, %v3412
          %v3421 = vrot.slane %v3420, 4
          %v3422 = vadd.f32 %v3420, %v3421
          %v3423 = vrot.slane %v3422, 2
          %v3424 = vadd.f32 %v3422, %v3423
          %v3425 = vrot.slane %v3424, 1
          %v3426 = vadd.f32 %v3424, %v3425
          %v3427 = vmul.f32 %v3419, 0.5
          %v3428 = vmul.f32 %v3426, 0.5
          %v3429 = vmul.f32 %v3375, %v3407
          %v3430 = vmul.f32 %v3375, %v3408
          %v3431 = vmul.f32 %v3376, %v3407
          %v3432 = vmul.f32 %v3376, %v3408
          %v3433 = vmul.f32 %v3385, %v3427
          %v3434 = vmul.f32 %v3385, %v3428
          %v3435 = vmul.f32 %v3386, %v3427
          %v3436 = vmul.f32 %v3386, %v3428
          %v3437 = vadd.f32 %v3429, %v3433
          %v3438 = vadd.f32 %v3430, %v3434
          %v3439 = vadd.f32 %v3431, %v3435
          %v3440 = vadd.f32 %v3432, %v3436
          %v3441 = vsub.f32 %v3360, %v3437
          %v3442 = vsub.f32 %v3362, %v3438
          %v3443 = vsub.f32 %v3364, %v3439
          %v3444 = vsub.f32 %v3366, %v3440
          %v3445 = vmul.f32 %v3441, %v3441
          %v3446 = vmul.f32 %v3442, %v3442
          %v3447 = vmul.f32 %v3443, %v3443
          %v3448 = vmul.f32 %v3444, %v3444
          %v3449 = vmul.f32 %v3445, %v3375
          %v3450 = vmul.f32 %v3446, %v3375
          %v3451 = vmul.f32 %v3447, %v3376
          %v3452 = vmul.f32 %v3448, %v3376
          %v3453 = vadd.f32 %v3449, %v3451
          %v3454 = vrot.slane %v3453, 4
          %v3455 = vadd.f32 %v3453, %v3454
          %v3456 = vrot.slane %v3455, 2
          %v3457 = vadd.f32 %v3455, %v3456
          %v3458 = vrot.slane %v3457, 1
          %v3459 = vadd.f32 %v3457, %v3458
          %v3460 = vadd.f32 %v3450, %v3452
          %v3461 = vrot.slane %v3460, 4
          %v3462 = vadd.f32 %v3460, %v3461
          %v3463 = vrot.slane %v3462, 2
          %v3464 = vadd.f32 %v3462, %v3463
          %v3465 = vrot.slane %v3464, 1
          %v3466 = vadd.f32 %v3464, %v3465
          %v3467 = vmul.f32 %v3459, 0.5
          %v3468 = vmul.f32 %v3466, 0.5
          %v3469 = vmul.f32 %v3445, %v3385
          %v3470 = vmul.f32 %v3446, %v3385
          %v3471 = vmul.f32 %v3447, %v3386
          %v3472 = vmul.f32 %v3448, %v3386
          %v3473 = vadd.f32 %v3469, %v3471
          %v3474 = vrot.slane %v3473, 4
          %v3475 = vadd.f32 %v3473, %v3474
          %v3476 = vrot.slane %v3475, 2
          %v3477 = vadd.f32 %v3475, %v3476
          %v3478 = vrot.slane %v3477, 1
          %v3479 = vadd.f32 %v3477, %v3478
          %v3480 = vadd.f32 %v3470, %v3472
          %v3481 = vrot.slane %v3480, 4
          %v3482 = vadd.f32 %v3480, %v3481
          %v3483 = vrot.slane %v3482, 2
          %v3484 = vadd.f32 %v3482, %v3483
          %v3485 = vrot.slane %v3484, 1
          %v3486 = vadd.f32 %v3484, %v3485
          %v3487 = vmul.f32 %v3479, 0.5
          %v3488 = vmul.f32 %v3486, 0.5
          %v3489 = vadd.f32 %v3467, 1e-05
          %v3490 = vadd.f32 %v3468, 1e-05
          %v3491 = vrsqrt.pop %v3489
          %v3492 = vrsqrt.pop %v3490
          %v3493 = vmul.f32 %v3375, %v3491
          %v3494 = vmul.f32 %v3375, %v3492
          %v3495 = vmul.f32 %v3376, %v3491
          %v3496 = vmul.f32 %v3376, %v3492
          %v3497 = vadd.f32 %v3487, 1e-05
          %v3498 = vadd.f32 %v3488, 1e-05
          %v3499 = vrsqrt.pop %v3497
          %v3500 = vrsqrt.pop %v3498
          %v3501 = vmul.f32 %v3385, %v3499
          %v3502 = vmul.f32 %v3385, %v3500
          %v3503 = vmul.f32 %v3386, %v3499
          %v3504 = vmul.f32 %v3386, %v3500
          %v3505 = vadd.f32 %v3493, %v3501
          %v3506 = vadd.f32 %v3494, %v3502
          %v3507 = vadd.f32 %v3495, %v3503
          %v3508 = vadd.f32 %v3496, %v3504
          %v3509 = vmul.f32 %v3441, %v3505
          %v3510 = vmul.f32 %v3442, %v3506
          %v3511 = vmul.f32 %v3443, %v3507
          %v3512 = vmul.f32 %v3444, %v3508
          %v3513 = vld [vmem:[%s6] sm:$0x3]
          %v3515 = vlaneseq
          %v3516 = vshrl.u32 %v3515, 7
          %v3517 = vsub.s32 0, %v3516
          %v3518 = vrot.slane %v3513, %v3517
          %v3519 = vlaneseq
          %v3520 = vshrl.u32 %v3519, 7
          %v3521 = vsub.s32 1, %v3520
          %v3522 = vrot.slane %v3513, %v3521
          %v3525 = vmul.f32 %v3509, %v3518
          %v3526 = vmul.f32 %v3510, %v3522
          %v3527 = vmul.f32 %v3511, %v3518
          %v3528 = vmul.f32 %v3512, %v3522
          %v3529 = vld [vmem:[%s7] sm:$0x3]
          %v3531 = vlaneseq
          %v3532 = vshrl.u32 %v3531, 7
          %v3533 = vsub.s32 0, %v3532
          %v3534 = vrot.slane %v3529, %v3533
          %v3535 = vlaneseq
          %v3536 = vshrl.u32 %v3535, 7
          %v3537 = vsub.s32 1, %v3536
          %v3538 = vrot.slane %v3529, %v3537
          %v3541 = vadd.f32 %v3525, %v3534
          %v3542 = vadd.f32 %v3526, %v3538
          %v3543 = vadd.f32 %v3527, %v3534
          %v3544 = vadd.f32 %v3528, %v3538
          %v3545 = vmax.f32 %v3541, 0.0
          %v3546 = vmax.f32 %v3542, 0.0
          %v3547 = vmax.f32 %v3543, 0.0
          %v3548 = vmax.f32 %v3544, 0.0
          %v3549 = vmul.f32 %v3545, %v3387
          %v3550 = vmul.f32 %v3546, %v3387
          %v3551 = vmul.f32 %v3547, %v3388
          %v3552 = vmul.f32 %v3548, %v3388
          %v3553 = vpack.c.bf16 %v3551, %v3549
          %v3554 = vpack.c.bf16 %v3552, %v3550
          %v3555 = vld [vmem:[%s8] sm:$0xf]
          %v3556 = vld [vmem:[%s8 + $0x4] sm:$0xf]
          %v3557 = vld [vmem:[%s8 + $0x8] sm:$0xf]
          %v3558 = vld [vmem:[%s8 + $0xc] sm:$0xf]
          %v3559 = vld [vmem:[%s8 + $0x10] sm:$0xf]
          %v3560 = vld [vmem:[%s8 + $0x14] sm:$0xf]
          %v3561 = vld [vmem:[%s8 + $0x18] sm:$0xf]
          %v3562 = vld [vmem:[%s8 + $0x1c] sm:$0xf]
          %v3563 = vld [vmem:[%s8 + $0x20] sm:$0xf]
          %v3564 = vld [vmem:[%s8 + $0x24] sm:$0xf]
          %v3565 = vld [vmem:[%s8 + $0x28] sm:$0xf]
          %v3566 = vld [vmem:[%s8 + $0x2c] sm:$0xf]
          %v3567 = vld [vmem:[%s8 + $0x30] sm:$0xf]
          %v3568 = vld [vmem:[%s8 + $0x34] sm:$0xf]
          %v3569 = vld [vmem:[%s8 + $0x38] sm:$0xf]
          %v3570 = vld [vmem:[%s8 + $0x3c] sm:$0xf]
          %v3571 = vld [vmem:[%s8 + $0x40] sm:$0xf]
          %v3572 = vld [vmem:[%s8 + $0x44] sm:$0xf]
          %v3573 = vld [vmem:[%s8 + $0x48] sm:$0xf]
          %v3574 = vld [vmem:[%s8 + $0x4c] sm:$0xf]
          %v3575 = vld [vmem:[%s8 + $0x50] sm:$0xf]
          %v3576 = vld [vmem:[%s8 + $0x54] sm:$0xf]
          %v3577 = vld [vmem:[%s8 + $0x58] sm:$0xf]
          %v3578 = vld [vmem:[%s8 + $0x5c] sm:$0xf]
          %v3579 = vld [vmem:[%s8 + $0x60] sm:$0xf]
          %v3580 = vld [vmem:[%s8 + $0x64] sm:$0xf]
          %v3581 = vld [vmem:[%s8 + $0x68] sm:$0xf]
          %v3582 = vld [vmem:[%s8 + $0x6c] sm:$0xf]
          %v3583 = vld [vmem:[%s8 + $0x70] sm:$0xf]
          %v3584 = vld [vmem:[%s8 + $0x74] sm:$0xf]
          %v3585 = vld [vmem:[%s8 + $0x78] sm:$0xf]
          %v3586 = vld [vmem:[%s8 + $0x7c] sm:$0xf]
          %v3587 = vld [vmem:[%s9] sm:$0x1]
          %v3589 = vlaneseq
          %v3590 = vshrl.u32 %v3589, 7
          %v3591 = vsub.s32 0, %v3590
          %v3592 = vrot.slane %v3587, %v3591
          %v3626 = vunpack.c.l.b16 %v3555
          %v3627 = vunpack.c.l.b16 %v3556
          %v3628 = vunpack.c.l.b16 %v3557
          %v3629 = vunpack.c.l.b16 %v3558
          %v3630 = vunpack.c.l.b16 %v3559
          %v3631 = vunpack.c.l.b16 %v3560
          %v3632 = vunpack.c.l.b16 %v3561
          %v3633 = vunpack.c.l.b16 %v3562
          %v3634 = vunpack.c.l.b16 %v3563
          %v3635 = vunpack.c.l.b16 %v3564
          %v3636 = vunpack.c.l.b16 %v3565
          %v3637 = vunpack.c.l.b16 %v3566
          %v3638 = vunpack.c.l.b16 %v3567
          %v3639 = vunpack.c.l.b16 %v3568
          %v3640 = vunpack.c.l.b16 %v3569
          %v3641 = vunpack.c.l.b16 %v3570
          %v3642 = vunpack.c.l.b16 %v3571
          %v3643 = vunpack.c.l.b16 %v3572
          %v3644 = vunpack.c.l.b16 %v3573
          %v3645 = vunpack.c.l.b16 %v3574
          %v3646 = vunpack.c.l.b16 %v3575
          %v3647 = vunpack.c.l.b16 %v3576
          %v3648 = vunpack.c.l.b16 %v3577
          %v3649 = vunpack.c.l.b16 %v3578
          %v3650 = vunpack.c.l.b16 %v3579
          %v3651 = vunpack.c.l.b16 %v3580
          %v3652 = vunpack.c.l.b16 %v3581
          %v3653 = vunpack.c.l.b16 %v3582
          %v3654 = vunpack.c.l.b16 %v3583
          %v3655 = vunpack.c.l.b16 %v3584
          %v3656 = vunpack.c.l.b16 %v3585
          %v3657 = vunpack.c.l.b16 %v3586
          %v3658 = vpack.c.b16 %v3627, %v3626
          %v3659 = vpack.c.b16 %v3629, %v3628
          %v3660 = vpack.c.b16 %v3631, %v3630
          %v3661 = vpack.c.b16 %v3633, %v3632
          %v3662 = vpack.c.b16 %v3635, %v3634
          %v3663 = vpack.c.b16 %v3637, %v3636
          %v3664 = vpack.c.b16 %v3639, %v3638
          %v3665 = vpack.c.b16 %v3641, %v3640
          %v3666 = vpack.c.b16 %v3643, %v3642
          %v3667 = vpack.c.b16 %v3645, %v3644
          %v3668 = vpack.c.b16 %v3647, %v3646
          %v3669 = vpack.c.b16 %v3649, %v3648
          %v3670 = vpack.c.b16 %v3651, %v3650
          %v3671 = vpack.c.b16 %v3653, %v3652
          %v3672 = vpack.c.b16 %v3655, %v3654
          %v3673 = vpack.c.b16 %v3657, %v3656
          %3690 = vmatprep.subr.bf16.mxu0 0
          %3691 = vmatpush1.bf16.msra.mxu0 %v3665
          %3692 = vmatprep.subr.bf16.mxu0 0
          %3693 = vmatpush1.bf16.msra.mxu0 %v3664
          %3694 = vmatprep.subr.bf16.mxu0 0
          %3695 = vmatpush1.bf16.msra.mxu0 %v3663
          %3696 = vmatprep.subr.bf16.mxu0 0
          %3697 = vmatpush1.bf16.msra.mxu0 %v3662
          %3698 = vmatprep.subr.bf16.mxu0 0
          %3699 = vmatpush1.bf16.msra.mxu0 %v3661
          %3700 = vmatprep.subr.bf16.mxu0 0
          %3701 = vmatpush1.bf16.msra.mxu0 %v3660
          %3702 = vmatprep.subr.bf16.mxu0 0
          %3703 = vmatpush1.bf16.msra.mxu0 %v3659
          %3704 = vmatprep.subr.bf16.mxu0 0
          %3705 = vmatpush1.bf16.msra.mxu0 %v3658
          %3706 = vmatprep.subr.bf16.mxu0 0
          %3707 = vmatpush2.bf16.msra.mxu0 %v3673
          %3708 = vmatprep.subr.bf16.mxu0 0
          %3709 = vmatpush2.bf16.msra.mxu0 %v3672
          %3710 = vmatprep.subr.bf16.mxu0 0
          %3711 = vmatpush2.bf16.msra.mxu0 %v3671
          %3712 = vmatprep.subr.bf16.mxu0 0
          %3713 = vmatpush2.bf16.msra.mxu0 %v3670
          %3714 = vmatprep.subr.bf16.mxu0 0
          %3715 = vmatpush2.bf16.msra.mxu0 %v3669
          %3716 = vmatprep.subr.bf16.mxu0 0
          %3717 = vmatpush2.bf16.msra.mxu0 %v3668
          %3718 = vmatprep.subr.bf16.mxu0 0
          %3719 = vmatpush2.bf16.msra.mxu0 %v3667
          %3720 = vmatprep.subr.bf16.mxu0 0
          %3721 = vmatpush2.bf16.msra.mxu0 %v3666
          %3722 = vmatprep.mubr.bf16.mxu0 %v3554
          %3723 = vmatmul.mubr.bf16.gmra.mxu0 %v3553
          %v3724 = vpop.f32.mrf.mxu0
          %v3725 = vadd.f32 %v3592, %v3724
          %v3726 = vpop.f32.mrf.mxu0
          %v3727 = vpop.f32.mrf.mxu0
          %v3728 = vadd.f32 %v3592, %v3727
          %v3729 = vpop.f32.mrf.mxu0
          %3730 = vdwg.mxu0
          %3731 = vst [vmem:[%s10] sm:$0xff] %v3725
          %3732 = vst [vmem:[%s10 + $0x8] sm:$0xff] %v3728
          %3733 = vmatprep.subr.mxu0 0.0
          %3734 = vmatpush1.xpose.msra.mxu0 0.0
          %3735 = vmatprep.subr.mxu0 0.0
          %3736 = vmatpush1.xpose.msra.mxu0 0.0
          %3737 = vmatprep.subr.mxu0 0.0
          %3738 = vmatpush1.xpose.msra.mxu0 0.0
          %3739 = vmatprep.subr.mxu0 0.0
          %3740 = vmatpush1.xpose.msra.mxu0 0.0
          %3741 = vmatprep.subr.mxu0 0.0
          %3742 = vmatpush1.xpose.msra.mxu0 0.0
          %3743 = vmatprep.subr.mxu0 0.0
          %3744 = vmatpush1.xpose.msra.mxu0 0.0
          %3745 = vmatprep.subr.mxu0 0.0
          %3746 = vmatpush1.xpose.msra.mxu0 0.0
          %3747 = vmatprep.subr.mxu0 0.0
          %3748 = vmatpush1.xpose.msra.mxu0 0.0
          %3749 = vmatprep.subr.mxu0 0.0
          %3750 = vmatpush1.xpose.msra.mxu0 0.0
          %3751 = vmatprep.subr.mxu0 0.0
          %3752 = vmatpush1.xpose.msra.mxu0 0.0
          %3753 = vmatprep.subr.mxu0 0.0
          %3754 = vmatpush1.xpose.msra.mxu0 0.0
          %3755 = vmatprep.subr.mxu0 0.0
          %3756 = vmatpush1.xpose.msra.mxu0 0.0
          %3757 = vmatprep.subr.mxu0 0.0
          %3758 = vmatpush1.xpose.msra.mxu0 0.0
          %3759 = vmatprep.subr.mxu0 0.0
          %3760 = vmatpush1.xpose.msra.mxu0 0.0
          %3761 = vmatprep.subr.mxu0 %v3552
          %3762 = vmatpush1.xpose.msra.mxu0 %v3551
          %3763 = vmatprep.subr.mxu0 %v3550
          %3764 = vmatpush1.xpose.msra.mxu0 %v3549
          %3765 = vmatprep.subr.mxu0 0.0
          %3766 = vmatpush2.xpose.msra.mxu0 0.0
          %3767 = vmatprep.subr.mxu0 0.0
          %3768 = vmatpush2.xpose.msra.mxu0 0.0
          %3769 = vmatprep.subr.mxu0 0.0
          %3770 = vmatpush2.xpose.msra.mxu0 0.0
          %3771 = vmatprep.subr.mxu0 0.0
          %3772 = vmatpush2.xpose.msra.mxu0 0.0
          %3773 = vmatprep.subr.mxu0 0.0
          %3774 = vmatpush2.xpose.msra.mxu0 0.0
          %3775 = vmatprep.subr.mxu0 0.0
          %3776 = vmatpush2.xpose.msra.mxu0 0.0
          %3777 = vmatprep.subr.mxu0 0.0
          %3778 = vmatpush2.xpose.msra.mxu0 0.0
          %3779 = vmatprep.subr.mxu0 0.0
          %3780 = vmatpush2.xpose.msra.mxu0 0.0
          %3781 = vmatprep.subr.mxu0 0.0
          %3782 = vmatpush2.xpose.msra.mxu0 0.0
          %3783 = vmatprep.subr.mxu0 0.0
          %3784 = vmatpush2.xpose.msra.mxu0 0.0
          %3785 = vmatprep.subr.mxu0 0.0
          %3786 = vmatpush2.xpose.msra.mxu0 0.0
          %3787 = vmatprep.subr.mxu0 0.0
          %3788 = vmatpush2.xpose.msra.mxu0 0.0
          %3789 = vmatprep.subr.mxu0 0.0
          %3790 = vmatpush2.xpose.msra.mxu0 0.0
          %3791 = vmatprep.subr.mxu0 0.0
          %3792 = vmatpush2.xpose.msra.mxu0 0.0
          %3793 = vmatprep.subr.mxu0 0.0
          %3794 = vmatpush2.xpose.msra.mxu0 0.0
          %3795 = vmatprep.subr.mxu0 0.0
          %3796 = vmatpush2.xpose.msra.mxu0 0.0
          %3797 = vmatprep.mubr.f32.mxu0 %v3550
          %3798 = vmatmul.mubr.f32.gmra.mxu0 %v3549
          %v3799 = vpop.f32.mrf.mxu0
          %v3800 = vadd.f32 0.0, %v3799
          %v3801 = vpop.f32.mrf.mxu0
          %3802 = vmatprep.mubr.f32.mxu0 %v3552
          %3803 = vmatmul.mubr.f32.gmra.mxu0 %v3551
          %v3804 = vpop.f32.mrf.mxu0
          %v3805 = vadd.f32 0.0, %v3804
          %v3806 = vpop.f32.mrf.mxu0
          %3807 = vdwg.mxu0
          %v3808 = vmul.f32 %v3549, %v3549
          %v3809 = vmul.f32 %v3550, %v3550
          %v3810 = vmul.f32 %v3551, %v3551
          %v3811 = vmul.f32 %v3552, %v3552
          %v3812 = vadd.f32 %v3808, %v3809
          %3813 = vadd.xlane.f32.xlu0 %v3812
          %v3814 = vpop.xlane.xlu0 %3813
          %v3815 = vadd.f32 %v3810, %v3811
          %3816 = vadd.xlane.f32.xlu0 %v3815
          %v3817 = vpop.xlane.xlu0 %3816
          %3818 = vxpose.xlu0.b32.start [1/16] %v3814, 128
          %3819 = vxpose.xlu0.b32.cont [2/16] %v3817, 128
          %3820 = vxpose.xlu0.b32.cont [3/16] 0.0, 128
          %3821 = vxpose.xlu0.b32.cont [4/16] 0.0, 128
          %3822 = vxpose.xlu0.b32.cont [5/16] 0.0, 128
          %3823 = vxpose.xlu0.b32.cont [6/16] 0.0, 128
          %3824 = vxpose.xlu0.b32.cont [7/16] 0.0, 128
          %3825 = vxpose.xlu0.b32.cont [8/16] 0.0, 128
          %3826 = vxpose.xlu0.b32.cont [9/16] 0.0, 128
          %3827 = vxpose.xlu0.b32.cont [10/16] 0.0, 128
          %3828 = vxpose.xlu0.b32.cont [11/16] 0.0, 128
          %3829 = vxpose.xlu0.b32.cont [12/16] 0.0, 128
          %3830 = vxpose.xlu0.b32.cont [13/16] 0.0, 128
          %3831 = vxpose.xlu0.b32.cont [14/16] 0.0, 128
          %3832 = vxpose.xlu0.b32.cont [15/16] 0.0, 128
          %3833 = vxpose.xlu0.b32.end [16/16] 0.0, 128
          %v3834 = vpop.trf.xlu0
          %v3835 = vpop.trf.xlu0
          %v3836 = vpop.trf.xlu0
          %v3837 = vpop.trf.xlu0
          %v3838 = vpop.trf.xlu0
          %v3839 = vpop.trf.xlu0
          %v3840 = vpop.trf.xlu0
          %v3841 = vpop.trf.xlu0
          %v3842 = vpop.trf.xlu0
          %v3843 = vpop.trf.xlu0
          %v3844 = vpop.trf.xlu0
          %v3845 = vpop.trf.xlu0
          %v3846 = vpop.trf.xlu0
          %v3847 = vpop.trf.xlu0
          %v3848 = vpop.trf.xlu0
          %v3849 = vpop.trf.xlu0
          %v3850 = vlaneseq
          %v3851 = vshrl.u32 %v3850, 7
          %v3852 = vsub.s32 0, %v3851
          %v3853 = vrot.slane %v3834, %v3852
          %v3854 = vadd.f32 %v3814, %v3853
          %v3855 = vadd.f32 %v3817, %v3853
          %v3856 = vmul.f32 %v3800, 2.0
          %v3857 = vmul.f32 %v3805, 2.0
          %v3858 = vsub.f32 %v3854, %v3856
          %v3859 = vsub.f32 %v3855, %v3857
          %v3860 = vmax.f32 %v3858, 0.0
          %v3861 = vmax.f32 %v3859, 0.0
          %vm3862 = vcmp.lt.s32.totalorder %v597, 2
          %vm3863 = vcmp.ge.s32.totalorder %v597, 8
          %vm3864 = vcmp.lt.s32.totalorder %v597, 10
          %vm3865 = vmand %vm3863, %vm3864
          %vm3866 = vmor %vm3862, %vm3865
          %v3867 = vsel %vm3866, 1, 0
          %v3868 = vcvt.s32.f32 %v3867
          %v3869 = vmul.f32 %v3387, %v3868
          %v3870 = vmul.f32 %v3388, %v3868
          %v3871 = vmul.f32 %v3860, %v3869
          %v3872 = vmul.f32 %v3861, %v3870
          %vm3873 = vcmask 130048
          %v3874 = vsel %vm3873, %v3871, 0.0
          %v3875 = vsel %vm3873, %v3872, 0.0
          %v3876 = vadd.f32 %v3874, %v3875
          %3877 = vadd.xlane.f32.xlu0 %v3876
          %v3878 = vpop.xlane.xlu0 %3877
          %v3879 = vrot.slane %v3878, 4
          %v3880 = vadd.f32 %v3878, %v3879
          %v3881 = vrot.slane %v3880, 2
          %v3882 = vadd.f32 %v3880, %v3881
          %v3883 = vrot.slane %v3882, 1
          %v3884 = vadd.f32 %v3882, %v3883
          %s3885 = vtos %v3884
          %v3886 = vrcp.pop 12.0
          %s3887 = vtos %v3886
          %s3888 = smul.f32 %s3885, %s3887
          %v3889 = vrcp.pop 4.0
          %s3890 = vtos %v3889
          %s3891 = smul.f32 %s3888, %s3890
          %s3892 = smax.f32 %s3891, 1e-12
          %v3893 = vstv %s3892
          %v3894 = vrcp.pop %v3893
          %s3895 = vtos %v3894
          %s3896 = smul.f32 -1.0, %s3895
          %v3897 = vstv %s3896
          %v3898 = vmul.f32 %v3860, %v3897
          %v3899 = vmul.f32 %v3861, %v3897
          %v3900 = vmul.f32 %v3898, 1.442695
          %v3901 = vpow.pop %v3900
          %v3902 = vmul.f32 %v3899, 1.442695
          %v3903 = vpow.pop %v3902
          %v3904 = vadd.f32 %v3901, 0.0
          %v3905 = vadd.f32 %v3903, 0.0
          %s3906 = smul.f32 %s3892, 2.0
          %v3907 = vstv %s3906
          %v3908 = vrcp.pop %v3907
          %s3909 = vtos %v3908
          %s3910 = smul.f32 -1.0, %s3909
          %v3911 = vstv %s3910
          %v3912 = vmul.f32 %v3860, %v3911
          %v3913 = vmul.f32 %v3861, %v3911
          %v3914 = vmul.f32 %v3912, 1.442695
          %v3915 = vpow.pop %v3914
          %v3916 = vmul.f32 %v3913, 1.442695
          %v3917 = vpow.pop %v3916
          %v3918 = vadd.f32 %v3904, %v3915
          %v3919 = vadd.f32 %v3905, %v3917
          %s3920 = smul.f32 %s3892, 4.0
          %v3921 = vstv %s3920
          %v3922 = vrcp.pop %v3921
          %s3923 = vtos %v3922
          %s3924 = smul.f32 -1.0, %s3923
          %v3925 = vstv %s3924
          %v3926 = vmul.f32 %v3860, %v3925
          %v3927 = vmul.f32 %v3861, %v3925
          %v3928 = vmul.f32 %v3926, 1.442695
          %v3929 = vpow.pop %v3928
          %v3930 = vmul.f32 %v3927, 1.442695
          %v3931 = vpow.pop %v3930
          %v3932 = vadd.f32 %v3918, %v3929
          %v3933 = vadd.f32 %v3919, %v3931
          %s3934 = smul.f32 %s3892, 8.0
          %v3935 = vstv %s3934
          %v3936 = vrcp.pop %v3935
          %s3937 = vtos %v3936
          %s3938 = smul.f32 -1.0, %s3937
          %v3939 = vstv %s3938
          %v3940 = vmul.f32 %v3860, %v3939
          %v3941 = vmul.f32 %v3861, %v3939
          %v3942 = vmul.f32 %v3940, 1.442695
          %v3943 = vpow.pop %v3942
          %v3944 = vmul.f32 %v3941, 1.442695
          %v3945 = vpow.pop %v3944
          %v3946 = vadd.f32 %v3932, %v3943
          %v3947 = vadd.f32 %v3933, %v3945
          %s3948 = smul.f32 %s3892, 16.0
          %v3949 = vstv %s3948
          %v3950 = vrcp.pop %v3949
          %s3951 = vtos %v3950
          %s3952 = smul.f32 -1.0, %s3951
          %v3953 = vstv %s3952
          %v3954 = vmul.f32 %v3860, %v3953
          %v3955 = vmul.f32 %v3861, %v3953
          %v3956 = vmul.f32 %v3954, 1.442695
          %v3957 = vpow.pop %v3956
          %v3958 = vmul.f32 %v3955, 1.442695
          %v3959 = vpow.pop %v3958
          %v3960 = vadd.f32 %v3946, %v3957
          %v3961 = vadd.f32 %v3947, %v3959
          %vm3962 = vcmp.lt.s32.totalorder %v597, 31
          %v3963 = vld [vmem:[%s1] sm:$0xff]
          %v3964 = vld [vmem:[%s1 + $0x8] sm:$0xff]
          %3965 = vset.pattern.permute.xlu0 0
          %3966 = vperm.xlu0 %3965, %v3963
          %v3967 = vpop.permute.xlu0 %3966
          %3968 = vset.pattern.permute.xlu0 0
          %3969 = vperm.xlu0 %3968, %v3964
          %v3970 = vpop.permute.xlu0 %3969
          %vm3971 = vcmp.eq.s32.totalorder %v597, %v3967
          %vm3972 = vcmp.eq.s32.totalorder %v597, %v3970
          %v3973 = vsel %vm3971, 1, 0
          %v3974 = vsel %vm3972, 1, 0
          %v3975 = vcvt.s32.f32 %v3973
          %v3976 = vcvt.s32.f32 %v3974
          %v3977 = vadd.f32 %v3975, %v3976
          %v3978 = vrot.slane %v3977, 4
          %v3979 = vadd.f32 %v3977, %v3978
          %v3980 = vrot.slane %v3979, 2
          %v3981 = vadd.f32 %v3979, %v3980
          %v3982 = vrot.slane %v3981, 1
          %v3983 = vadd.f32 %v3981, %v3982
          %vm3984 = vcmp.eq.f32.partialorder %v3983, 0.0
          %v3985 = vsel %vm3984, 100.0, %v3983
          %v3986 = vrcp.pop %v3985
          %v3987 = vmul.f32 %v3975, %v3986
          %v3988 = vmul.f32 %v3976, %v3986
          %v3989 = vsel %vm3962, %v3725, -1e+30
          %v3990 = vsel %vm3962, %v3728, -1e+30
          %3991 = vmax.xlane.f32.xlu0 %v3989
          %v3992 = vpop.xlane.xlu0 %3991
          %3993 = vmax.xlane.f32.xlu0 %v3990
          %v3994 = vpop.xlane.xlu0 %3993
          %v3995 = vsub.f32 %v3989, %v3992
          %v3996 = vsub.f32 %v3990, %v3994
          %v3997 = vmul.f32 %v3995, 1.442695
          %v3998 = vpow.pop %v3997
          %v3999 = vmul.f32 %v3996, 1.442695
          %v4000 = vpow.pop %v3999
          %v4001 = vsel %vm3962, 1, 0
          %v4002 = vcvt.s32.f32 %v4001
          %v4003 = vmul.f32 %v3998, %v4002
          %v4004 = vmul.f32 %v4000, %v4002
          %4005 = vadd.xlane.f32.xlu0 %v4003
          %v4006 = vpop.xlane.xlu0 %4005
          %4007 = vadd.xlane.f32.xlu0 %v4004
          %v4008 = vpop.xlane.xlu0 %4007
          %v4009 = vrcp.pop %v4006
          %v4010 = vmul.f32 %v4003, %v4009
          %v4011 = vrcp.pop %v4008
          %v4012 = vmul.f32 %v4004, %v4011
          %v4013 = vmul.f32 %v4010, %v3385
          %v4014 = vmul.f32 %v4012, %v3386
          %v4015 = vadd.f32 %v4013, %v4014
          %v4016 = vrot.slane %v4015, 4
          %v4017 = vadd.f32 %v4015, %v4016
          %v4018 = vrot.slane %v4017, 2
          %v4019 = vadd.f32 %v4017, %v4018
          %v4020 = vrot.slane %v4019, 1
          %v4021 = vadd.f32 %v4019, %v4020
          %vm4022 = vcmp.eq.f32.partialorder %v4021, 0.0
          %v4023 = vsel %vm4022, 100.0, %v4021
          %v4024 = vrcp.pop %v4023
          %v4025 = vmul.f32 %v4013, %v4024
          %v4026 = vmul.f32 %v4014, %v4024
          %v4027 = vsub.f32 %v3987, %v4025
          %v4028 = vsub.f32 %v3988, %v4026
          %4029 = vmatprep.subr.mxu0 0.0
          %4030 = vmatpush1.xpose.msra.mxu0 0.0
          %4031 = vmatprep.subr.mxu0 0.0
          %4032 = vmatpush1.xpose.msra.mxu0 0.0
          %4033 = vmatprep.subr.mxu0 0.0
          %4034 = vmatpush1.xpose.msra.mxu0 0.0
          %4035 = vmatprep.subr.mxu0 0.0
          %4036 = vmatpush1.xpose.msra.mxu0 0.0
          %4037 = vmatprep.subr.mxu0 0.0
          %4038 = vmatpush1.xpose.msra.mxu0 0.0
          %4039 = vmatprep.subr.mxu0 0.0
          %4040 = vmatpush1.xpose.msra.mxu0 0.0
          %4041 = vmatprep.subr.mxu0 0.0
          %4042 = vmatpush1.xpose.msra.mxu0 0.0
          %4043 = vmatprep.subr.mxu0 0.0
          %4044 = vmatpush1.xpose.msra.mxu0 0.0
          %4045 = vmatprep.subr.mxu0 0.0
          %4046 = vmatpush1.xpose.msra.mxu0 0.0
          %4047 = vmatprep.subr.mxu0 0.0
          %4048 = vmatpush1.xpose.msra.mxu0 0.0
          %4049 = vmatprep.subr.mxu0 0.0
          %4050 = vmatpush1.xpose.msra.mxu0 0.0
          %4051 = vmatprep.subr.mxu0 0.0
          %4052 = vmatpush1.xpose.msra.mxu0 0.0
          %4053 = vmatprep.subr.mxu0 0.0
          %4054 = vmatpush1.xpose.msra.mxu0 0.0
          %4055 = vmatprep.subr.mxu0 0.0
          %4056 = vmatpush1.xpose.msra.mxu0 0.0
          %4057 = vmatprep.subr.mxu0 0.0
          %4058 = vmatpush1.xpose.msra.mxu0 %v4028
          %4059 = vmatprep.subr.mxu0 0.0
          %4060 = vmatpush1.xpose.msra.mxu0 %v4027
          %4061 = vmatprep.subr.mxu0 0.0
          %4062 = vmatpush2.xpose.msra.mxu0 0.0
          %4063 = vmatprep.subr.mxu0 0.0
          %4064 = vmatpush2.xpose.msra.mxu0 0.0
          %4065 = vmatprep.subr.mxu0 0.0
          %4066 = vmatpush2.xpose.msra.mxu0 0.0
          %4067 = vmatprep.subr.mxu0 0.0
          %4068 = vmatpush2.xpose.msra.mxu0 0.0
          %4069 = vmatprep.subr.mxu0 0.0
          %4070 = vmatpush2.xpose.msra.mxu0 0.0
          %4071 = vmatprep.subr.mxu0 0.0
          %4072 = vmatpush2.xpose.msra.mxu0 0.0
          %4073 = vmatprep.subr.mxu0 0.0
          %4074 = vmatpush2.xpose.msra.mxu0 0.0
          %4075 = vmatprep.subr.mxu0 0.0
          %4076 = vmatpush2.xpose.msra.mxu0 0.0
          %4077 = vmatprep.subr.mxu0 0.0
          %4078 = vmatpush2.xpose.msra.mxu0 0.0
          %4079 = vmatprep.subr.mxu0 0.0
          %4080 = vmatpush2.xpose.msra.mxu0 0.0
          %4081 = vmatprep.subr.mxu0 0.0
          %4082 = vmatpush2.xpose.msra.mxu0 0.0
          %4083 = vmatprep.subr.mxu0 0.0
          %4084 = vmatpush2.xpose.msra.mxu0 0.0
          %4085 = vmatprep.subr.mxu0 0.0
          %4086 = vmatpush2.xpose.msra.mxu0 0.0
          %4087 = vmatprep.subr.mxu0 0.0
          %4088 = vmatpush2.xpose.msra.mxu0 0.0
          %4089 = vmatprep.subr.mxu0 0.0
          %4090 = vmatpush2.xpose.msra.mxu0 0.0
          %4091 = vmatprep.subr.mxu0 0.0
          %4092 = vmatpush2.xpose.msra.mxu0 0.0
          %4093 = vmatprep.mubr.f32.mxu0 0.0
          %4094 = vmatmul.mubr.f32.gmra.mxu0 %v4027
          %v4095 = vpop.f32.mrf.mxu0
          %v4096 = vadd.f32 0.0, %v4095
          %v4097 = vpop.f32.mrf.mxu0
          %4098 = vmatprep.mubr.f32.mxu0 0.0
          %4099 = vmatmul.mubr.f32.gmra.mxu0 %v4028
          %v4100 = vpop.f32.mrf.mxu0
          %v4101 = vadd.f32 0.0, %v4100
          %v4102 = vpop.f32.mrf.mxu0
          %4103 = vdwg.mxu0
          %v4104 = vmul.f32 %v4096, %v3960
          %v4105 = vmul.f32 %v4101, %v3961
          %v4106 = vsel %vm3873, %v4104, 0.0
          %v4107 = vsel %vm3873, %v4105, 0.0
          %v4108 = vadd.f32 %v4106, %v4107
          %4109 = vadd.xlane.f32.xlu0 %v4108
          %v4110 = vpop.xlane.xlu0 %4109
          %v4111 = vrot.slane %v4110, 4
          %v4112 = vadd.f32 %v4110, %v4111
          %v4113 = vrot.slane %v4112, 2
          %v4114 = vadd.f32 %v4112, %v4113
          %v4115 = vrot.slane %v4114, 1
          %v4116 = vadd.f32 %v4114, %v4115
          %s4117 = vtos %v4116
          %s4118 = scalar_lea.smem [#allocation7], 0
          %4119 = sst [smem:[%s4118]] %s4117
        $region113: #{edan_forward.1} parent=96 // pred_fallthru
          _
        // Predicated region
        $region114: #{edan_forward.1} parent=96 // pred_check
          %p4120 = pneg %p253
        $region115: #{edan_forward.1} parent=96 // pred_check_branch
          %4122 = sbr.rel (%p4120) target = $region117
        $region116: #{edan_forward.1} parent=96 // pred_region
          _
        $region117: #{edan_forward.1} parent=96 // pred_fallthru
          _
        // Predicated region
        $region118: #{edan_forward.1} parent=96 // pred_check
          %p4123 = pneg %p274
        $region119: #{edan_forward.1} parent=96 // pred_check_branch
          %4125 = sbr.rel (%p4123) target = $region121
        $region120: #{edan_forward.1} parent=96 // pred_region
          %s4127 = ssub.s32 16, 16
          %4128 = vsyncadd [#allocation6], %s4127
          %4131 = dma.smem_to_hbm [#allocation7], 16, %s11, [#allocation6]
        $region121: #{edan_forward.1} parent=96 // pred_fallthru
          _
        // Predicated region
        $region122: #{edan_forward.1} parent=96 // pred_check
          %p4132 = pneg %p253
        $region123: #{edan_forward.1} parent=96 // pred_check_branch
          %4134 = sbr.rel (%p4132) target = $region125
        $region124: #{edan_forward.1} parent=96 // pred_region
          _
        $region125: #{edan_forward.1} parent=96 // pred_fallthru
          _
        // Predicated region
        $region126: #{edan_forward.1} parent=96 // pred_check
          %p4135 = pneg %p274
        $region127: #{edan_forward.1} parent=96 // pred_check_branch
          %4137 = sbr.rel (%p4135) target = $region129
        $region128: #{edan_forward.1} parent=96 // pred_region
          %4138 = dma.done [#allocation6], 16
        $region129: #{edan_forward.1} parent=96 // pred_fallthru
          _
        %4139 = sfence
      $region97: #{edan_forward.1} parent=5 // pred_fallthru
        _
      %p4140 = scmp.le.s32.totalorder 2, %s20
      // Predicated region
      $region130: #{edan_forward.1} parent=5 // pred_check
        %p4141 = pneg %p4140
      $region131: #{edan_forward.1} parent=5 // pred_check_branch
        %4143 = sbr.rel (%p4141) target = $region133
      $region132: #{edan_forward.1} parent=5 // pred_region
        %s4144 = ssub.s32 %s20, 2
      $region133: #{edan_forward.1} parent=5 // pred_fallthru
        _
    $region6: #{edan_forward.1} parent=1 // loop_footer
      %s24 = sadd.s32 1, %s20
    $region7: #{edan_forward.1} parent=1 // loop_footer_branch
      %19 = sbr.rel target = $region3
    $region8: #{edan_forward.1} parent=1 // loop_exit
      _
    %4145 = vsyncpa [#allocation5], 1
    %s4146 = scalar_lea.sflag [#allocation5], 1
    %4147 = vsyncpa %s4146, 1
    %4148 = vsyncpa [#allocation6], 1
    %s4149 = scalar_lea.sflag [#allocation6], 1
    %4150 = vsyncpa %s4149, 1

</llo_original>
